<compile_context>
chip_gen: v7x
topology: tpu7x:2x2x1
jax: 0.10.0
libtpu: 0.0.40
codegen_flags: <defaults>
</compile_context>

<pallas_src>
import functools
import math

import numpy as np
import jax
import jax.numpy as jnp
from jax.experimental import pallas as pl
from jax.experimental.pallas import tpu as pltpu


LANE = 128
NEG_INF = -1e30
BIG_BATCH = 2 ** 30


def _round_up(x, m):
    return (x + m - 1) // m * m


# ---------------------------------------------------------------------------
# Kernel 1: fused Q/K/V projection.  One MXU matmul per row tile against the
# packed weight matrix [scale*Wq | Wk | Wv] (zero-padded to 128-lane widths).
# Outputs are bf16 (attention MXU operands); accumulation is f32.
# ---------------------------------------------------------------------------
def _proj_kernel(f_ref, w_ref, b_ref, q_ref, k_ref, v_ref, *, ckq_p):
    p = jnp.dot(f_ref[...], w_ref[...], preferred_element_type=jnp.float32) + b_ref[...]
    q_ref[...] = p[:, :ckq_p].astype(q_ref.dtype)
    k_ref[...] = p[:, ckq_p:2 * ckq_p].astype(k_ref.dtype)
    v_ref[...] = p[:, 2 * ckq_p:].astype(v_ref.dtype)


# ---------------------------------------------------------------------------
# Kernel 2: masked attention with online softmax over kv tiles.
#   grid = (num_query_tiles, num_kv_tiles); kv axis is the reduction axis.
#   Scalar-prefetch (SMEM): per-q-tile fill flag, per-q-tile fill-batch range,
#   per-kv-tile keep-batch range.
# ---------------------------------------------------------------------------
def _attn_kernel(flags_ref, qbmin_ref, qbmax_ref, kbmin_ref, kbmax_ref,   # SMEM prefetch
                 q_ref, fq_ref, mq_ref, bqi_ref,                          # per-query-tile
                 k_ref, v_ref, kbias_ref, bki_ref,                        # per-kv-tile
                 o_ref,                                                   # output tile
                 m_sc, l_sc, acc_sc):                                     # VMEM scratch (f32)
    qi = pl.program_id(0)
    kv = pl.program_id(1)
    last_kv = pl.num_programs(1) - 1

    has_fill = flags_ref[qi] > 0          # any "fill" point in this query tile?
    overlap = jnp.logical_and(qbmin_ref[qi] <= kbmax_ref[kv],
                              kbmin_ref[kv] <= qbmax_ref[qi])
    work = jnp.logical_and(has_fill, overlap)

    @pl.when(jnp.logical_and(has_fill, kv == 0))
    def _():
        m_sc[...] = jnp.full_like(m_sc, NEG_INF)
        l_sc[...] = jnp.zeros_like(l_sc)
        acc_sc[...] = jnp.zeros_like(acc_sc)

    @pl.when(work)
    def _():
        # scores for this kv tile: (tq, tkv); 1/sqrt(Ckq) already folded into Q.
        s = jax.lax.dot_general(q_ref[...], k_ref[...], (((1,), (1,)), ((), ())),
                                preferred_element_type=jnp.float32)
        s = s + kbias_ref[...]                                                 # keep/pad mask (additive)
        s = jnp.where(bqi_ref[...] == bki_ref[...], s, jnp.float32(NEG_INF))   # per-row batch mask

        m_prev = m_sc[...]
        m_new = jnp.maximum(m_prev, jnp.max(s, axis=-1, keepdims=True))
        alpha = jnp.exp(m_prev - m_new)         # flushes to exactly 0 for early all-masked tiles
        e = jnp.exp(s - m_new)                  # masked entries underflow to 0
        l_sc[...] = alpha * l_sc[...] + jnp.sum(e, axis=-1, keepdims=True)
        acc_sc[...] = alpha * acc_sc[...] + jnp.dot(
            e.astype(v_ref.dtype), v_ref[...], preferred_element_type=jnp.float32)
        m_sc[...] = m_new

    @pl.when(jnp.logical_and(kv == last_kv, has_fill))
    def _():
        # l > 0 whenever the fill row's batch has >= 1 keep point (reference precondition).
        l = l_sc[...]
        inv = pl.reciprocal(l, approx=True)     # EUP slot
        inv = inv * (2.0 - l * inv)             # one Newton step -> full f32 precision
        attn = acc_sc[...] * inv
        keep_q = mq_ref[...] > 0.5
        o_ref[...] = jnp.where(keep_q, fq_ref[...], attn)

    @pl.when(jnp.logical_and(kv == last_kv, jnp.logical_not(has_fill)))
    def _():
        o_ref[...] = fq_ref[...]                # keep-only tile: pure pass-through


def minkowski_contextual_attention(features, mask, batch_ids,
                                   Wq, bq, Wk, bk, Wv, bv,
                                   *, tq=256, tkv=512, tproj=1024):
    """features:(N,Cin) f32, mask:(N,) f32, batch_ids:(N,) i32 -> (N,Cout) f32.

    Tile sizes are per-generation tunables: defaults (tq=256, tkv=512, tproj=1024)
    keep the double-buffered footprint at a few MiB (safe on v5e/v6e 128 MiB and
    v7x 64 MiB VMEM).  On v6e raise tkv to 1024; on v5e keep tq=128 if preferred
    and add pipeline_mode=pl.Buffered(3) to the K/V BlockSpecs.
    """
    N, Cin = features.shape
    Ckq = Wq.shape[1]
    Cout = Wv.shape[1]
    # hard-mode writes the attention output back into the feature columns
    assert Cout == Cin, "forward_hard requires out_channels == in_channels"

    cin_p = _round_up(Cin, LANE)
    ckq_p = _round_up(Ckq, LANE)
    cout_p = _round_up(Cout, LANE)

    row_mult = math.lcm(tq, tkv, tproj)
    Np = _round_up(N, row_mult)

    f32 = jnp.float32
    bf16 = jnp.bfloat16

    # Row / channel padding: padded query rows are "keep" (pass through, sliced off);
    # padded key rows are excluded via the additive key bias below.
    feats_p = jnp.zeros((Np, cin_p), f32).at[:N, :Cin].set(features.astype(f32))
    mask_p = jnp.ones((Np,), f32).at[:N].set(mask.astype(f32))
    bid_p = jnp.full((Np,), -1, jnp.int32).at[:N].set(batch_ids.astype(jnp.int32))

    # Fused, zero-padded projection weights [scale*Wq | Wk | Wv] and biases.
    scale = float(1.0 / np.sqrt(Ckq))
    wtot = 2 * ckq_p + cout_p
    W_fused = jnp.zeros((cin_p, wtot), f32)
    W_fused = W_fused.at[:Cin, :Ckq].set(Wq.astype(f32) * scale)          # scale folded into Q
    W_fused = W_fused.at[:Cin, ckq_p:ckq_p + Ckq].set(Wk.astype(f32))
    W_fused = W_fused.at[:Cin, 2 * ckq_p:2 * ckq_p + Cout].set(Wv.astype(f32))
    b_fused = jnp.zeros((1, wtot), f32)
    b_fused = b_fused.at[0, :Ckq].set(bq.astype(f32) * scale)
    b_fused = b_fused.at[0, ckq_p:ckq_p + Ckq].set(bk.astype(f32))
    b_fused = b_fused.at[0, 2 * ckq_p:2 * ckq_p + Cout].set(bv.astype(f32))

    # ---- 1) fused Q/K/V projection, computed once over all rows (bf16 outputs) ----
    q, k, v = pl.pallas_call(
        functools.partial(_proj_kernel, ckq_p=ckq_p),
        out_shape=(jax.ShapeDtypeStruct((Np, ckq_p), bf16),
                   jax.ShapeDtypeStruct((Np, ckq_p), bf16),
                   jax.ShapeDtypeStruct((Np, cout_p), bf16)),
        grid=(Np // tproj,),
        in_specs=[pl.BlockSpec((tproj, cin_p), lambda i: (i, 0)),
                  pl.BlockSpec((cin_p, wtot), lambda i: (0, 0)),
                  pl.BlockSpec((1, wtot), lambda i: (0, 0))],
        out_specs=(pl.BlockSpec((tproj, ckq_p), lambda i: (i, 0)),
                   pl.BlockSpec((tproj, ckq_p), lambda i: (i, 0)),
                   pl.BlockSpec((tproj, cout_p), lambda i: (i, 0))),
        compiler_params=pltpu.CompilerParams(dimension_semantics=("parallel",)),
    )(feats_p, W_fused, b_fused)

    # ---- 2) attention, tiled over (query tiles, kv tiles) with online softmax ----
    nqt = Np // tq
    nkt = Np // tkv

    mask_q = mask_p.reshape(Np, 1)
    bid_q = bid_p.reshape(Np, 1)
    bid_k = bid_p.reshape(1, Np)
    rows = jnp.arange(Np)
    fill = (mask_p <= 0.5) & (rows < N)
    keep = (mask_p > 0.5) & (rows < N)

    # Key-side validity as a single additive bias row: 0 for real "keep" points,
    # -1e30 for fill points and padded rows.
    kbias = jnp.where(keep, 0.0, NEG_INF).astype(f32).reshape(1, Np)

    # Per-query-tile "has any fill point" flags + fill-batch ranges; per-kv-tile
    # keep-batch ranges.  Scalar-prefetched (SMEM) -> used in-kernel for compute
    # skipping AND in the K/V index_maps to freeze (i.e. skip) the DMA.
    tile_flags = fill.reshape(nqt, tq).any(axis=1).astype(jnp.int32)
    q_bmin = jnp.where(fill, bid_p, BIG_BATCH).reshape(nqt, tq).min(axis=1).astype(jnp.int32)
    q_bmax = jnp.where(fill, bid_p, -1).reshape(nqt, tq).max(axis=1).astype(jnp.int32)
    k_bmin = jnp.where(keep, bid_p, BIG_BATCH).reshape(nkt, tkv).min(axis=1).astype(jnp.int32)
    k_bmax = jnp.where(keep, bid_p, -1).reshape(nkt, tkv).max(axis=1).astype(jnp.int32)

    def _work(i, j, flags, qmin, qmax, kmin, kmax):
        return jnp.logical_and(
            flags[i] > 0,
            jnp.logical_and(qmin[i] <= kmax[j], kmin[j] <= qmax[i]))

    def _q_map(i, j, *pf):
        return (i, 0)

    def _kv_row_map(i, j, flags, qmin, qmax, kmin, kmax):
        # Freeze the block index when this (q-tile, kv-tile) pair does no work:
        # Pallas only re-DMAs when the block index changes, so skipped steps are free.
        return (jnp.where(_work(i, j, flags, qmin, qmax, kmin, kmax), j, 0), 0)

    def _kv_col_map(i, j, flags, qmin, qmax, kmin, kmax):
        return (0, jnp.where(_work(i, j, flags, qmin, qmax, kmin, kmax), j, 0))

    grid_spec = pltpu.PrefetchScalarGridSpec(
        num_scalar_prefetch=5,
        grid=(nqt, nkt),
        in_specs=[
            pl.BlockSpec((tq, ckq_p), _q_map),       # Q tile (bf16)
            pl.BlockSpec((tq, cin_p), _q_map),       # features (pass-through, f32)
            pl.BlockSpec((tq, 1), _q_map),           # query keep-mask
            pl.BlockSpec((tq, 1), _q_map),           # query batch id
            pl.BlockSpec((tkv, ckq_p), _kv_row_map),  # K tile (bf16)
            pl.BlockSpec((tkv, cout_p), _kv_row_map),  # V tile (bf16)
            pl.BlockSpec((1, tkv), _kv_col_map),     # key additive bias
            pl.BlockSpec((1, tkv), _kv_col_map),     # key batch id
        ],
        out_specs=pl.BlockSpec((tq, cout_p), _q_map),
        scratch_shapes=[pltpu.VMEM((tq, 1), f32),        # running max (must stay f32)
                        pltpu.VMEM((tq, 1), f32),        # running denominator
                        pltpu.VMEM((tq, cout_p), f32)],  # running numerator
    )

    out_p = pl.pallas_call(
        _attn_kernel,
        out_shape=jax.ShapeDtypeStruct((Np, cout_p), f32),
        grid_spec=grid_spec,
        compiler_params=pltpu.CompilerParams(
            dimension_semantics=("parallel", "arbitrary"),
            vmem_limit_bytes=32 * 1024 * 1024),
    )(tile_flags, q_bmin, q_bmax, k_bmin, k_bmax,
      q, feats_p, mask_q, bid_q, k, v, kbias, bid_k)

    return out_p[:N, :Cout]


def _reference(features, mask, batch_ids, Wq, bq, Wk, bk, Wv, bv):
    """Pure-numpy transcription of forward_hard's per-batch loop."""
    feats = np.asarray(features, dtype=np.float64)
    out = feats.copy()
    keep = np.asarray(mask) > 0.5
    bids = np.asarray(batch_ids)
    ratio = np.sqrt(Wq.shape[1])
    Wq, bq, Wk, bk, Wv, bv = (np.asarray(a, dtype=np.float64) for a in (Wq, bq, Wk, bk, Wv, bv))
    for i in range(int(bids.max()) + 1):
        mb = bids == i
        fill_idx = np.where(mb & ~keep)[0]
        keep_idx = np.where(mb & keep)[0]
        if fill_idx.size == 0:
            continue
        Q = feats[fill_idx] @ Wq + bq
        K = feats[keep_idx] @ Wk + bk
        V = feats[keep_idx] @ Wv + bv
        S = Q @ K.T / ratio
        S = S - S.max(axis=-1, keepdims=True)
        P = np.exp(S)
        P = P / P.sum(axis=-1, keepdims=True)
        out[fill_idx] = P @ V
    return out


if __name__ == "__main__":
    # Small synthetic problem: 2 batches, 64 points total, 32 in/out channels, 16 kq channels.
    N = 64
    Cin, Ckq, Cout = 32, 16, 32

    key = jax.random.PRNGKey(0)
    k1, k2, k3, k4, k5, k6, k7, k8 = jax.random.split(key, 8)

    features = jax.random.normal(k1, (N, Cin), dtype=jnp.float32)
    mask = (jax.random.uniform(k2, (N,)) > 0.4).astype(jnp.float32)
    # guarantee at least one "keep" and one "fill" point per batch
    mask = mask.at[0].set(1.0).at[N // 2].set(1.0)
    mask = mask.at[1].set(0.0).at[N // 2 + 1].set(0.0)
    batch_ids = jnp.concatenate(
        [jnp.zeros(N // 2, dtype=jnp.int32), jnp.ones(N // 2, dtype=jnp.int32)])

    # nn.Linear weights stored as (in, out); biases (out,).
    Wq = 0.1 * jax.random.normal(k3, (Cin, Ckq), dtype=jnp.float32)
    bq = 0.01 * jax.random.normal(k4, (Ckq,), dtype=jnp.float32)
    Wk = 0.1 * jax.random.normal(k5, (Cin, Ckq), dtype=jnp.float32)
    bk = 0.01 * jax.random.normal(k6, (Ckq,), dtype=jnp.float32)
    Wv = 0.1 * jax.random.normal(k7, (Cin, Cout), dtype=jnp.float32)
    bv = 0.01 * jax.random.normal(k8, (Cout,), dtype=jnp.float32)

    out = minkowski_contextual_attention(features, mask, batch_ids,
                                         Wq, bq, Wk, bk, Wv, bv)
    out = jax.block_until_ready(out)

    ref = _reference(features, mask, batch_ids, Wq, bq, Wk, bk, Wv, bv)
    # bf16 Q/K/V operands (f32 accumulation) -> loosen tolerance vs the f32-only version.
    np.testing.assert_allclose(np.asarray(out), ref, rtol=2e-2, atol=2e-2)

    print("KERNEL_OK")
</pallas_src>

<mosaic_0001>
module attributes {stable_mosaic.version = 11 : i64} {
  func.func @_proj_kernel(%arg0: i32, %arg1: memref<1024x128xf32, #tpu.memory_space<vmem>>, %arg2: memref<128x384xf32, #tpu.memory_space<vmem>>, %arg3: memref<1x384xf32, #tpu.memory_space<vmem>>, %arg4: memref<1024x128xbf16, #tpu.memory_space<vmem>>, %arg5: memref<1024x128xbf16, #tpu.memory_space<vmem>>, %arg6: memref<1024x128xbf16, #tpu.memory_space<vmem>>) attributes {dimension_semantics = [#tpu.dimension_semantics<parallel>], iteration_bounds = array<i64: 1>, scalar_prefetch = 0 : i64, scratch_operands = 0 : i64, tpu.core_type = #tpu.core_type<tc>, window_params = [{transform_indices = @transform_0, window_bounds = array<i64: 1024, 128>}, {pipeline_mode = #tpu.pipeline_mode<synchronous>, transform_indices = @transform_1, window_bounds = array<i64: 128, 384>}, {pipeline_mode = #tpu.pipeline_mode<synchronous>, transform_indices = @transform_2, window_bounds = array<i64: 1, 384>}, {transform_indices = @transform_3, window_bounds = array<i64: 1024, 128>}, {transform_indices = @transform_4, window_bounds = array<i64: 1024, 128>}, {transform_indices = @transform_5, window_bounds = array<i64: 1024, 128>}]} {
    %c0 = arith.constant 0 : index
    %c0_0 = arith.constant 0 : index
    %0 = vector.load %arg1[%c0, %c0_0] : memref<1024x128xf32, #tpu.memory_space<vmem>>, vector<1024x128xf32>
    %c0_1 = arith.constant 0 : index
    %c0_2 = arith.constant 0 : index
    %1 = vector.load %arg2[%c0_1, %c0_2] : memref<128x384xf32, #tpu.memory_space<vmem>>, vector<128x384xf32>
    %cst = arith.constant dense<0.000000e+00> : vector<1024x384xf32>
    %2 = tpu.matmul %0, %1, %cst {dimension_numbers = #tpu.dot_dimension_numbers<[1], [0], [0], [1], [0, 0, 1, 1], [], []>} : vector<1024x128xf32>, vector<128x384xf32>, vector<1024x384xf32> -> vector<1024x384xf32>
    %c0_3 = arith.constant 0 : index
    %c0_4 = arith.constant 0 : index
    %3 = vector.load %arg3[%c0_3, %c0_4] : memref<1x384xf32, #tpu.memory_space<vmem>>, vector<1x384xf32>
    %4 = vector.broadcast %3 : vector<1x384xf32> to vector<1024x384xf32>
    %5 = arith.addf %2, %4 : vector<1024x384xf32>
    %6 = vector.extract_strided_slice %5 {offsets = [0, 0], sizes = [1024, 128], strides = [1, 1]} : vector<1024x384xf32> to vector<1024x128xf32>
    %7 = arith.truncf %6 : vector<1024x128xf32> to vector<1024x128xbf16>
    %c0_5 = arith.constant 0 : index
    %c0_6 = arith.constant 0 : index
    %8 = vector.load %arg4[%c0_5, %c0_6] : memref<1024x128xbf16, #tpu.memory_space<vmem>>, vector<1024x128xbf16>
    tpu.vector_store %arg4[%c0_5, %c0_6], %7 {strides = array<i32>} : memref<1024x128xbf16, #tpu.memory_space<vmem>>, vector<1024x128xbf16>,
    %9 = vector.extract_strided_slice %5 {offsets = [0, 128], sizes = [1024, 128], strides = [1, 1]} : vector<1024x384xf32> to vector<1024x128xf32>
    %10 = arith.truncf %9 : vector<1024x128xf32> to vector<1024x128xbf16>
    %c0_7 = arith.constant 0 : index
    %c0_8 = arith.constant 0 : index
    %11 = vector.load %arg5[%c0_7, %c0_8] : memref<1024x128xbf16, #tpu.memory_space<vmem>>, vector<1024x128xbf16>
    tpu.vector_store %arg5[%c0_7, %c0_8], %10 {strides = array<i32>} : memref<1024x128xbf16, #tpu.memory_space<vmem>>, vector<1024x128xbf16>,
    %12 = vector.extract_strided_slice %5 {offsets = [0, 256], sizes = [1024, 128], strides = [1, 1]} : vector<1024x384xf32> to vector<1024x128xf32>
    %13 = arith.truncf %12 : vector<1024x128xf32> to vector<1024x128xbf16>
    %c0_9 = arith.constant 0 : index
    %c0_10 = arith.constant 0 : index
    %14 = vector.load %arg6[%c0_9, %c0_10] : memref<1024x128xbf16, #tpu.memory_space<vmem>>, vector<1024x128xbf16>
    tpu.vector_store %arg6[%c0_9, %c0_10], %13 {strides = array<i32>} : memref<1024x128xbf16, #tpu.memory_space<vmem>>, vector<1024x128xbf16>,
    return
  }
  func.func @transform_0(%arg0: i32) -> (i32, i32) {
    %c0_i32 = arith.constant 0 : i32
    %c0_i32_0 = arith.constant 0 : i32
    return %arg0, %c0_i32 : i32, i32
  }
  func.func @transform_1(%arg0: i32) -> (i32, i32) {
    %c0_i32 = arith.constant 0 : i32
    %c0_i32_0 = arith.constant 0 : i32
    %c0_i32_1 = arith.constant 0 : i32
    return %c0_i32, %c0_i32_0 : i32, i32
  }
  func.func @transform_2(%arg0: i32) -> (i32, i32) {
    %c0_i32 = arith.constant 0 : i32
    %c0_i32_0 = arith.constant 0 : i32
    %c0_i32_1 = arith.constant 0 : i32
    return %c0_i32, %c0_i32_0 : i32, i32
  }
  func.func @transform_3(%arg0: i32) -> (i32, i32) {
    %c0_i32 = arith.constant 0 : i32
    %c0_i32_0 = arith.constant 0 : i32
    return %arg0, %c0_i32 : i32, i32
  }
  func.func @transform_4(%arg0: i32) -> (i32, i32) {
    %c0_i32 = arith.constant 0 : i32
    %c0_i32_0 = arith.constant 0 : i32
    return %arg0, %c0_i32 : i32, i32
  }
  func.func @transform_5(%arg0: i32) -> (i32, i32) {
    %c0_i32 = arith.constant 0 : i32
    %c0_i32_0 = arith.constant 0 : i32
    return %arg0, %c0_i32 : i32, i32
  }
}

</mosaic_0001>

<llo_original>
// kernel: tpu_custom_call.1
$region0: #{tpu_custom_call.1}
  #allocation0 [shape = 'u32[]', space=smem, size = 0x4, offset = 0x4, fixed_abs, tag = 'smem constant byte address 0x4 - core index']
  #allocation1 [shape = 'u32[144,128]{1,0:T(1,128)}', space=vmem, size = 0x12000, scoped, tag = 'internal scratch']
  %s0 = inlined_call_operand.hbm [shape: f32[1024,128], index: 0, kind: input, shape index: {}]
  %s1 = inlined_call_operand.hbm [shape: f32[128,384], index: 1, kind: input, shape index: {}]
  %s2 = inlined_call_operand.vmem [shape: f32[1,384], index: 2, kind: input, shape index: {}]
  %s3 = inlined_call_operand.hbm [shape: bf16[1024,128], index: 3, kind: output, shape index: {0}]
  %s4 = inlined_call_operand.hbm [shape: bf16[1024,128], index: 4, kind: output, shape index: {1}]
  %s5 = inlined_call_operand.hbm [shape: bf16[1024,128], index: 5, kind: output, shape index: {2}]
  %6 = xla_tuple %s3, %s4, %s5
  %s7 = sld [smem:[#allocation0]]
  $region46: #{tpu_custom_call.1} parent=0
    _
  %s9 = ssub.s32 1, %s7
  %s10 = scalar_select 0, %s9, %s7
  $region1: #{tpu_custom_call.1} parent=0
    #allocation2 [shape = 'u8[524288]{0}', space=vmem, size = 0x80000, scoped, tag = 'input window, operand 0, single buffered']
    #allocation3 [shape = 's32[1]{0}', space=sflag, size = 0x4, scoped, tag = 'scoped memory for tpu_custom_call.1']
    #allocation4 [shape = 's32[1]{0}', space=sflag, size = 0x4, scoped, tag = 'scoped memory for tpu_custom_call.1']
    #allocation5 [shape = 'u8[196608]{0}', space=vmem, size = 0x30000, scoped, tag = 'input window, operand 1, single buffered']
    #allocation6 [shape = 's32[1]{0}', space=sflag, size = 0x4, scoped, tag = 'scoped memory for tpu_custom_call.1']
    #allocation7 [shape = 'u8[262144]{0}', space=vmem, size = 0x40000, scoped, tag = 'output window, operand 0, single buffered']
    #allocation8 [shape = 'u8[262144]{0}', space=vmem, size = 0x40000, scoped, tag = 'output window, operand 1, single buffered']
    #allocation9 [shape = 's32[1]{0}', space=sflag, size = 0x4, scoped, tag = 'scoped memory for tpu_custom_call.1']
    #allocation10 [shape = 'u8[262144]{0}', space=vmem, size = 0x40000, scoped, tag = 'output window, operand 2, single buffered']
    %11 = vsyncpa [#allocation3], 0
    %12 = vsyncpa [#allocation6], 0
    %13 = vsyncpa [#allocation4], 0
    %14 = vsyncpa [#allocation9], 0
    // Predicated region
    $region2: #{tpu_custom_call.1} parent=1 // pred_check
      _
    $region3: #{tpu_custom_call.1} parent=1 // pred_check_branch
      %16 = sbr.rel (0) target = $region5
    $region4: #{tpu_custom_call.1} parent=1 // pred_region
      %s18 = ssub.s32 16384, 16384
      %19 = vsyncadd [#allocation3], %s18
      %s20 = sshll.u32 [#allocation2], 4
      %s21 = int_to_ptr.vmem [resolvable:$true] %s20
      %26 = dma.hbm_to_vmem [thread:$0]  %s0, 16384, %s21, [#allocation3], 128, 128, 8
    $region5: #{tpu_custom_call.1} parent=1 // pred_fallthru
      _
    // Predicated region
    $region6: #{tpu_custom_call.1} parent=1 // pred_check
      _
    $region7: #{tpu_custom_call.1} parent=1 // pred_check_branch
      %28 = sbr.rel (0) target = $region9
    $region8: #{tpu_custom_call.1} parent=1 // pred_region
      %s30 = ssub.s32 6144, 6144
      %31 = vsyncadd [#allocation6], %s30
      %s32 = sshll.u32 [#allocation5], 4
      %s33 = int_to_ptr.vmem [resolvable:$true] %s32
      %38 = dma.hbm_to_vmem [thread:$0]  %s1, 6144, %s33, [#allocation6], 384, 384, 24
    $region9: #{tpu_custom_call.1} parent=1 // pred_fallthru
      _
    // Predicated region
    $region10: #{tpu_custom_call.1} parent=1 // pred_check
      _
    $region11: #{tpu_custom_call.1} parent=1 // pred_check_branch
      %40 = sbr.rel (0) target = $region13
    $region12: #{tpu_custom_call.1} parent=1 // pred_region
      _
    $region13: #{tpu_custom_call.1} parent=1 // pred_fallthru
      _
    // Predicated region
    $region14: #{tpu_custom_call.1} parent=1 // pred_check
      _
    $region15: #{tpu_custom_call.1} parent=1 // pred_check_branch
      %42 = sbr.rel (0) target = $region17
    $region16: #{tpu_custom_call.1} parent=1 // pred_region
      %43 = dma.done [#allocation3], 16384
    $region17: #{tpu_custom_call.1} parent=1 // pred_fallthru
      _
    // Predicated region
    $region18: #{tpu_custom_call.1} parent=1 // pred_check
      _
    $region19: #{tpu_custom_call.1} parent=1 // pred_check_branch
      %45 = sbr.rel (0) target = $region21
    $region20: #{tpu_custom_call.1} parent=1 // pred_region
      %46 = dma.done [#allocation6], 6144
    $region21: #{tpu_custom_call.1} parent=1 // pred_fallthru
      _
    %v47 = vld [vmem:[#allocation2] sm:$0xff]
    %v48 = vld [vmem:[#allocation2 + $0x8] sm:$0xff]
    %v49 = vld [vmem:[#allocation2 + $0x10] sm:$0xff]
    %v50 = vld [vmem:[#allocation2 + $0x18] sm:$0xff]
    %v51 = vld [vmem:[#allocation2 + $0x20] sm:$0xff]
    %v52 = vld [vmem:[#allocation2 + $0x28] sm:$0xff]
    %v53 = vld [vmem:[#allocation2 + $0x30] sm:$0xff]
    %v54 = vld [vmem:[#allocation2 + $0x38] sm:$0xff]
    %v55 = vld [vmem:[#allocation2 + $0x40] sm:$0xff]
    %v56 = vld [vmem:[#allocation2 + $0x48] sm:$0xff]
    %v57 = vld [vmem:[#allocation2 + $0x50] sm:$0xff]
    %v58 = vld [vmem:[#allocation2 + $0x58] sm:$0xff]
    %v59 = vld [vmem:[#allocation2 + $0x60] sm:$0xff]
    %v60 = vld [vmem:[#allocation2 + $0x68] sm:$0xff]
    %v61 = vld [vmem:[#allocation2 + $0x70] sm:$0xff]
    %v62 = vld [vmem:[#allocation2 + $0x78] sm:$0xff]
    %v63 = vld [vmem:[#allocation2 + $0x80] sm:$0xff]
    %v64 = vld [vmem:[#allocation2 + $0x88] sm:$0xff]
    %v65 = vld [vmem:[#allocation2 + $0x90] sm:$0xff]
    %v66 = vld [vmem:[#allocation2 + $0x98] sm:$0xff]
    %v67 = vld [vmem:[#allocation2 + $0xa0] sm:$0xff]
    %v68 = vld [vmem:[#allocation2 + $0xa8] sm:$0xff]
    %v69 = vld [vmem:[#allocation2 + $0xb0] sm:$0xff]
    %v70 = vld [vmem:[#allocation2 + $0xb8] sm:$0xff]
    %v71 = vld [vmem:[#allocation2 + $0xc0] sm:$0xff]
    %v72 = vld [vmem:[#allocation2 + $0xc8] sm:$0xff]
    %v73 = vld [vmem:[#allocation2 + $0xd0] sm:$0xff]
    %v74 = vld [vmem:[#allocation2 + $0xd8] sm:$0xff]
    %v75 = vld [vmem:[#allocation2 + $0xe0] sm:$0xff]
    %v76 = vld [vmem:[#allocation2 + $0xe8] sm:$0xff]
    %v77 = vld [vmem:[#allocation2 + $0xf0] sm:$0xff]
    %v78 = vld [vmem:[#allocation2 + $0xf8] sm:$0xff]
    %v79 = vld [vmem:[#allocation2 + $0x100] sm:$0xff]
    %v80 = vld [vmem:[#allocation2 + $0x108] sm:$0xff]
    %v81 = vld [vmem:[#allocation2 + $0x110] sm:$0xff]
    %v82 = vld [vmem:[#allocation2 + $0x118] sm:$0xff]
    %v83 = vld [vmem:[#allocation2 + $0x120] sm:$0xff]
    %v84 = vld [vmem:[#allocation2 + $0x128] sm:$0xff]
    %v85 = vld [vmem:[#allocation2 + $0x130] sm:$0xff]
    %v86 = vld [vmem:[#allocation2 + $0x138] sm:$0xff]
    %v87 = vld [vmem:[#allocation2 + $0x140] sm:$0xff]
    %v88 = vld [vmem:[#allocation2 + $0x148] sm:$0xff]
    %v89 = vld [vmem:[#allocation2 + $0x150] sm:$0xff]
    %v90 = vld [vmem:[#allocation2 + $0x158] sm:$0xff]
    %v91 = vld [vmem:[#allocation2 + $0x160] sm:$0xff]
    %v92 = vld [vmem:[#allocation2 + $0x168] sm:$0xff]
    %v93 = vld [vmem:[#allocation2 + $0x170] sm:$0xff]
    %v94 = vld [vmem:[#allocation2 + $0x178] sm:$0xff]
    %v95 = vld [vmem:[#allocation2 + $0x180] sm:$0xff]
    %v96 = vld [vmem:[#allocation2 + $0x188] sm:$0xff]
    %v97 = vld [vmem:[#allocation2 + $0x190] sm:$0xff]
    %v98 = vld [vmem:[#allocation2 + $0x198] sm:$0xff]
    %v99 = vld [vmem:[#allocation2 + $0x1a0] sm:$0xff]
    %v100 = vld [vmem:[#allocation2 + $0x1a8] sm:$0xff]
    %v101 = vld [vmem:[#allocation2 + $0x1b0] sm:$0xff]
    %v102 = vld [vmem:[#allocation2 + $0x1b8] sm:$0xff]
    %v103 = vld [vmem:[#allocation2 + $0x1c0] sm:$0xff]
    %v104 = vld [vmem:[#allocation2 + $0x1c8] sm:$0xff]
    %v105 = vld [vmem:[#allocation2 + $0x1d0] sm:$0xff]
    %v106 = vld [vmem:[#allocation2 + $0x1d8] sm:$0xff]
    %v107 = vld [vmem:[#allocation2 + $0x1e0] sm:$0xff]
    %v108 = vld [vmem:[#allocation2 + $0x1e8] sm:$0xff]
    %v109 = vld [vmem:[#allocation2 + $0x1f0] sm:$0xff]
    %v110 = vld [vmem:[#allocation2 + $0x1f8] sm:$0xff]
    %v111 = vld [vmem:[#allocation2 + $0x200] sm:$0xff]
    %v112 = vld [vmem:[#allocation2 + $0x208] sm:$0xff]
    %v113 = vld [vmem:[#allocation2 + $0x210] sm:$0xff]
    %v114 = vld [vmem:[#allocation2 + $0x218] sm:$0xff]
    %v115 = vld [vmem:[#allocation2 + $0x220] sm:$0xff]
    %v116 = vld [vmem:[#allocation2 + $0x228] sm:$0xff]
    %v117 = vld [vmem:[#allocation2 + $0x230] sm:$0xff]
    %v118 = vld [vmem:[#allocation2 + $0x238] sm:$0xff]
    %v119 = vld [vmem:[#allocation2 + $0x240] sm:$0xff]
    %v120 = vld [vmem:[#allocation2 + $0x248] sm:$0xff]
    %v121 = vld [vmem:[#allocation2 + $0x250] sm:$0xff]
    %v122 = vld [vmem:[#allocation2 + $0x258] sm:$0xff]
    %v123 = vld [vmem:[#allocation2 + $0x260] sm:$0xff]
    %v124 = vld [vmem:[#allocation2 + $0x268] sm:$0xff]
    %v125 = vld [vmem:[#allocation2 + $0x270] sm:$0xff]
    %v126 = vld [vmem:[#allocation2 + $0x278] sm:$0xff]
    %v127 = vld [vmem:[#allocation2 + $0x280] sm:$0xff]
    %v128 = vld [vmem:[#allocation2 + $0x288] sm:$0xff]
    %v129 = vld [vmem:[#allocation2 + $0x290] sm:$0xff]
    %v130 = vld [vmem:[#allocation2 + $0x298] sm:$0xff]
    %v131 = vld [vmem:[#allocation2 + $0x2a0] sm:$0xff]
    %v132 = vld [vmem:[#allocation2 + $0x2a8] sm:$0xff]
    %v133 = vld [vmem:[#allocation2 + $0x2b0] sm:$0xff]
    %v134 = vld [vmem:[#allocation2 + $0x2b8] sm:$0xff]
    %v135 = vld [vmem:[#allocation2 + $0x2c0] sm:$0xff]
    %v136 = vld [vmem:[#allocation2 + $0x2c8] sm:$0xff]
    %v137 = vld [vmem:[#allocation2 + $0x2d0] sm:$0xff]
    %v138 = vld [vmem:[#allocation2 + $0x2d8] sm:$0xff]
    %v139 = vld [vmem:[#allocation2 + $0x2e0] sm:$0xff]
    %v140 = vld [vmem:[#allocation2 + $0x2e8] sm:$0xff]
    %v141 = vld [vmem:[#allocation2 + $0x2f0] sm:$0xff]
    %v142 = vld [vmem:[#allocation2 + $0x2f8] sm:$0xff]
    %v143 = vld [vmem:[#allocation2 + $0x300] sm:$0xff]
    %v144 = vld [vmem:[#allocation2 + $0x308] sm:$0xff]
    %v145 = vld [vmem:[#allocation2 + $0x310] sm:$0xff]
    %v146 = vld [vmem:[#allocation2 + $0x318] sm:$0xff]
    %v147 = vld [vmem:[#allocation2 + $0x320] sm:$0xff]
    %v148 = vld [vmem:[#allocation2 + $0x328] sm:$0xff]
    %v149 = vld [vmem:[#allocation2 + $0x330] sm:$0xff]
    %v150 = vld [vmem:[#allocation2 + $0x338] sm:$0xff]
    %v151 = vld [vmem:[#allocation2 + $0x340] sm:$0xff]
    %v152 = vld [vmem:[#allocation2 + $0x348] sm:$0xff]
    %v153 = vld [vmem:[#allocation2 + $0x350] sm:$0xff]
    %v154 = vld [vmem:[#allocation2 + $0x358] sm:$0xff]
    %v155 = vld [vmem:[#allocation2 + $0x360] sm:$0xff]
    %v156 = vld [vmem:[#allocation2 + $0x368] sm:$0xff]
    %v157 = vld [vmem:[#allocation2 + $0x370] sm:$0xff]
    %v158 = vld [vmem:[#allocation2 + $0x378] sm:$0xff]
    %v159 = vld [vmem:[#allocation2 + $0x380] sm:$0xff]
    %v160 = vld [vmem:[#allocation2 + $0x388] sm:$0xff]
    %v161 = vld [vmem:[#allocation2 + $0x390] sm:$0xff]
    %v162 = vld [vmem:[#allocation2 + $0x398] sm:$0xff]
    %v163 = vld [vmem:[#allocation2 + $0x3a0] sm:$0xff]
    %v164 = vld [vmem:[#allocation2 + $0x3a8] sm:$0xff]
    %v165 = vld [vmem:[#allocation2 + $0x3b0] sm:$0xff]
    %v166 = vld [vmem:[#allocation2 + $0x3b8] sm:$0xff]
    %v167 = vld [vmem:[#allocation2 + $0x3c0] sm:$0xff]
    %v168 = vld [vmem:[#allocation2 + $0x3c8] sm:$0xff]
    %v169 = vld [vmem:[#allocation2 + $0x3d0] sm:$0xff]
    %v170 = vld [vmem:[#allocation2 + $0x3d8] sm:$0xff]
    %v171 = vld [vmem:[#allocation2 + $0x3e0] sm:$0xff]
    %v172 = vld [vmem:[#allocation2 + $0x3e8] sm:$0xff]
    %v173 = vld [vmem:[#allocation2 + $0x3f0] sm:$0xff]
    %v174 = vld [vmem:[#allocation2 + $0x3f8] sm:$0xff]
    %v175 = vld [vmem:[#allocation5] sm:$0xff]
    %v176 = vld [vmem:[#allocation5 + $0x8] sm:$0xff]
    %v177 = vld [vmem:[#allocation5 + $0x10] sm:$0xff]
    %v178 = vld [vmem:[#allocation5 + $0x18] sm:$0xff]
    %v179 = vld [vmem:[#allocation5 + $0x20] sm:$0xff]
    %v180 = vld [vmem:[#allocation5 + $0x28] sm:$0xff]
    %v181 = vld [vmem:[#allocation5 + $0x30] sm:$0xff]
    %v182 = vld [vmem:[#allocation5 + $0x38] sm:$0xff]
    %v183 = vld [vmem:[#allocation5 + $0x40] sm:$0xff]
    %v184 = vld [vmem:[#allocation5 + $0x48] sm:$0xff]
    %v185 = vld [vmem:[#allocation5 + $0x50] sm:$0xff]
    %v186 = vld [vmem:[#allocation5 + $0x58] sm:$0xff]
    %v187 = vld [vmem:[#allocation5 + $0x60] sm:$0xff]
    %v188 = vld [vmem:[#allocation5 + $0x68] sm:$0xff]
    %v189 = vld [vmem:[#allocation5 + $0x70] sm:$0xff]
    %v190 = vld [vmem:[#allocation5 + $0x78] sm:$0xff]
    %v191 = vld [vmem:[#allocation5 + $0x80] sm:$0xff]
    %v192 = vld [vmem:[#allocation5 + $0x88] sm:$0xff]
    %v193 = vld [vmem:[#allocation5 + $0x90] sm:$0xff]
    %v194 = vld [vmem:[#allocation5 + $0x98] sm:$0xff]
    %v195 = vld [vmem:[#allocation5 + $0xa0] sm:$0xff]
    %v196 = vld [vmem:[#allocation5 + $0xa8] sm:$0xff]
    %v197 = vld [vmem:[#allocation5 + $0xb0] sm:$0xff]
    %v198 = vld [vmem:[#allocation5 + $0xb8] sm:$0xff]
    %v199 = vld [vmem:[#allocation5 + $0xc0] sm:$0xff]
    %v200 = vld [vmem:[#allocation5 + $0xc8] sm:$0xff]
    %v201 = vld [vmem:[#allocation5 + $0xd0] sm:$0xff]
    %v202 = vld [vmem:[#allocation5 + $0xd8] sm:$0xff]
    %v203 = vld [vmem:[#allocation5 + $0xe0] sm:$0xff]
    %v204 = vld [vmem:[#allocation5 + $0xe8] sm:$0xff]
    %v205 = vld [vmem:[#allocation5 + $0xf0] sm:$0xff]
    %v206 = vld [vmem:[#allocation5 + $0xf8] sm:$0xff]
    %v207 = vld [vmem:[#allocation5 + $0x100] sm:$0xff]
    %v208 = vld [vmem:[#allocation5 + $0x108] sm:$0xff]
    %v209 = vld [vmem:[#allocation5 + $0x110] sm:$0xff]
    %v210 = vld [vmem:[#allocation5 + $0x118] sm:$0xff]
    %v211 = vld [vmem:[#allocation5 + $0x120] sm:$0xff]
    %v212 = vld [vmem:[#allocation5 + $0x128] sm:$0xff]
    %v213 = vld [vmem:[#allocation5 + $0x130] sm:$0xff]
    %v214 = vld [vmem:[#allocation5 + $0x138] sm:$0xff]
    %v215 = vld [vmem:[#allocation5 + $0x140] sm:$0xff]
    %v216 = vld [vmem:[#allocation5 + $0x148] sm:$0xff]
    %v217 = vld [vmem:[#allocation5 + $0x150] sm:$0xff]
    %v218 = vld [vmem:[#allocation5 + $0x158] sm:$0xff]
    %v219 = vld [vmem:[#allocation5 + $0x160] sm:$0xff]
    %v220 = vld [vmem:[#allocation5 + $0x168] sm:$0xff]
    %v221 = vld [vmem:[#allocation5 + $0x170] sm:$0xff]
    %v222 = vld [vmem:[#allocation5 + $0x178] sm:$0xff]
    %v223 = vld [vmem:[%s2] sm:$0x7]
    %v225 = vlaneseq
    %v226 = vshrl.u32 %v225, 7
    %v227 = vsub.s32 0, %v226
    %v228 = vrot.slane %v223, %v227
    %v229 = vlaneseq
    %v230 = vshrl.u32 %v229, 7
    %v231 = vsub.s32 1, %v230
    %v232 = vrot.slane %v223, %v231
    %v233 = vlaneseq
    %v234 = vshrl.u32 %v233, 7
    %v235 = vsub.s32 2, %v234
    %v236 = vrot.slane %v223, %v235
    %240 = vmatprep.subr.mxu0 %v176
    %241 = vmatpush1.msra.mxu0 %v175
    %242 = vmatprep.subr.mxu0 %v179
    %243 = vmatpush1.msra.mxu0 %v178
    %244 = vmatprep.subr.mxu0 %v182
    %245 = vmatpush1.msra.mxu0 %v181
    %246 = vmatprep.subr.mxu0 %v185
    %247 = vmatpush1.msra.mxu0 %v184
    %248 = vmatprep.subr.mxu0 %v188
    %249 = vmatpush1.msra.mxu0 %v187
    %250 = vmatprep.subr.mxu0 %v191
    %251 = vmatpush1.msra.mxu0 %v190
    %252 = vmatprep.subr.mxu0 %v194
    %253 = vmatpush1.msra.mxu0 %v193
    %254 = vmatprep.subr.mxu0 %v197
    %255 = vmatpush1.msra.mxu0 %v196
    %256 = vmatprep.subr.mxu0 %v200
    %257 = vmatpush1.msra.mxu0 %v199
    %258 = vmatprep.subr.mxu0 %v203
    %259 = vmatpush1.msra.mxu0 %v202
    %260 = vmatprep.subr.mxu0 %v206
    %261 = vmatpush1.msra.mxu0 %v205
    %262 = vmatprep.subr.mxu0 %v209
    %263 = vmatpush1.msra.mxu0 %v208
    %264 = vmatprep.subr.mxu0 %v212
    %265 = vmatpush1.msra.mxu0 %v211
    %266 = vmatprep.subr.mxu0 %v215
    %267 = vmatpush1.msra.mxu0 %v214
    %268 = vmatprep.subr.mxu0 %v218
    %269 = vmatpush1.msra.mxu0 %v217
    %270 = vmatprep.subr.mxu0 %v221
    %271 = vmatpush1.msra.mxu0 %v220
    %272 = vmatprep.subr.mxu0 0.0
    %273 = vmatpush1.msra.mxu0 0.0
    %274 = vmatprep.subr.mxu0 0.0
    %275 = vmatpush1.msra.mxu0 0.0
    %276 = vmatprep.subr.mxu0 0.0
    %277 = vmatpush1.msra.mxu0 0.0
    %278 = vmatprep.subr.mxu0 0.0
    %279 = vmatpush1.msra.mxu0 0.0
    %280 = vmatprep.subr.mxu0 0.0
    %281 = vmatpush1.msra.mxu0 0.0
    %282 = vmatprep.subr.mxu0 0.0
    %283 = vmatpush1.msra.mxu0 0.0
    %284 = vmatprep.subr.mxu0 0.0
    %285 = vmatpush1.msra.mxu0 0.0
    %286 = vmatprep.subr.mxu0 0.0
    %287 = vmatpush1.msra.mxu0 0.0
    %288 = vmatprep.subr.mxu0 0.0
    %289 = vmatpush1.msra.mxu0 0.0
    %290 = vmatprep.subr.mxu0 0.0
    %291 = vmatpush1.msra.mxu0 0.0
    %292 = vmatprep.subr.mxu0 0.0
    %293 = vmatpush1.msra.mxu0 0.0
    %294 = vmatprep.subr.mxu0 0.0
    %295 = vmatpush1.msra.mxu0 0.0
    %296 = vmatprep.subr.mxu0 0.0
    %297 = vmatpush1.msra.mxu0 0.0
    %298 = vmatprep.subr.mxu0 0.0
    %299 = vmatpush1.msra.mxu0 0.0
    %300 = vmatprep.subr.mxu0 0.0
    %301 = vmatpush1.msra.mxu0 0.0
    %302 = vmatprep.subr.mxu0 0.0
    %303 = vmatpush1.msra.mxu0 0.0
    %304 = vmatprep.mubr.f32.mxu0 0.0
    %305 = vmatmul.mubr.f32.gmra.mrb[0].mxu0 %v47
    %v306 = vpop.f32.mrb[0].mxu0
    %v307 = vadd.f32 %v228, %v306
    %v308 = vpop.f32.mrb[0].mxu0
    %v309 = vadd.f32 %v232, %v308
    %310 = vmatprep.mubr.f32.mxu0 0.0
    %311 = vmatmul.mubr.f32.gmra.mrb[0].mxu0 %v48
    %v312 = vpop.f32.mrb[0].mxu0
    %v313 = vadd.f32 %v228, %v312
    %v314 = vpop.f32.mrb[0].mxu0
    %v315 = vadd.f32 %v232, %v314
    %316 = vmatprep.mubr.f32.mxu0 0.0
    %317 = vmatmul.mubr.f32.gmra.mrb[0].mxu0 %v49
    %v318 = vpop.f32.mrb[0].mxu0
    %v319 = vadd.f32 %v228, %v318
    %v320 = vpop.f32.mrb[0].mxu0
    %v321 = vadd.f32 %v232, %v320
    %322 = vmatprep.mubr.f32.mxu0 0.0
    %323 = vmatmul.mubr.f32.gmra.mrb[0].mxu0 %v50
    %v324 = vpop.f32.mrb[0].mxu0
    %v325 = vadd.f32 %v228, %v324
    %v326 = vpop.f32.mrb[0].mxu0
    %v327 = vadd.f32 %v232, %v326
    %328 = vmatprep.mubr.f32.mxu0 0.0
    %329 = vmatmul.mubr.f32.gmra.mrb[0].mxu0 %v51
    %v330 = vpop.f32.mrb[0].mxu0
    %v331 = vadd.f32 %v228, %v330
    %v332 = vpop.f32.mrb[0].mxu0
    %v333 = vadd.f32 %v232, %v332
    %334 = vmatprep.mubr.f32.mxu0 0.0
    %335 = vmatmul.mubr.f32.gmra.mrb[0].mxu0 %v52
    %v336 = vpop.f32.mrb[0].mxu0
    %v337 = vadd.f32 %v228, %v336
    %v338 = vpop.f32.mrb[0].mxu0
    %v339 = vadd.f32 %v232, %v338
    %340 = vmatprep.mubr.f32.mxu0 0.0
    %341 = vmatmul.mubr.f32.gmra.mrb[0].mxu0 %v53
    %v342 = vpop.f32.mrb[0].mxu0
    %v343 = vadd.f32 %v228, %v342
    %v344 = vpop.f32.mrb[0].mxu0
    %v345 = vadd.f32 %v232, %v344
    %346 = vmatprep.mubr.f32.mxu0 0.0
    %347 = vmatmul.mubr.f32.gmra.mrb[0].mxu0 %v54
    %v348 = vpop.f32.mrb[0].mxu0
    %v349 = vadd.f32 %v228, %v348
    %v350 = vpop.f32.mrb[0].mxu0
    %v351 = vadd.f32 %v232, %v350
    %352 = vmatprep.mubr.f32.mxu0 0.0
    %353 = vmatmul.mubr.f32.gmra.mrb[0].mxu0 %v55
    %v354 = vpop.f32.mrb[0].mxu0
    %v355 = vadd.f32 %v228, %v354
    %v356 = vpop.f32.mrb[0].mxu0
    %v357 = vadd.f32 %v232, %v356
    %358 = vmatprep.mubr.f32.mxu0 0.0
    %359 = vmatmul.mubr.f32.gmra.mrb[0].mxu0 %v56
    %v360 = vpop.f32.mrb[0].mxu0
    %v361 = vadd.f32 %v228, %v360
    %v362 = vpop.f32.mrb[0].mxu0
    %v363 = vadd.f32 %v232, %v362
    %364 = vmatprep.mubr.f32.mxu0 0.0
    %365 = vmatmul.mubr.f32.gmra.mrb[0].mxu0 %v57
    %v366 = vpop.f32.mrb[0].mxu0
    %v367 = vadd.f32 %v228, %v366
    %v368 = vpop.f32.mrb[0].mxu0
    %v369 = vadd.f32 %v232, %v368
    %370 = vmatprep.mubr.f32.mxu0 0.0
    %371 = vmatmul.mubr.f32.gmra.mrb[0].mxu0 %v58
    %v372 = vpop.f32.mrb[0].mxu0
    %v373 = vadd.f32 %v228, %v372
    %v374 = vpop.f32.mrb[0].mxu0
    %v375 = vadd.f32 %v232, %v374
    %376 = vmatprep.mubr.f32.mxu0 0.0
    %377 = vmatmul.mubr.f32.gmra.mrb[0].mxu0 %v59
    %v378 = vpop.f32.mrb[0].mxu0
    %v379 = vadd.f32 %v228, %v378
    %v380 = vpop.f32.mrb[0].mxu0
    %v381 = vadd.f32 %v232, %v380
    %382 = vmatprep.mubr.f32.mxu0 0.0
    %383 = vmatmul.mubr.f32.gmra.mrb[0].mxu0 %v60
    %v384 = vpop.f32.mrb[0].mxu0
    %v385 = vadd.f32 %v228, %v384
    %v386 = vpop.f32.mrb[0].mxu0
    %v387 = vadd.f32 %v232, %v386
    %388 = vmatprep.mubr.f32.mxu0 0.0
    %389 = vmatmul.mubr.f32.gmra.mrb[0].mxu0 %v61
    %v390 = vpop.f32.mrb[0].mxu0
    %v391 = vadd.f32 %v228, %v390
    %v392 = vpop.f32.mrb[0].mxu0
    %v393 = vadd.f32 %v232, %v392
    %394 = vmatprep.mubr.f32.mxu0 0.0
    %395 = vmatmul.mubr.f32.gmra.mrb[0].mxu0 %v62
    %v396 = vpop.f32.mrb[0].mxu0
    %v397 = vadd.f32 %v228, %v396
    %v398 = vpop.f32.mrb[0].mxu0
    %v399 = vadd.f32 %v232, %v398
    %400 = vmatprep.mubr.f32.mxu0 0.0
    %401 = vmatmul.mubr.f32.gmra.mrb[0].mxu0 %v63
    %v402 = vpop.f32.mrb[0].mxu0
    %v403 = vadd.f32 %v228, %v402
    %v404 = vpop.f32.mrb[0].mxu0
    %v405 = vadd.f32 %v232, %v404
    %406 = vmatprep.mubr.f32.mxu0 0.0
    %407 = vmatmul.mubr.f32.gmra.mrb[0].mxu0 %v64
    %v408 = vpop.f32.mrb[0].mxu0
    %v409 = vadd.f32 %v228, %v408
    %v410 = vpop.f32.mrb[0].mxu0
    %v411 = vadd.f32 %v232, %v410
    %412 = vmatprep.mubr.f32.mxu0 0.0
    %413 = vmatmul.mubr.f32.gmra.mrb[0].mxu0 %v65
    %v414 = vpop.f32.mrb[0].mxu0
    %v415 = vadd.f32 %v228, %v414
    %v416 = vpop.f32.mrb[0].mxu0
    %v417 = vadd.f32 %v232, %v416
    %418 = vmatprep.mubr.f32.mxu0 0.0
    %419 = vmatmul.mubr.f32.gmra.mrb[0].mxu0 %v66
    %v420 = vpop.f32.mrb[0].mxu0
    %v421 = vadd.f32 %v228, %v420
    %v422 = vpop.f32.mrb[0].mxu0
    %v423 = vadd.f32 %v232, %v422
    %424 = vmatprep.mubr.f32.mxu0 0.0
    %425 = vmatmul.mubr.f32.gmra.mrb[0].mxu0 %v67
    %v426 = vpop.f32.mrb[0].mxu0
    %v427 = vadd.f32 %v228, %v426
    %v428 = vpop.f32.mrb[0].mxu0
    %v429 = vadd.f32 %v232, %v428
    %430 = vmatprep.mubr.f32.mxu0 0.0
    %431 = vmatmul.mubr.f32.gmra.mrb[0].mxu0 %v68
    %v432 = vpop.f32.mrb[0].mxu0
    %v433 = vadd.f32 %v228, %v432
    %v434 = vpop.f32.mrb[0].mxu0
    %v435 = vadd.f32 %v232, %v434
    %436 = vmatprep.mubr.f32.mxu0 0.0
    %437 = vmatmul.mubr.f32.gmra.mrb[0].mxu0 %v69
    %v438 = vpop.f32.mrb[0].mxu0
    %v439 = vadd.f32 %v228, %v438
    %v440 = vpop.f32.mrb[0].mxu0
    %v441 = vadd.f32 %v232, %v440
    %442 = vmatprep.mubr.f32.mxu0 0.0
    %443 = vmatmul.mubr.f32.gmra.mrb[0].mxu0 %v70
    %v444 = vpop.f32.mrb[0].mxu0
    %v445 = vadd.f32 %v228, %v444
    %v446 = vpop.f32.mrb[0].mxu0
    %v447 = vadd.f32 %v232, %v446
    %448 = vmatprep.mubr.f32.mxu0 0.0
    %449 = vmatmul.mubr.f32.gmra.mrb[0].mxu0 %v71
    %v450 = vpop.f32.mrb[0].mxu0
    %v451 = vadd.f32 %v228, %v450
    %v452 = vpop.f32.mrb[0].mxu0
    %v453 = vadd.f32 %v232, %v452
    %454 = vmatprep.mubr.f32.mxu0 0.0
    %455 = vmatmul.mubr.f32.gmra.mrb[0].mxu0 %v72
    %v456 = vpop.f32.mrb[0].mxu0
    %v457 = vadd.f32 %v228, %v456
    %v458 = vpop.f32.mrb[0].mxu0
    %v459 = vadd.f32 %v232, %v458
    %460 = vmatprep.mubr.f32.mxu0 0.0
    %461 = vmatmul.mubr.f32.gmra.mrb[0].mxu0 %v73
    %v462 = vpop.f32.mrb[0].mxu0
    %v463 = vadd.f32 %v228, %v462
    %v464 = vpop.f32.mrb[0].mxu0
    %v465 = vadd.f32 %v232, %v464
    %466 = vmatprep.mubr.f32.mxu0 0.0
    %467 = vmatmul.mubr.f32.gmra.mrb[0].mxu0 %v74
    %v468 = vpop.f32.mrb[0].mxu0
    %v469 = vadd.f32 %v228, %v468
    %v470 = vpop.f32.mrb[0].mxu0
    %v471 = vadd.f32 %v232, %v470
    %472 = vmatprep.mubr.f32.mxu0 0.0
    %473 = vmatmul.mubr.f32.gmra.mrb[0].mxu0 %v75
    %v474 = vpop.f32.mrb[0].mxu0
    %v475 = vadd.f32 %v228, %v474
    %v476 = vpop.f32.mrb[0].mxu0
    %v477 = vadd.f32 %v232, %v476
    %478 = vmatprep.mubr.f32.mxu0 0.0
    %479 = vmatmul.mubr.f32.gmra.mrb[0].mxu0 %v76
    %v480 = vpop.f32.mrb[0].mxu0
    %v481 = vadd.f32 %v228, %v480
    %v482 = vpop.f32.mrb[0].mxu0
    %v483 = vadd.f32 %v232, %v482
    %484 = vmatprep.mubr.f32.mxu0 0.0
    %485 = vmatmul.mubr.f32.gmra.mrb[0].mxu0 %v77
    %v486 = vpop.f32.mrb[0].mxu0
    %v487 = vadd.f32 %v228, %v486
    %v488 = vpop.f32.mrb[0].mxu0
    %v489 = vadd.f32 %v232, %v488
    %490 = vmatprep.mubr.f32.mxu0 0.0
    %491 = vmatmul.mubr.f32.gmra.mrb[0].mxu0 %v78
    %v492 = vpop.f32.mrb[0].mxu0
    %v493 = vadd.f32 %v228, %v492
    %v494 = vpop.f32.mrb[0].mxu0
    %v495 = vadd.f32 %v232, %v494
    %496 = vmatprep.mubr.f32.mxu0 0.0
    %497 = vmatmul.mubr.f32.gmra.mrb[0].mxu0 %v79
    %v498 = vpop.f32.mrb[0].mxu0
    %v499 = vadd.f32 %v228, %v498
    %v500 = vpop.f32.mrb[0].mxu0
    %v501 = vadd.f32 %v232, %v500
    %502 = vmatprep.mubr.f32.mxu0 0.0
    %503 = vmatmul.mubr.f32.gmra.mrb[0].mxu0 %v80
    %v504 = vpop.f32.mrb[0].mxu0
    %v505 = vadd.f32 %v228, %v504
    %v506 = vpop.f32.mrb[0].mxu0
    %v507 = vadd.f32 %v232, %v506
    %508 = vmatprep.mubr.f32.mxu0 0.0
    %509 = vmatmul.mubr.f32.gmra.mrb[0].mxu0 %v81
    %v510 = vpop.f32.mrb[0].mxu0
    %v511 = vadd.f32 %v228, %v510
    %v512 = vpop.f32.mrb[0].mxu0
    %v513 = vadd.f32 %v232, %v512
    %514 = vmatprep.mubr.f32.mxu0 0.0
    %515 = vmatmul.mubr.f32.gmra.mrb[0].mxu0 %v82
    %v516 = vpop.f32.mrb[0].mxu0
    %v517 = vadd.f32 %v228, %v516
    %v518 = vpop.f32.mrb[0].mxu0
    %v519 = vadd.f32 %v232, %v518
    %520 = vmatprep.mubr.f32.mxu0 0.0
    %521 = vmatmul.mubr.f32.gmra.mrb[0].mxu0 %v83
    %v522 = vpop.f32.mrb[0].mxu0
    %v523 = vadd.f32 %v228, %v522
    %v524 = vpop.f32.mrb[0].mxu0
    %v525 = vadd.f32 %v232, %v524
    %526 = vmatprep.mubr.f32.mxu0 0.0
    %527 = vmatmul.mubr.f32.gmra.mrb[0].mxu0 %v84
    %v528 = vpop.f32.mrb[0].mxu0
    %v529 = vadd.f32 %v228, %v528
    %v530 = vpop.f32.mrb[0].mxu0
    %v531 = vadd.f32 %v232, %v530
    %532 = vmatprep.mubr.f32.mxu0 0.0
    %533 = vmatmul.mubr.f32.gmra.mrb[0].mxu0 %v85
    %v534 = vpop.f32.mrb[0].mxu0
    %v535 = vadd.f32 %v228, %v534
    %v536 = vpop.f32.mrb[0].mxu0
    %v537 = vadd.f32 %v232, %v536
    %538 = vmatprep.mubr.f32.mxu0 0.0
    %539 = vmatmul.mubr.f32.gmra.mrb[0].mxu0 %v86
    %v540 = vpop.f32.mrb[0].mxu0
    %v541 = vadd.f32 %v228, %v540
    %v542 = vpop.f32.mrb[0].mxu0
    %v543 = vadd.f32 %v232, %v542
    %544 = vmatprep.mubr.f32.mxu0 0.0
    %545 = vmatmul.mubr.f32.gmra.mrb[0].mxu0 %v87
    %v546 = vpop.f32.mrb[0].mxu0
    %v547 = vadd.f32 %v228, %v546
    %v548 = vpop.f32.mrb[0].mxu0
    %v549 = vadd.f32 %v232, %v548
    %550 = vmatprep.mubr.f32.mxu0 0.0
    %551 = vmatmul.mubr.f32.gmra.mrb[0].mxu0 %v88
    %v552 = vpop.f32.mrb[0].mxu0
    %v553 = vadd.f32 %v228, %v552
    %v554 = vpop.f32.mrb[0].mxu0
    %v555 = vadd.f32 %v232, %v554
    %556 = vmatprep.mubr.f32.mxu0 0.0
    %557 = vmatmul.mubr.f32.gmra.mrb[0].mxu0 %v89
    %v558 = vpop.f32.mrb[0].mxu0
    %v559 = vadd.f32 %v228, %v558
    %v560 = vpop.f32.mrb[0].mxu0
    %v561 = vadd.f32 %v232, %v560
    %562 = vmatprep.mubr.f32.mxu0 0.0
    %563 = vmatmul.mubr.f32.gmra.mrb[0].mxu0 %v90
    %v564 = vpop.f32.mrb[0].mxu0
    %v565 = vadd.f32 %v228, %v564
    %v566 = vpop.f32.mrb[0].mxu0
    %v567 = vadd.f32 %v232, %v566
    %568 = vmatprep.mubr.f32.mxu0 0.0
    %569 = vmatmul.mubr.f32.gmra.mrb[0].mxu0 %v91
    %v570 = vpop.f32.mrb[0].mxu0
    %v571 = vadd.f32 %v228, %v570
    %v572 = vpop.f32.mrb[0].mxu0
    %v573 = vadd.f32 %v232, %v572
    %574 = vmatprep.mubr.f32.mxu0 0.0
    %575 = vmatmul.mubr.f32.gmra.mrb[0].mxu0 %v92
    %v576 = vpop.f32.mrb[0].mxu0
    %v577 = vadd.f32 %v228, %v576
    %v578 = vpop.f32.mrb[0].mxu0
    %v579 = vadd.f32 %v232, %v578
    %580 = vmatprep.mubr.f32.mxu0 0.0
    %581 = vmatmul.mubr.f32.gmra.mrb[0].mxu0 %v93
    %v582 = vpop.f32.mrb[0].mxu0
    %v583 = vadd.f32 %v228, %v582
    %v584 = vpop.f32.mrb[0].mxu0
    %v585 = vadd.f32 %v232, %v584
    %586 = vmatprep.mubr.f32.mxu0 0.0
    %587 = vmatmul.mubr.f32.gmra.mrb[0].mxu0 %v94
    %v588 = vpop.f32.mrb[0].mxu0
    %v589 = vadd.f32 %v228, %v588
    %v590 = vpop.f32.mrb[0].mxu0
    %v591 = vadd.f32 %v232, %v590
    %592 = vmatprep.mubr.f32.mxu0 0.0
    %593 = vmatmul.mubr.f32.gmra.mrb[0].mxu0 %v95
    %v594 = vpop.f32.mrb[0].mxu0
    %v595 = vadd.f32 %v228, %v594
    %v596 = vpop.f32.mrb[0].mxu0
    %v597 = vadd.f32 %v232, %v596
    %598 = vmatprep.mubr.f32.mxu0 0.0
    %599 = vmatmul.mubr.f32.gmra.mrb[0].mxu0 %v96
    %v600 = vpop.f32.mrb[0].mxu0
    %v601 = vadd.f32 %v228, %v600
    %v602 = vpop.f32.mrb[0].mxu0
    %v603 = vadd.f32 %v232, %v602
    %604 = vmatprep.mubr.f32.mxu0 0.0
    %605 = vmatmul.mubr.f32.gmra.mrb[0].mxu0 %v97
    %v606 = vpop.f32.mrb[0].mxu0
    %v607 = vadd.f32 %v228, %v606
    %v608 = vpop.f32.mrb[0].mxu0
    %v609 = vadd.f32 %v232, %v608
    %610 = vmatprep.mubr.f32.mxu0 0.0
    %611 = vmatmul.mubr.f32.gmra.mrb[0].mxu0 %v98
    %v612 = vpop.f32.mrb[0].mxu0
    %v613 = vadd.f32 %v228, %v612
    %v614 = vpop.f32.mrb[0].mxu0
    %v615 = vadd.f32 %v232, %v614
    %616 = vmatprep.mubr.f32.mxu0 0.0
    %617 = vmatmul.mubr.f32.gmra.mrb[0].mxu0 %v99
    %v618 = vpop.f32.mrb[0].mxu0
    %v619 = vadd.f32 %v228, %v618
    %v620 = vpop.f32.mrb[0].mxu0
    %v621 = vadd.f32 %v232, %v620
    %622 = vmatprep.mubr.f32.mxu0 0.0
    %623 = vmatmul.mubr.f32.gmra.mrb[0].mxu0 %v100
    %v624 = vpop.f32.mrb[0].mxu0
    %v625 = vadd.f32 %v228, %v624
    %v626 = vpop.f32.mrb[0].mxu0
    %v627 = vadd.f32 %v232, %v626
    %628 = vmatprep.mubr.f32.mxu0 0.0
    %629 = vmatmul.mubr.f32.gmra.mrb[0].mxu0 %v101
    %v630 = vpop.f32.mrb[0].mxu0
    %v631 = vadd.f32 %v228, %v630
    %v632 = vpop.f32.mrb[0].mxu0
    %v633 = vadd.f32 %v232, %v632
    %634 = vmatprep.mubr.f32.mxu0 0.0
    %635 = vmatmul.mubr.f32.gmra.mrb[0].mxu0 %v102
    %v636 = vpop.f32.mrb[0].mxu0
    %v637 = vadd.f32 %v228, %v636
    %v638 = vpop.f32.mrb[0].mxu0
    %v639 = vadd.f32 %v232, %v638
    %640 = vmatprep.mubr.f32.mxu0 0.0
    %641 = vmatmul.mubr.f32.gmra.mrb[0].mxu0 %v103
    %v642 = vpop.f32.mrb[0].mxu0
    %v643 = vadd.f32 %v228, %v642
    %v644 = vpop.f32.mrb[0].mxu0
    %v645 = vadd.f32 %v232, %v644
    %646 = vmatprep.mubr.f32.mxu0 0.0
    %647 = vmatmul.mubr.f32.gmra.mrb[0].mxu0 %v104
    %v648 = vpop.f32.mrb[0].mxu0
    %v649 = vadd.f32 %v228, %v648
    %v650 = vpop.f32.mrb[0].mxu0
    %v651 = vadd.f32 %v232, %v650
    %652 = vmatprep.mubr.f32.mxu0 0.0
    %653 = vmatmul.mubr.f32.gmra.mrb[0].mxu0 %v105
    %v654 = vpop.f32.mrb[0].mxu0
    %v655 = vadd.f32 %v228, %v654
    %v656 = vpop.f32.mrb[0].mxu0
    %v657 = vadd.f32 %v232, %v656
    %658 = vmatprep.mubr.f32.mxu0 0.0
    %659 = vmatmul.mubr.f32.gmra.mrb[0].mxu0 %v106
    %v660 = vpop.f32.mrb[0].mxu0
    %v661 = vadd.f32 %v228, %v660
    %v662 = vpop.f32.mrb[0].mxu0
    %v663 = vadd.f32 %v232, %v662
    %664 = vmatprep.mubr.f32.mxu0 0.0
    %665 = vmatmul.mubr.f32.gmra.mrb[0].mxu0 %v107
    %v666 = vpop.f32.mrb[0].mxu0
    %v667 = vadd.f32 %v228, %v666
    %v668 = vpop.f32.mrb[0].mxu0
    %v669 = vadd.f32 %v232, %v668
    %670 = vmatprep.mubr.f32.mxu0 0.0
    %671 = vmatmul.mubr.f32.gmra.mrb[0].mxu0 %v108
    %v672 = vpop.f32.mrb[0].mxu0
    %v673 = vadd.f32 %v228, %v672
    %v674 = vpop.f32.mrb[0].mxu0
    %v675 = vadd.f32 %v232, %v674
    %676 = vmatprep.mubr.f32.mxu0 0.0
    %677 = vmatmul.mubr.f32.gmra.mrb[0].mxu0 %v109
    %v678 = vpop.f32.mrb[0].mxu0
    %v679 = vadd.f32 %v228, %v678
    %v680 = vpop.f32.mrb[0].mxu0
    %v681 = vadd.f32 %v232, %v680
    %682 = vmatprep.mubr.f32.mxu0 0.0
    %683 = vmatmul.mubr.f32.gmra.mrb[0].mxu0 %v110
    %v684 = vpop.f32.mrb[0].mxu0
    %v685 = vadd.f32 %v228, %v684
    %v686 = vpop.f32.mrb[0].mxu0
    %v687 = vadd.f32 %v232, %v686
    %688 = vmatprep.mubr.f32.mxu0 0.0
    %689 = vmatmul.mubr.f32.gmra.mrb[0].mxu0 %v111
    %v690 = vpop.f32.mrb[0].mxu0
    %v691 = vadd.f32 %v228, %v690
    %v692 = vpop.f32.mrb[0].mxu0
    %v693 = vadd.f32 %v232, %v692
    %694 = vmatprep.mubr.f32.mxu0 0.0
    %695 = vmatmul.mubr.f32.gmra.mrb[0].mxu0 %v112
    %v696 = vpop.f32.mrb[0].mxu0
    %v697 = vadd.f32 %v228, %v696
    %v698 = vpop.f32.mrb[0].mxu0
    %v699 = vadd.f32 %v232, %v698
    %700 = vmatprep.mubr.f32.mxu0 0.0
    %701 = vmatmul.mubr.f32.gmra.mrb[0].mxu0 %v113
    %v702 = vpop.f32.mrb[0].mxu0
    %v703 = vadd.f32 %v228, %v702
    %v704 = vpop.f32.mrb[0].mxu0
    %v705 = vadd.f32 %v232, %v704
    %706 = vmatprep.mubr.f32.mxu0 0.0
    %707 = vmatmul.mubr.f32.gmra.mrb[0].mxu0 %v114
    %v708 = vpop.f32.mrb[0].mxu0
    %v709 = vadd.f32 %v228, %v708
    %v710 = vpop.f32.mrb[0].mxu0
    %v711 = vadd.f32 %v232, %v710
    %712 = vmatprep.mubr.f32.mxu0 0.0
    %713 = vmatmul.mubr.f32.gmra.mrb[0].mxu0 %v115
    %v714 = vpop.f32.mrb[0].mxu0
    %v715 = vadd.f32 %v228, %v714
    %v716 = vpop.f32.mrb[0].mxu0
    %v717 = vadd.f32 %v232, %v716
    %718 = vmatprep.mubr.f32.mxu0 0.0
    %719 = vmatmul.mubr.f32.gmra.mrb[0].mxu0 %v116
    %v720 = vpop.f32.mrb[0].mxu0
    %v721 = vadd.f32 %v228, %v720
    %v722 = vpop.f32.mrb[0].mxu0
    %v723 = vadd.f32 %v232, %v722
    %724 = vmatprep.mubr.f32.mxu0 0.0
    %725 = vmatmul.mubr.f32.gmra.mrb[0].mxu0 %v117
    %v726 = vpop.f32.mrb[0].mxu0
    %v727 = vadd.f32 %v228, %v726
    %v728 = vpop.f32.mrb[0].mxu0
    %v729 = vadd.f32 %v232, %v728
    %730 = vmatprep.mubr.f32.mxu0 0.0
    %731 = vmatmul.mubr.f32.gmra.mrb[0].mxu0 %v118
    %v732 = vpop.f32.mrb[0].mxu0
    %v733 = vadd.f32 %v228, %v732
    %v734 = vpop.f32.mrb[0].mxu0
    %v735 = vadd.f32 %v232, %v734
    %736 = vmatprep.mubr.f32.mxu0 0.0
    %737 = vmatmul.mubr.f32.gmra.mrb[0].mxu0 %v119
    %v738 = vpop.f32.mrb[0].mxu0
    %v739 = vadd.f32 %v228, %v738
    %v740 = vpop.f32.mrb[0].mxu0
    %v741 = vadd.f32 %v232, %v740
    %742 = vmatprep.mubr.f32.mxu0 0.0
    %743 = vmatmul.mubr.f32.gmra.mrb[0].mxu0 %v120
    %v744 = vpop.f32.mrb[0].mxu0
    %v745 = vadd.f32 %v228, %v744
    %v746 = vpop.f32.mrb[0].mxu0
    %v747 = vadd.f32 %v232, %v746
    %748 = vmatprep.mubr.f32.mxu0 0.0
    %749 = vmatmul.mubr.f32.gmra.mrb[0].mxu0 %v121
    %v750 = vpop.f32.mrb[0].mxu0
    %v751 = vadd.f32 %v228, %v750
    %v752 = vpop.f32.mrb[0].mxu0
    %v753 = vadd.f32 %v232, %v752
    %754 = vmatprep.mubr.f32.mxu0 0.0
    %755 = vmatmul.mubr.f32.gmra.mrb[0].mxu0 %v122
    %v756 = vpop.f32.mrb[0].mxu0
    %v757 = vadd.f32 %v228, %v756
    %v758 = vpop.f32.mrb[0].mxu0
    %v759 = vadd.f32 %v232, %v758
    %760 = vmatprep.mubr.f32.mxu0 0.0
    %761 = vmatmul.mubr.f32.gmra.mrb[0].mxu0 %v123
    %v762 = vpop.f32.mrb[0].mxu0
    %v763 = vadd.f32 %v228, %v762
    %v764 = vpop.f32.mrb[0].mxu0
    %v765 = vadd.f32 %v232, %v764
    %766 = vmatprep.mubr.f32.mxu0 0.0
    %767 = vmatmul.mubr.f32.gmra.mrb[0].mxu0 %v124
    %v768 = vpop.f32.mrb[0].mxu0
    %v769 = vadd.f32 %v228, %v768
    %v770 = vpop.f32.mrb[0].mxu0
    %v771 = vadd.f32 %v232, %v770
    %772 = vmatprep.mubr.f32.mxu0 0.0
    %773 = vmatmul.mubr.f32.gmra.mrb[0].mxu0 %v125
    %v774 = vpop.f32.mrb[0].mxu0
    %v775 = vadd.f32 %v228, %v774
    %v776 = vpop.f32.mrb[0].mxu0
    %v777 = vadd.f32 %v232, %v776
    %778 = vmatprep.mubr.f32.mxu0 0.0
    %779 = vmatmul.mubr.f32.gmra.mrb[0].mxu0 %v126
    %v780 = vpop.f32.mrb[0].mxu0
    %v781 = vadd.f32 %v228, %v780
    %v782 = vpop.f32.mrb[0].mxu0
    %v783 = vadd.f32 %v232, %v782
    %784 = vmatprep.mubr.f32.mxu0 0.0
    %785 = vmatmul.mubr.f32.gmra.mrb[0].mxu0 %v127
    %v786 = vpop.f32.mrb[0].mxu0
    %v787 = vadd.f32 %v228, %v786
    %v788 = vpop.f32.mrb[0].mxu0
    %v789 = vadd.f32 %v232, %v788
    %790 = vmatprep.mubr.f32.mxu0 0.0
    %791 = vmatmul.mubr.f32.gmra.mrb[0].mxu0 %v128
    %v792 = vpop.f32.mrb[0].mxu0
    %v793 = vadd.f32 %v228, %v792
    %v794 = vpop.f32.mrb[0].mxu0
    %v795 = vadd.f32 %v232, %v794
    %796 = vmatprep.mubr.f32.mxu0 0.0
    %797 = vmatmul.mubr.f32.gmra.mrb[0].mxu0 %v129
    %v798 = vpop.f32.mrb[0].mxu0
    %v799 = vadd.f32 %v228, %v798
    %v800 = vpop.f32.mrb[0].mxu0
    %v801 = vadd.f32 %v232, %v800
    %802 = vmatprep.mubr.f32.mxu0 0.0
    %803 = vmatmul.mubr.f32.gmra.mrb[0].mxu0 %v130
    %v804 = vpop.f32.mrb[0].mxu0
    %v805 = vadd.f32 %v228, %v804
    %v806 = vpop.f32.mrb[0].mxu0
    %v807 = vadd.f32 %v232, %v806
    %808 = vmatprep.mubr.f32.mxu0 0.0
    %809 = vmatmul.mubr.f32.gmra.mrb[0].mxu0 %v131
    %v810 = vpop.f32.mrb[0].mxu0
    %v811 = vadd.f32 %v228, %v810
    %v812 = vpop.f32.mrb[0].mxu0
    %v813 = vadd.f32 %v232, %v812
    %814 = vmatprep.mubr.f32.mxu0 0.0
    %815 = vmatmul.mubr.f32.gmra.mrb[0].mxu0 %v132
    %v816 = vpop.f32.mrb[0].mxu0
    %v817 = vadd.f32 %v228, %v816
    %v818 = vpop.f32.mrb[0].mxu0
    %v819 = vadd.f32 %v232, %v818
    %820 = vmatprep.mubr.f32.mxu0 0.0
    %821 = vmatmul.mubr.f32.gmra.mrb[0].mxu0 %v133
    %v822 = vpop.f32.mrb[0].mxu0
    %v823 = vadd.f32 %v228, %v822
    %v824 = vpop.f32.mrb[0].mxu0
    %v825 = vadd.f32 %v232, %v824
    %826 = vmatprep.mubr.f32.mxu0 0.0
    %827 = vmatmul.mubr.f32.gmra.mrb[0].mxu0 %v134
    %v828 = vpop.f32.mrb[0].mxu0
    %v829 = vadd.f32 %v228, %v828
    %v830 = vpop.f32.mrb[0].mxu0
    %v831 = vadd.f32 %v232, %v830
    %832 = vmatprep.mubr.f32.mxu0 0.0
    %833 = vmatmul.mubr.f32.gmra.mrb[0].mxu0 %v135
    %v834 = vpop.f32.mrb[0].mxu0
    %v835 = vadd.f32 %v228, %v834
    %v836 = vpop.f32.mrb[0].mxu0
    %v837 = vadd.f32 %v232, %v836
    %838 = vmatprep.mubr.f32.mxu0 0.0
    %839 = vmatmul.mubr.f32.gmra.mrb[0].mxu0 %v136
    %v840 = vpop.f32.mrb[0].mxu0
    %v841 = vadd.f32 %v228, %v840
    %v842 = vpop.f32.mrb[0].mxu0
    %v843 = vadd.f32 %v232, %v842
    %844 = vmatprep.mubr.f32.mxu0 0.0
    %845 = vmatmul.mubr.f32.gmra.mrb[0].mxu0 %v137
    %v846 = vpop.f32.mrb[0].mxu0
    %v847 = vadd.f32 %v228, %v846
    %v848 = vpop.f32.mrb[0].mxu0
    %v849 = vadd.f32 %v232, %v848
    %850 = vmatprep.mubr.f32.mxu0 0.0
    %851 = vmatmul.mubr.f32.gmra.mrb[0].mxu0 %v138
    %v852 = vpop.f32.mrb[0].mxu0
    %v853 = vadd.f32 %v228, %v852
    %v854 = vpop.f32.mrb[0].mxu0
    %v855 = vadd.f32 %v232, %v854
    %856 = vmatprep.mubr.f32.mxu0 0.0
    %857 = vmatmul.mubr.f32.gmra.mrb[0].mxu0 %v139
    %v858 = vpop.f32.mrb[0].mxu0
    %v859 = vadd.f32 %v228, %v858
    %v860 = vpop.f32.mrb[0].mxu0
    %v861 = vadd.f32 %v232, %v860
    %862 = vmatprep.mubr.f32.mxu0 0.0
    %863 = vmatmul.mubr.f32.gmra.mrb[0].mxu0 %v140
    %v864 = vpop.f32.mrb[0].mxu0
    %v865 = vadd.f32 %v228, %v864
    %v866 = vpop.f32.mrb[0].mxu0
    %v867 = vadd.f32 %v232, %v866
    %868 = vmatprep.mubr.f32.mxu0 0.0
    %869 = vmatmul.mubr.f32.gmra.mrb[0].mxu0 %v141
    %v870 = vpop.f32.mrb[0].mxu0
    %v871 = vadd.f32 %v228, %v870
    %v872 = vpop.f32.mrb[0].mxu0
    %v873 = vadd.f32 %v232, %v872
    %874 = vmatprep.mubr.f32.mxu0 0.0
    %875 = vmatmul.mubr.f32.gmra.mrb[0].mxu0 %v142
    %v876 = vpop.f32.mrb[0].mxu0
    %v877 = vadd.f32 %v228, %v876
    %v878 = vpop.f32.mrb[0].mxu0
    %v879 = vadd.f32 %v232, %v878
    %880 = vmatprep.mubr.f32.mxu0 0.0
    %881 = vmatmul.mubr.f32.gmra.mrb[0].mxu0 %v143
    %v882 = vpop.f32.mrb[0].mxu0
    %v883 = vadd.f32 %v228, %v882
    %v884 = vpop.f32.mrb[0].mxu0
    %v885 = vadd.f32 %v232, %v884
    %886 = vmatprep.mubr.f32.mxu0 0.0
    %887 = vmatmul.mubr.f32.gmra.mrb[0].mxu0 %v144
    %v888 = vpop.f32.mrb[0].mxu0
    %v889 = vadd.f32 %v228, %v888
    %v890 = vpop.f32.mrb[0].mxu0
    %v891 = vadd.f32 %v232, %v890
    %892 = vmatprep.mubr.f32.mxu0 0.0
    %893 = vmatmul.mubr.f32.gmra.mrb[0].mxu0 %v145
    %v894 = vpop.f32.mrb[0].mxu0
    %v895 = vadd.f32 %v228, %v894
    %v896 = vpop.f32.mrb[0].mxu0
    %v897 = vadd.f32 %v232, %v896
    %898 = vmatprep.mubr.f32.mxu0 0.0
    %899 = vmatmul.mubr.f32.gmra.mrb[0].mxu0 %v146
    %v900 = vpop.f32.mrb[0].mxu0
    %v901 = vadd.f32 %v228, %v900
    %v902 = vpop.f32.mrb[0].mxu0
    %v903 = vadd.f32 %v232, %v902
    %904 = vmatprep.mubr.f32.mxu0 0.0
    %905 = vmatmul.mubr.f32.gmra.mrb[0].mxu0 %v147
    %v906 = vpop.f32.mrb[0].mxu0
    %v907 = vadd.f32 %v228, %v906
    %v908 = vpop.f32.mrb[0].mxu0
    %v909 = vadd.f32 %v232, %v908
    %910 = vmatprep.mubr.f32.mxu0 0.0
    %911 = vmatmul.mubr.f32.gmra.mrb[0].mxu0 %v148
    %v912 = vpop.f32.mrb[0].mxu0
    %v913 = vadd.f32 %v228, %v912
    %v914 = vpop.f32.mrb[0].mxu0
    %v915 = vadd.f32 %v232, %v914
    %916 = vmatprep.mubr.f32.mxu0 0.0
    %917 = vmatmul.mubr.f32.gmra.mrb[0].mxu0 %v149
    %v918 = vpop.f32.mrb[0].mxu0
    %v919 = vadd.f32 %v228, %v918
    %v920 = vpop.f32.mrb[0].mxu0
    %v921 = vadd.f32 %v232, %v920
    %922 = vmatprep.mubr.f32.mxu0 0.0
    %923 = vmatmul.mubr.f32.gmra.mrb[0].mxu0 %v150
    %v924 = vpop.f32.mrb[0].mxu0
    %v925 = vadd.f32 %v228, %v924
    %v926 = vpop.f32.mrb[0].mxu0
    %v927 = vadd.f32 %v232, %v926
    %928 = vmatprep.mubr.f32.mxu0 0.0
    %929 = vmatmul.mubr.f32.gmra.mrb[0].mxu0 %v151
    %v930 = vpop.f32.mrb[0].mxu0
    %v931 = vadd.f32 %v228, %v930
    %v932 = vpop.f32.mrb[0].mxu0
    %v933 = vadd.f32 %v232, %v932
    %934 = vmatprep.mubr.f32.mxu0 0.0
    %935 = vmatmul.mubr.f32.gmra.mrb[0].mxu0 %v152
    %v936 = vpop.f32.mrb[0].mxu0
    %v937 = vadd.f32 %v228, %v936
    %v938 = vpop.f32.mrb[0].mxu0
    %v939 = vadd.f32 %v232, %v938
    %940 = vmatprep.mubr.f32.mxu0 0.0
    %941 = vmatmul.mubr.f32.gmra.mrb[0].mxu0 %v153
    %v942 = vpop.f32.mrb[0].mxu0
    %v943 = vadd.f32 %v228, %v942
    %v944 = vpop.f32.mrb[0].mxu0
    %v945 = vadd.f32 %v232, %v944
    %946 = vmatprep.mubr.f32.mxu0 0.0
    %947 = vmatmul.mubr.f32.gmra.mrb[0].mxu0 %v154
    %v948 = vpop.f32.mrb[0].mxu0
    %v949 = vadd.f32 %v228, %v948
    %v950 = vpop.f32.mrb[0].mxu0
    %v951 = vadd.f32 %v232, %v950
    %952 = vmatprep.mubr.f32.mxu0 0.0
    %953 = vmatmul.mubr.f32.gmra.mrb[0].mxu0 %v155
    %v954 = vpop.f32.mrb[0].mxu0
    %v955 = vadd.f32 %v228, %v954
    %v956 = vpop.f32.mrb[0].mxu0
    %v957 = vadd.f32 %v232, %v956
    %958 = vmatprep.mubr.f32.mxu0 0.0
    %959 = vmatmul.mubr.f32.gmra.mrb[0].mxu0 %v156
    %v960 = vpop.f32.mrb[0].mxu0
    %v961 = vadd.f32 %v228, %v960
    %v962 = vpop.f32.mrb[0].mxu0
    %v963 = vadd.f32 %v232, %v962
    %964 = vmatprep.mubr.f32.mxu0 0.0
    %965 = vmatmul.mubr.f32.gmra.mrb[0].mxu0 %v157
    %v966 = vpop.f32.mrb[0].mxu0
    %v967 = vadd.f32 %v228, %v966
    %v968 = vpop.f32.mrb[0].mxu0
    %v969 = vadd.f32 %v232, %v968
    %970 = vmatprep.mubr.f32.mxu0 0.0
    %971 = vmatmul.mubr.f32.gmra.mrb[0].mxu0 %v158
    %v972 = vpop.f32.mrb[0].mxu0
    %v973 = vadd.f32 %v228, %v972
    %v974 = vpop.f32.mrb[0].mxu0
    %v975 = vadd.f32 %v232, %v974
    %976 = vmatprep.mubr.f32.mxu0 0.0
    %977 = vmatmul.mubr.f32.gmra.mrb[0].mxu0 %v159
    %v978 = vpop.f32.mrb[0].mxu0
    %v979 = vadd.f32 %v228, %v978
    %v980 = vpop.f32.mrb[0].mxu0
    %v981 = vadd.f32 %v232, %v980
    %982 = vmatprep.mubr.f32.mxu0 0.0
    %983 = vmatmul.mubr.f32.gmra.mrb[0].mxu0 %v160
    %v984 = vpop.f32.mrb[0].mxu0
    %v985 = vadd.f32 %v228, %v984
    %v986 = vpop.f32.mrb[0].mxu0
    %v987 = vadd.f32 %v232, %v986
    %988 = vmatprep.mubr.f32.mxu0 0.0
    %989 = vmatmul.mubr.f32.gmra.mrb[0].mxu0 %v161
    %v990 = vpop.f32.mrb[0].mxu0
    %v991 = vadd.f32 %v228, %v990
    %v992 = vpop.f32.mrb[0].mxu0
    %v993 = vadd.f32 %v232, %v992
    %994 = vmatprep.mubr.f32.mxu0 0.0
    %995 = vmatmul.mubr.f32.gmra.mrb[0].mxu0 %v162
    %v996 = vpop.f32.mrb[0].mxu0
    %v997 = vadd.f32 %v228, %v996
    %v998 = vpop.f32.mrb[0].mxu0
    %v999 = vadd.f32 %v232, %v998
    %1000 = vmatprep.mubr.f32.mxu0 0.0
    %1001 = vmatmul.mubr.f32.gmra.mrb[0].mxu0 %v163
    %v1002 = vpop.f32.mrb[0].mxu0
    %v1003 = vadd.f32 %v228, %v1002
    %v1004 = vpop.f32.mrb[0].mxu0
    %v1005 = vadd.f32 %v232, %v1004
    %1006 = vmatprep.mubr.f32.mxu0 0.0
    %1007 = vmatmul.mubr.f32.gmra.mrb[0].mxu0 %v164
    %v1008 = vpop.f32.mrb[0].mxu0
    %v1009 = vadd.f32 %v228, %v1008
    %v1010 = vpop.f32.mrb[0].mxu0
    %v1011 = vadd.f32 %v232, %v1010
    %1012 = vmatprep.mubr.f32.mxu0 0.0
    %1013 = vmatmul.mubr.f32.gmra.mrb[0].mxu0 %v165
    %v1014 = vpop.f32.mrb[0].mxu0
    %v1015 = vadd.f32 %v228, %v1014
    %v1016 = vpop.f32.mrb[0].mxu0
    %v1017 = vadd.f32 %v232, %v1016
    %1018 = vmatprep.mubr.f32.mxu0 0.0
    %1019 = vmatmul.mubr.f32.gmra.mrb[0].mxu0 %v166
    %v1020 = vpop.f32.mrb[0].mxu0
    %v1021 = vadd.f32 %v228, %v1020
    %v1022 = vpop.f32.mrb[0].mxu0
    %v1023 = vadd.f32 %v232, %v1022
    %1024 = vmatprep.mubr.f32.mxu0 0.0
    %1025 = vmatmul.mubr.f32.gmra.mrb[0].mxu0 %v167
    %v1026 = vpop.f32.mrb[0].mxu0
    %v1027 = vadd.f32 %v228, %v1026
    %v1028 = vpop.f32.mrb[0].mxu0
    %v1029 = vadd.f32 %v232, %v1028
    %1030 = vmatprep.mubr.f32.mxu0 0.0
    %1031 = vmatmul.mubr.f32.gmra.mrb[0].mxu0 %v168
    %v1032 = vpop.f32.mrb[0].mxu0
    %v1033 = vadd.f32 %v228, %v1032
    %v1034 = vpop.f32.mrb[0].mxu0
    %v1035 = vadd.f32 %v232, %v1034
    %1036 = vmatprep.mubr.f32.mxu0 0.0
    %1037 = vmatmul.mubr.f32.gmra.mrb[0].mxu0 %v169
    %v1038 = vpop.f32.mrb[0].mxu0
    %v1039 = vadd.f32 %v228, %v1038
    %v1040 = vpop.f32.mrb[0].mxu0
    %v1041 = vadd.f32 %v232, %v1040
    %1042 = vmatprep.mubr.f32.mxu0 0.0
    %1043 = vmatmul.mubr.f32.gmra.mrb[0].mxu0 %v170
    %v1044 = vpop.f32.mrb[0].mxu0
    %v1045 = vadd.f32 %v228, %v1044
    %v1046 = vpop.f32.mrb[0].mxu0
    %v1047 = vadd.f32 %v232, %v1046
    %1048 = vmatprep.mubr.f32.mxu0 0.0
    %1049 = vmatmul.mubr.f32.gmra.mrb[0].mxu0 %v171
    %v1050 = vpop.f32.mrb[0].mxu0
    %v1051 = vadd.f32 %v228, %v1050
    %v1052 = vpop.f32.mrb[0].mxu0
    %v1053 = vadd.f32 %v232, %v1052
    %1054 = vmatprep.mubr.f32.mxu0 0.0
    %1055 = vmatmul.mubr.f32.gmra.mrb[0].mxu0 %v172
    %v1056 = vpop.f32.mrb[0].mxu0
    %v1057 = vadd.f32 %v228, %v1056
    %v1058 = vpop.f32.mrb[0].mxu0
    %v1059 = vadd.f32 %v232, %v1058
    %1060 = vmatprep.mubr.f32.mxu0 0.0
    %1061 = vmatmul.mubr.f32.gmra.mrb[0].mxu0 %v173
    %v1062 = vpop.f32.mrb[0].mxu0
    %v1063 = vadd.f32 %v228, %v1062
    %v1064 = vpop.f32.mrb[0].mxu0
    %v1065 = vadd.f32 %v232, %v1064
    %1066 = vmatprep.mubr.f32.mxu0 0.0
    %1067 = vmatmul.mubr.f32.gmra.mrb[0].mxu0 %v174
    %v1068 = vpop.f32.mrb[0].mxu0
    %v1069 = vadd.f32 %v228, %v1068
    %v1070 = vpop.f32.mrb[0].mxu0
    %v1071 = vadd.f32 %v232, %v1070
    %1072 = vdwg.mxu0
    %1073 = vmatprep.subr.mxu0 0.0
    %1074 = vmatpush1.msra.mxu0 %v177
    %1075 = vmatprep.subr.mxu0 0.0
    %1076 = vmatpush1.msra.mxu0 %v180
    %1077 = vmatprep.subr.mxu0 0.0
    %1078 = vmatpush1.msra.mxu0 %v183
    %1079 = vmatprep.subr.mxu0 0.0
    %1080 = vmatpush1.msra.mxu0 %v186
    %1081 = vmatprep.subr.mxu0 0.0
    %1082 = vmatpush1.msra.mxu0 %v189
    %1083 = vmatprep.subr.mxu0 0.0
    %1084 = vmatpush1.msra.mxu0 %v192
    %1085 = vmatprep.subr.mxu0 0.0
    %1086 = vmatpush1.msra.mxu0 %v195
    %1087 = vmatprep.subr.mxu0 0.0
    %1088 = vmatpush1.msra.mxu0 %v198
    %1089 = vmatprep.subr.mxu0 0.0
    %1090 = vmatpush1.msra.mxu0 %v201
    %1091 = vmatprep.subr.mxu0 0.0
    %1092 = vmatpush1.msra.mxu0 %v204
    %1093 = vmatprep.subr.mxu0 0.0
    %1094 = vmatpush1.msra.mxu0 %v207
    %1095 = vmatprep.subr.mxu0 0.0
    %1096 = vmatpush1.msra.mxu0 %v210
    %1097 = vmatprep.subr.mxu0 0.0
    %1098 = vmatpush1.msra.mxu0 %v213
    %1099 = vmatprep.subr.mxu0 0.0
    %1100 = vmatpush1.msra.mxu0 %v216
    %1101 = vmatprep.subr.mxu0 0.0
    %1102 = vmatpush1.msra.mxu0 %v219
    %1103 = vmatprep.subr.mxu0 0.0
    %1104 = vmatpush1.msra.mxu0 %v222
    %1105 = vmatprep.subr.mxu0 0.0
    %1106 = vmatpush1.msra.mxu0 0.0
    %1107 = vmatprep.subr.mxu0 0.0
    %1108 = vmatpush1.msra.mxu0 0.0
    %1109 = vmatprep.subr.mxu0 0.0
    %1110 = vmatpush1.msra.mxu0 0.0
    %1111 = vmatprep.subr.mxu0 0.0
    %1112 = vmatpush1.msra.mxu0 0.0
    %1113 = vmatprep.subr.mxu0 0.0
    %1114 = vmatpush1.msra.mxu0 0.0
    %1115 = vmatprep.subr.mxu0 0.0
    %1116 = vmatpush1.msra.mxu0 0.0
    %1117 = vmatprep.subr.mxu0 0.0
    %1118 = vmatpush1.msra.mxu0 0.0
    %1119 = vmatprep.subr.mxu0 0.0
    %1120 = vmatpush1.msra.mxu0 0.0
    %1121 = vmatprep.subr.mxu0 0.0
    %1122 = vmatpush1.msra.mxu0 0.0
    %1123 = vmatprep.subr.mxu0 0.0
    %1124 = vmatpush1.msra.mxu0 0.0
    %1125 = vmatprep.subr.mxu0 0.0
    %1126 = vmatpush1.msra.mxu0 0.0
    %1127 = vmatprep.subr.mxu0 0.0
    %1128 = vmatpush1.msra.mxu0 0.0
    %1129 = vmatprep.subr.mxu0 0.0
    %1130 = vmatpush1.msra.mxu0 0.0
    %1131 = vmatprep.subr.mxu0 0.0
    %1132 = vmatpush1.msra.mxu0 0.0
    %1133 = vmatprep.subr.mxu0 0.0
    %1134 = vmatpush1.msra.mxu0 0.0
    %1135 = vmatprep.subr.mxu0 0.0
    %1136 = vmatpush1.msra.mxu0 0.0
    %1137 = vmatprep.mubr.f32.mxu0 0.0
    %1138 = vmatmul.mubr.f32.gmra.mrb[0].mxu0 %v47
    %v1139 = vpop.f32.mrb[0].mxu0
    %v1140 = vadd.f32 %v236, %v1139
    %v1141 = vpop.f32.mrb[0].mxu0
    %1142 = vmatprep.mubr.f32.mxu0 0.0
    %1143 = vmatmul.mubr.f32.gmra.mrb[0].mxu0 %v48
    %v1144 = vpop.f32.mrb[0].mxu0
    %v1145 = vadd.f32 %v236, %v1144
    %v1146 = vpop.f32.mrb[0].mxu0
    %1147 = vmatprep.mubr.f32.mxu0 0.0
    %1148 = vmatmul.mubr.f32.gmra.mrb[0].mxu0 %v49
    %v1149 = vpop.f32.mrb[0].mxu0
    %v1150 = vadd.f32 %v236, %v1149
    %v1151 = vpop.f32.mrb[0].mxu0
    %1152 = vmatprep.mubr.f32.mxu0 0.0
    %1153 = vmatmul.mubr.f32.gmra.mrb[0].mxu0 %v50
    %v1154 = vpop.f32.mrb[0].mxu0
    %v1155 = vadd.f32 %v236, %v1154
    %v1156 = vpop.f32.mrb[0].mxu0
    %1157 = vmatprep.mubr.f32.mxu0 0.0
    %1158 = vmatmul.mubr.f32.gmra.mrb[0].mxu0 %v51
    %v1159 = vpop.f32.mrb[0].mxu0
    %v1160 = vadd.f32 %v236, %v1159
    %v1161 = vpop.f32.mrb[0].mxu0
    %1162 = vmatprep.mubr.f32.mxu0 0.0
    %1163 = vmatmul.mubr.f32.gmra.mrb[0].mxu0 %v52
    %v1164 = vpop.f32.mrb[0].mxu0
    %v1165 = vadd.f32 %v236, %v1164
    %v1166 = vpop.f32.mrb[0].mxu0
    %1167 = vmatprep.mubr.f32.mxu0 0.0
    %1168 = vmatmul.mubr.f32.gmra.mrb[0].mxu0 %v53
    %v1169 = vpop.f32.mrb[0].mxu0
    %v1170 = vadd.f32 %v236, %v1169
    %v1171 = vpop.f32.mrb[0].mxu0
    %1172 = vmatprep.mubr.f32.mxu0 0.0
    %1173 = vmatmul.mubr.f32.gmra.mrb[0].mxu0 %v54
    %v1174 = vpop.f32.mrb[0].mxu0
    %v1175 = vadd.f32 %v236, %v1174
    %v1176 = vpop.f32.mrb[0].mxu0
    %1177 = vmatprep.mubr.f32.mxu0 0.0
    %1178 = vmatmul.mubr.f32.gmra.mrb[0].mxu0 %v55
    %v1179 = vpop.f32.mrb[0].mxu0
    %v1180 = vadd.f32 %v236, %v1179
    %v1181 = vpop.f32.mrb[0].mxu0
    %1182 = vmatprep.mubr.f32.mxu0 0.0
    %1183 = vmatmul.mubr.f32.gmra.mrb[0].mxu0 %v56
    %v1184 = vpop.f32.mrb[0].mxu0
    %v1185 = vadd.f32 %v236, %v1184
    %v1186 = vpop.f32.mrb[0].mxu0
    %1187 = vmatprep.mubr.f32.mxu0 0.0
    %1188 = vmatmul.mubr.f32.gmra.mrb[0].mxu0 %v57
    %v1189 = vpop.f32.mrb[0].mxu0
    %v1190 = vadd.f32 %v236, %v1189
    %v1191 = vpop.f32.mrb[0].mxu0
    %1192 = vmatprep.mubr.f32.mxu0 0.0
    %1193 = vmatmul.mubr.f32.gmra.mrb[0].mxu0 %v58
    %v1194 = vpop.f32.mrb[0].mxu0
    %v1195 = vadd.f32 %v236, %v1194
    %v1196 = vpop.f32.mrb[0].mxu0
    %1197 = vmatprep.mubr.f32.mxu0 0.0
    %1198 = vmatmul.mubr.f32.gmra.mrb[0].mxu0 %v59
    %v1199 = vpop.f32.mrb[0].mxu0
    %v1200 = vadd.f32 %v236, %v1199
    %v1201 = vpop.f32.mrb[0].mxu0
    %1202 = vmatprep.mubr.f32.mxu0 0.0
    %1203 = vmatmul.mubr.f32.gmra.mrb[0].mxu0 %v60
    %v1204 = vpop.f32.mrb[0].mxu0
    %v1205 = vadd.f32 %v236, %v1204
    %v1206 = vpop.f32.mrb[0].mxu0
    %1207 = vmatprep.mubr.f32.mxu0 0.0
    %1208 = vmatmul.mubr.f32.gmra.mrb[0].mxu0 %v61
    %v1209 = vpop.f32.mrb[0].mxu0
    %v1210 = vadd.f32 %v236, %v1209
    %v1211 = vpop.f32.mrb[0].mxu0
    %1212 = vmatprep.mubr.f32.mxu0 0.0
    %1213 = vmatmul.mubr.f32.gmra.mrb[0].mxu0 %v62
    %v1214 = vpop.f32.mrb[0].mxu0
    %v1215 = vadd.f32 %v236, %v1214
    %v1216 = vpop.f32.mrb[0].mxu0
    %1217 = vmatprep.mubr.f32.mxu0 0.0
    %1218 = vmatmul.mubr.f32.gmra.mrb[0].mxu0 %v63
    %v1219 = vpop.f32.mrb[0].mxu0
    %v1220 = vadd.f32 %v236, %v1219
    %v1221 = vpop.f32.mrb[0].mxu0
    %1222 = vmatprep.mubr.f32.mxu0 0.0
    %1223 = vmatmul.mubr.f32.gmra.mrb[0].mxu0 %v64
    %v1224 = vpop.f32.mrb[0].mxu0
    %v1225 = vadd.f32 %v236, %v1224
    %v1226 = vpop.f32.mrb[0].mxu0
    %1227 = vmatprep.mubr.f32.mxu0 0.0
    %1228 = vmatmul.mubr.f32.gmra.mrb[0].mxu0 %v65
    %v1229 = vpop.f32.mrb[0].mxu0
    %v1230 = vadd.f32 %v236, %v1229
    %v1231 = vpop.f32.mrb[0].mxu0
    %1232 = vmatprep.mubr.f32.mxu0 0.0
    %1233 = vmatmul.mubr.f32.gmra.mrb[0].mxu0 %v66
    %v1234 = vpop.f32.mrb[0].mxu0
    %v1235 = vadd.f32 %v236, %v1234
    %v1236 = vpop.f32.mrb[0].mxu0
    %1237 = vmatprep.mubr.f32.mxu0 0.0
    %1238 = vmatmul.mubr.f32.gmra.mrb[0].mxu0 %v67
    %v1239 = vpop.f32.mrb[0].mxu0
    %v1240 = vadd.f32 %v236, %v1239
    %v1241 = vpop.f32.mrb[0].mxu0
    %1242 = vmatprep.mubr.f32.mxu0 0.0
    %1243 = vmatmul.mubr.f32.gmra.mrb[0].mxu0 %v68
    %v1244 = vpop.f32.mrb[0].mxu0
    %v1245 = vadd.f32 %v236, %v1244
    %v1246 = vpop.f32.mrb[0].mxu0
    %1247 = vmatprep.mubr.f32.mxu0 0.0
    %1248 = vmatmul.mubr.f32.gmra.mrb[0].mxu0 %v69
    %v1249 = vpop.f32.mrb[0].mxu0
    %v1250 = vadd.f32 %v236, %v1249
    %v1251 = vpop.f32.mrb[0].mxu0
    %1252 = vmatprep.mubr.f32.mxu0 0.0
    %1253 = vmatmul.mubr.f32.gmra.mrb[0].mxu0 %v70
    %v1254 = vpop.f32.mrb[0].mxu0
    %v1255 = vadd.f32 %v236, %v1254
    %v1256 = vpop.f32.mrb[0].mxu0
    %1257 = vmatprep.mubr.f32.mxu0 0.0
    %1258 = vmatmul.mubr.f32.gmra.mrb[0].mxu0 %v71
    %v1259 = vpop.f32.mrb[0].mxu0
    %v1260 = vadd.f32 %v236, %v1259
    %v1261 = vpop.f32.mrb[0].mxu0
    %1262 = vmatprep.mubr.f32.mxu0 0.0
    %1263 = vmatmul.mubr.f32.gmra.mrb[0].mxu0 %v72
    %v1264 = vpop.f32.mrb[0].mxu0
    %v1265 = vadd.f32 %v236, %v1264
    %v1266 = vpop.f32.mrb[0].mxu0
    %1267 = vmatprep.mubr.f32.mxu0 0.0
    %1268 = vmatmul.mubr.f32.gmra.mrb[0].mxu0 %v73
    %v1269 = vpop.f32.mrb[0].mxu0
    %v1270 = vadd.f32 %v236, %v1269
    %v1271 = vpop.f32.mrb[0].mxu0
    %1272 = vmatprep.mubr.f32.mxu0 0.0
    %1273 = vmatmul.mubr.f32.gmra.mrb[0].mxu0 %v74
    %v1274 = vpop.f32.mrb[0].mxu0
    %v1275 = vadd.f32 %v236, %v1274
    %v1276 = vpop.f32.mrb[0].mxu0
    %1277 = vmatprep.mubr.f32.mxu0 0.0
    %1278 = vmatmul.mubr.f32.gmra.mrb[0].mxu0 %v75
    %v1279 = vpop.f32.mrb[0].mxu0
    %v1280 = vadd.f32 %v236, %v1279
    %v1281 = vpop.f32.mrb[0].mxu0
    %1282 = vmatprep.mubr.f32.mxu0 0.0
    %1283 = vmatmul.mubr.f32.gmra.mrb[0].mxu0 %v76
    %v1284 = vpop.f32.mrb[0].mxu0
    %v1285 = vadd.f32 %v236, %v1284
    %v1286 = vpop.f32.mrb[0].mxu0
    %1287 = vmatprep.mubr.f32.mxu0 0.0
    %1288 = vmatmul.mubr.f32.gmra.mrb[0].mxu0 %v77
    %v1289 = vpop.f32.mrb[0].mxu0
    %v1290 = vadd.f32 %v236, %v1289
    %v1291 = vpop.f32.mrb[0].mxu0
    %1292 = vmatprep.mubr.f32.mxu0 0.0
    %1293 = vmatmul.mubr.f32.gmra.mrb[0].mxu0 %v78
    %v1294 = vpop.f32.mrb[0].mxu0
    %v1295 = vadd.f32 %v236, %v1294
    %v1296 = vpop.f32.mrb[0].mxu0
    %1297 = vmatprep.mubr.f32.mxu0 0.0
    %1298 = vmatmul.mubr.f32.gmra.mrb[0].mxu0 %v79
    %v1299 = vpop.f32.mrb[0].mxu0
    %v1300 = vadd.f32 %v236, %v1299
    %v1301 = vpop.f32.mrb[0].mxu0
    %1302 = vmatprep.mubr.f32.mxu0 0.0
    %1303 = vmatmul.mubr.f32.gmra.mrb[0].mxu0 %v80
    %v1304 = vpop.f32.mrb[0].mxu0
    %v1305 = vadd.f32 %v236, %v1304
    %v1306 = vpop.f32.mrb[0].mxu0
    %1307 = vmatprep.mubr.f32.mxu0 0.0
    %1308 = vmatmul.mubr.f32.gmra.mrb[0].mxu0 %v81
    %v1309 = vpop.f32.mrb[0].mxu0
    %v1310 = vadd.f32 %v236, %v1309
    %v1311 = vpop.f32.mrb[0].mxu0
    %1312 = vmatprep.mubr.f32.mxu0 0.0
    %1313 = vmatmul.mubr.f32.gmra.mrb[0].mxu0 %v82
    %v1314 = vpop.f32.mrb[0].mxu0
    %v1315 = vadd.f32 %v236, %v1314
    %v1316 = vpop.f32.mrb[0].mxu0
    %1317 = vmatprep.mubr.f32.mxu0 0.0
    %1318 = vmatmul.mubr.f32.gmra.mrb[0].mxu0 %v83
    %v1319 = vpop.f32.mrb[0].mxu0
    %v1320 = vadd.f32 %v236, %v1319
    %v1321 = vpop.f32.mrb[0].mxu0
    %1322 = vmatprep.mubr.f32.mxu0 0.0
    %1323 = vmatmul.mubr.f32.gmra.mrb[0].mxu0 %v84
    %v1324 = vpop.f32.mrb[0].mxu0
    %v1325 = vadd.f32 %v236, %v1324
    %v1326 = vpop.f32.mrb[0].mxu0
    %1327 = vmatprep.mubr.f32.mxu0 0.0
    %1328 = vmatmul.mubr.f32.gmra.mrb[0].mxu0 %v85
    %v1329 = vpop.f32.mrb[0].mxu0
    %v1330 = vadd.f32 %v236, %v1329
    %v1331 = vpop.f32.mrb[0].mxu0
    %1332 = vmatprep.mubr.f32.mxu0 0.0
    %1333 = vmatmul.mubr.f32.gmra.mrb[0].mxu0 %v86
    %v1334 = vpop.f32.mrb[0].mxu0
    %v1335 = vadd.f32 %v236, %v1334
    %v1336 = vpop.f32.mrb[0].mxu0
    %1337 = vmatprep.mubr.f32.mxu0 0.0
    %1338 = vmatmul.mubr.f32.gmra.mrb[0].mxu0 %v87
    %v1339 = vpop.f32.mrb[0].mxu0
    %v1340 = vadd.f32 %v236, %v1339
    %v1341 = vpop.f32.mrb[0].mxu0
    %1342 = vmatprep.mubr.f32.mxu0 0.0
    %1343 = vmatmul.mubr.f32.gmra.mrb[0].mxu0 %v88
    %v1344 = vpop.f32.mrb[0].mxu0
    %v1345 = vadd.f32 %v236, %v1344
    %v1346 = vpop.f32.mrb[0].mxu0
    %1347 = vmatprep.mubr.f32.mxu0 0.0
    %1348 = vmatmul.mubr.f32.gmra.mrb[0].mxu0 %v89
    %v1349 = vpop.f32.mrb[0].mxu0
    %v1350 = vadd.f32 %v236, %v1349
    %v1351 = vpop.f32.mrb[0].mxu0
    %1352 = vmatprep.mubr.f32.mxu0 0.0
    %1353 = vmatmul.mubr.f32.gmra.mrb[0].mxu0 %v90
    %v1354 = vpop.f32.mrb[0].mxu0
    %v1355 = vadd.f32 %v236, %v1354
    %v1356 = vpop.f32.mrb[0].mxu0
    %1357 = vmatprep.mubr.f32.mxu0 0.0
    %1358 = vmatmul.mubr.f32.gmra.mrb[0].mxu0 %v91
    %v1359 = vpop.f32.mrb[0].mxu0
    %v1360 = vadd.f32 %v236, %v1359
    %v1361 = vpop.f32.mrb[0].mxu0
    %1362 = vmatprep.mubr.f32.mxu0 0.0
    %1363 = vmatmul.mubr.f32.gmra.mrb[0].mxu0 %v92
    %v1364 = vpop.f32.mrb[0].mxu0
    %v1365 = vadd.f32 %v236, %v1364
    %v1366 = vpop.f32.mrb[0].mxu0
    %1367 = vmatprep.mubr.f32.mxu0 0.0
    %1368 = vmatmul.mubr.f32.gmra.mrb[0].mxu0 %v93
    %v1369 = vpop.f32.mrb[0].mxu0
    %v1370 = vadd.f32 %v236, %v1369
    %v1371 = vpop.f32.mrb[0].mxu0
    %1372 = vmatprep.mubr.f32.mxu0 0.0
    %1373 = vmatmul.mubr.f32.gmra.mrb[0].mxu0 %v94
    %v1374 = vpop.f32.mrb[0].mxu0
    %v1375 = vadd.f32 %v236, %v1374
    %v1376 = vpop.f32.mrb[0].mxu0
    %1377 = vmatprep.mubr.f32.mxu0 0.0
    %1378 = vmatmul.mubr.f32.gmra.mrb[0].mxu0 %v95
    %v1379 = vpop.f32.mrb[0].mxu0
    %v1380 = vadd.f32 %v236, %v1379
    %v1381 = vpop.f32.mrb[0].mxu0
    %1382 = vmatprep.mubr.f32.mxu0 0.0
    %1383 = vmatmul.mubr.f32.gmra.mrb[0].mxu0 %v96
    %v1384 = vpop.f32.mrb[0].mxu0
    %v1385 = vadd.f32 %v236, %v1384
    %v1386 = vpop.f32.mrb[0].mxu0
    %1387 = vmatprep.mubr.f32.mxu0 0.0
    %1388 = vmatmul.mubr.f32.gmra.mrb[0].mxu0 %v97
    %v1389 = vpop.f32.mrb[0].mxu0
    %v1390 = vadd.f32 %v236, %v1389
    %v1391 = vpop.f32.mrb[0].mxu0
    %1392 = vmatprep.mubr.f32.mxu0 0.0
    %1393 = vmatmul.mubr.f32.gmra.mrb[0].mxu0 %v98
    %v1394 = vpop.f32.mrb[0].mxu0
    %v1395 = vadd.f32 %v236, %v1394
    %v1396 = vpop.f32.mrb[0].mxu0
    %1397 = vmatprep.mubr.f32.mxu0 0.0
    %1398 = vmatmul.mubr.f32.gmra.mrb[0].mxu0 %v99
    %v1399 = vpop.f32.mrb[0].mxu0
    %v1400 = vadd.f32 %v236, %v1399
    %v1401 = vpop.f32.mrb[0].mxu0
    %1402 = vmatprep.mubr.f32.mxu0 0.0
    %1403 = vmatmul.mubr.f32.gmra.mrb[0].mxu0 %v100
    %v1404 = vpop.f32.mrb[0].mxu0
    %v1405 = vadd.f32 %v236, %v1404
    %v1406 = vpop.f32.mrb[0].mxu0
    %1407 = vmatprep.mubr.f32.mxu0 0.0
    %1408 = vmatmul.mubr.f32.gmra.mrb[0].mxu0 %v101
    %v1409 = vpop.f32.mrb[0].mxu0
    %v1410 = vadd.f32 %v236, %v1409
    %v1411 = vpop.f32.mrb[0].mxu0
    %1412 = vmatprep.mubr.f32.mxu0 0.0
    %1413 = vmatmul.mubr.f32.gmra.mrb[0].mxu0 %v102
    %v1414 = vpop.f32.mrb[0].mxu0
    %v1415 = vadd.f32 %v236, %v1414
    %v1416 = vpop.f32.mrb[0].mxu0
    %1417 = vmatprep.mubr.f32.mxu0 0.0
    %1418 = vmatmul.mubr.f32.gmra.mrb[0].mxu0 %v103
    %v1419 = vpop.f32.mrb[0].mxu0
    %v1420 = vadd.f32 %v236, %v1419
    %v1421 = vpop.f32.mrb[0].mxu0
    %1422 = vmatprep.mubr.f32.mxu0 0.0
    %1423 = vmatmul.mubr.f32.gmra.mrb[0].mxu0 %v104
    %v1424 = vpop.f32.mrb[0].mxu0
    %v1425 = vadd.f32 %v236, %v1424
    %v1426 = vpop.f32.mrb[0].mxu0
    %1427 = vmatprep.mubr.f32.mxu0 0.0
    %1428 = vmatmul.mubr.f32.gmra.mrb[0].mxu0 %v105
    %v1429 = vpop.f32.mrb[0].mxu0
    %v1430 = vadd.f32 %v236, %v1429
    %v1431 = vpop.f32.mrb[0].mxu0
    %1432 = vmatprep.mubr.f32.mxu0 0.0
    %1433 = vmatmul.mubr.f32.gmra.mrb[0].mxu0 %v106
    %v1434 = vpop.f32.mrb[0].mxu0
    %v1435 = vadd.f32 %v236, %v1434
    %v1436 = vpop.f32.mrb[0].mxu0
    %1437 = vmatprep.mubr.f32.mxu0 0.0
    %1438 = vmatmul.mubr.f32.gmra.mrb[0].mxu0 %v107
    %v1439 = vpop.f32.mrb[0].mxu0
    %v1440 = vadd.f32 %v236, %v1439
    %v1441 = vpop.f32.mrb[0].mxu0
    %1442 = vmatprep.mubr.f32.mxu0 0.0
    %1443 = vmatmul.mubr.f32.gmra.mrb[0].mxu0 %v108
    %v1444 = vpop.f32.mrb[0].mxu0
    %v1445 = vadd.f32 %v236, %v1444
    %v1446 = vpop.f32.mrb[0].mxu0
    %1447 = vmatprep.mubr.f32.mxu0 0.0
    %1448 = vmatmul.mubr.f32.gmra.mrb[0].mxu0 %v109
    %v1449 = vpop.f32.mrb[0].mxu0
    %v1450 = vadd.f32 %v236, %v1449
    %v1451 = vpop.f32.mrb[0].mxu0
    %1452 = vmatprep.mubr.f32.mxu0 0.0
    %1453 = vmatmul.mubr.f32.gmra.mrb[0].mxu0 %v110
    %v1454 = vpop.f32.mrb[0].mxu0
    %v1455 = vadd.f32 %v236, %v1454
    %v1456 = vpop.f32.mrb[0].mxu0
    %1457 = vmatprep.mubr.f32.mxu0 0.0
    %1458 = vmatmul.mubr.f32.gmra.mrb[0].mxu0 %v111
    %v1459 = vpop.f32.mrb[0].mxu0
    %v1460 = vadd.f32 %v236, %v1459
    %v1461 = vpop.f32.mrb[0].mxu0
    %1462 = vmatprep.mubr.f32.mxu0 0.0
    %1463 = vmatmul.mubr.f32.gmra.mrb[0].mxu0 %v112
    %v1464 = vpop.f32.mrb[0].mxu0
    %v1465 = vadd.f32 %v236, %v1464
    %v1466 = vpop.f32.mrb[0].mxu0
    %1467 = vmatprep.mubr.f32.mxu0 0.0
    %1468 = vmatmul.mubr.f32.gmra.mrb[0].mxu0 %v113
    %v1469 = vpop.f32.mrb[0].mxu0
    %v1470 = vadd.f32 %v236, %v1469
    %v1471 = vpop.f32.mrb[0].mxu0
    %1472 = vmatprep.mubr.f32.mxu0 0.0
    %1473 = vmatmul.mubr.f32.gmra.mrb[0].mxu0 %v114
    %v1474 = vpop.f32.mrb[0].mxu0
    %v1475 = vadd.f32 %v236, %v1474
    %v1476 = vpop.f32.mrb[0].mxu0
    %1477 = vmatprep.mubr.f32.mxu0 0.0
    %1478 = vmatmul.mubr.f32.gmra.mrb[0].mxu0 %v115
    %v1479 = vpop.f32.mrb[0].mxu0
    %v1480 = vadd.f32 %v236, %v1479
    %v1481 = vpop.f32.mrb[0].mxu0
    %1482 = vmatprep.mubr.f32.mxu0 0.0
    %1483 = vmatmul.mubr.f32.gmra.mrb[0].mxu0 %v116
    %v1484 = vpop.f32.mrb[0].mxu0
    %v1485 = vadd.f32 %v236, %v1484
    %v1486 = vpop.f32.mrb[0].mxu0
    %1487 = vmatprep.mubr.f32.mxu0 0.0
    %1488 = vmatmul.mubr.f32.gmra.mrb[0].mxu0 %v117
    %v1489 = vpop.f32.mrb[0].mxu0
    %v1490 = vadd.f32 %v236, %v1489
    %v1491 = vpop.f32.mrb[0].mxu0
    %1492 = vmatprep.mubr.f32.mxu0 0.0
    %1493 = vmatmul.mubr.f32.gmra.mrb[0].mxu0 %v118
    %v1494 = vpop.f32.mrb[0].mxu0
    %v1495 = vadd.f32 %v236, %v1494
    %v1496 = vpop.f32.mrb[0].mxu0
    %1497 = vmatprep.mubr.f32.mxu0 0.0
    %1498 = vmatmul.mubr.f32.gmra.mrb[0].mxu0 %v119
    %v1499 = vpop.f32.mrb[0].mxu0
    %v1500 = vadd.f32 %v236, %v1499
    %v1501 = vpop.f32.mrb[0].mxu0
    %1502 = vmatprep.mubr.f32.mxu0 0.0
    %1503 = vmatmul.mubr.f32.gmra.mrb[0].mxu0 %v120
    %v1504 = vpop.f32.mrb[0].mxu0
    %v1505 = vadd.f32 %v236, %v1504
    %v1506 = vpop.f32.mrb[0].mxu0
    %1507 = vmatprep.mubr.f32.mxu0 0.0
    %1508 = vmatmul.mubr.f32.gmra.mrb[0].mxu0 %v121
    %v1509 = vpop.f32.mrb[0].mxu0
    %v1510 = vadd.f32 %v236, %v1509
    %v1511 = vpop.f32.mrb[0].mxu0
    %1512 = vmatprep.mubr.f32.mxu0 0.0
    %1513 = vmatmul.mubr.f32.gmra.mrb[0].mxu0 %v122
    %v1514 = vpop.f32.mrb[0].mxu0
    %v1515 = vadd.f32 %v236, %v1514
    %v1516 = vpop.f32.mrb[0].mxu0
    %1517 = vmatprep.mubr.f32.mxu0 0.0
    %1518 = vmatmul.mubr.f32.gmra.mrb[0].mxu0 %v123
    %v1519 = vpop.f32.mrb[0].mxu0
    %v1520 = vadd.f32 %v236, %v1519
    %v1521 = vpop.f32.mrb[0].mxu0
    %1522 = vmatprep.mubr.f32.mxu0 0.0
    %1523 = vmatmul.mubr.f32.gmra.mrb[0].mxu0 %v124
    %v1524 = vpop.f32.mrb[0].mxu0
    %v1525 = vadd.f32 %v236, %v1524
    %v1526 = vpop.f32.mrb[0].mxu0
    %1527 = vmatprep.mubr.f32.mxu0 0.0
    %1528 = vmatmul.mubr.f32.gmra.mrb[0].mxu0 %v125
    %v1529 = vpop.f32.mrb[0].mxu0
    %v1530 = vadd.f32 %v236, %v1529
    %v1531 = vpop.f32.mrb[0].mxu0
    %1532 = vmatprep.mubr.f32.mxu0 0.0
    %1533 = vmatmul.mubr.f32.gmra.mrb[0].mxu0 %v126
    %v1534 = vpop.f32.mrb[0].mxu0
    %v1535 = vadd.f32 %v236, %v1534
    %v1536 = vpop.f32.mrb[0].mxu0
    %1537 = vmatprep.mubr.f32.mxu0 0.0
    %1538 = vmatmul.mubr.f32.gmra.mrb[0].mxu0 %v127
    %v1539 = vpop.f32.mrb[0].mxu0
    %v1540 = vadd.f32 %v236, %v1539
    %v1541 = vpop.f32.mrb[0].mxu0
    %1542 = vmatprep.mubr.f32.mxu0 0.0
    %1543 = vmatmul.mubr.f32.gmra.mrb[0].mxu0 %v128
    %v1544 = vpop.f32.mrb[0].mxu0
    %v1545 = vadd.f32 %v236, %v1544
    %v1546 = vpop.f32.mrb[0].mxu0
    %1547 = vmatprep.mubr.f32.mxu0 0.0
    %1548 = vmatmul.mubr.f32.gmra.mrb[0].mxu0 %v129
    %v1549 = vpop.f32.mrb[0].mxu0
    %v1550 = vadd.f32 %v236, %v1549
    %v1551 = vpop.f32.mrb[0].mxu0
    %1552 = vmatprep.mubr.f32.mxu0 0.0
    %1553 = vmatmul.mubr.f32.gmra.mrb[0].mxu0 %v130
    %v1554 = vpop.f32.mrb[0].mxu0
    %v1555 = vadd.f32 %v236, %v1554
    %v1556 = vpop.f32.mrb[0].mxu0
    %1557 = vmatprep.mubr.f32.mxu0 0.0
    %1558 = vmatmul.mubr.f32.gmra.mrb[0].mxu0 %v131
    %v1559 = vpop.f32.mrb[0].mxu0
    %v1560 = vadd.f32 %v236, %v1559
    %v1561 = vpop.f32.mrb[0].mxu0
    %1562 = vmatprep.mubr.f32.mxu0 0.0
    %1563 = vmatmul.mubr.f32.gmra.mrb[0].mxu0 %v132
    %v1564 = vpop.f32.mrb[0].mxu0
    %v1565 = vadd.f32 %v236, %v1564
    %v1566 = vpop.f32.mrb[0].mxu0
    %1567 = vmatprep.mubr.f32.mxu0 0.0
    %1568 = vmatmul.mubr.f32.gmra.mrb[0].mxu0 %v133
    %v1569 = vpop.f32.mrb[0].mxu0
    %v1570 = vadd.f32 %v236, %v1569
    %v1571 = vpop.f32.mrb[0].mxu0
    %1572 = vmatprep.mubr.f32.mxu0 0.0
    %1573 = vmatmul.mubr.f32.gmra.mrb[0].mxu0 %v134
    %v1574 = vpop.f32.mrb[0].mxu0
    %v1575 = vadd.f32 %v236, %v1574
    %v1576 = vpop.f32.mrb[0].mxu0
    %1577 = vmatprep.mubr.f32.mxu0 0.0
    %1578 = vmatmul.mubr.f32.gmra.mrb[0].mxu0 %v135
    %v1579 = vpop.f32.mrb[0].mxu0
    %v1580 = vadd.f32 %v236, %v1579
    %v1581 = vpop.f32.mrb[0].mxu0
    %1582 = vmatprep.mubr.f32.mxu0 0.0
    %1583 = vmatmul.mubr.f32.gmra.mrb[0].mxu0 %v136
    %v1584 = vpop.f32.mrb[0].mxu0
    %v1585 = vadd.f32 %v236, %v1584
    %v1586 = vpop.f32.mrb[0].mxu0
    %1587 = vmatprep.mubr.f32.mxu0 0.0
    %1588 = vmatmul.mubr.f32.gmra.mrb[0].mxu0 %v137
    %v1589 = vpop.f32.mrb[0].mxu0
    %v1590 = vadd.f32 %v236, %v1589
    %v1591 = vpop.f32.mrb[0].mxu0
    %1592 = vmatprep.mubr.f32.mxu0 0.0
    %1593 = vmatmul.mubr.f32.gmra.mrb[0].mxu0 %v138
    %v1594 = vpop.f32.mrb[0].mxu0
    %v1595 = vadd.f32 %v236, %v1594
    %v1596 = vpop.f32.mrb[0].mxu0
    %1597 = vmatprep.mubr.f32.mxu0 0.0
    %1598 = vmatmul.mubr.f32.gmra.mrb[0].mxu0 %v139
    %v1599 = vpop.f32.mrb[0].mxu0
    %v1600 = vadd.f32 %v236, %v1599
    %v1601 = vpop.f32.mrb[0].mxu0
    %1602 = vmatprep.mubr.f32.mxu0 0.0
    %1603 = vmatmul.mubr.f32.gmra.mrb[0].mxu0 %v140
    %v1604 = vpop.f32.mrb[0].mxu0
    %v1605 = vadd.f32 %v236, %v1604
    %v1606 = vpop.f32.mrb[0].mxu0
    %1607 = vmatprep.mubr.f32.mxu0 0.0
    %1608 = vmatmul.mubr.f32.gmra.mrb[0].mxu0 %v141
    %v1609 = vpop.f32.mrb[0].mxu0
    %v1610 = vadd.f32 %v236, %v1609
    %v1611 = vpop.f32.mrb[0].mxu0
    %1612 = vmatprep.mubr.f32.mxu0 0.0
    %1613 = vmatmul.mubr.f32.gmra.mrb[0].mxu0 %v142
    %v1614 = vpop.f32.mrb[0].mxu0
    %v1615 = vadd.f32 %v236, %v1614
    %v1616 = vpop.f32.mrb[0].mxu0
    %1617 = vmatprep.mubr.f32.mxu0 0.0
    %1618 = vmatmul.mubr.f32.gmra.mrb[0].mxu0 %v143
    %v1619 = vpop.f32.mrb[0].mxu0
    %v1620 = vadd.f32 %v236, %v1619
    %v1621 = vpop.f32.mrb[0].mxu0
    %1622 = vmatprep.mubr.f32.mxu0 0.0
    %1623 = vmatmul.mubr.f32.gmra.mrb[0].mxu0 %v144
    %v1624 = vpop.f32.mrb[0].mxu0
    %v1625 = vadd.f32 %v236, %v1624
    %v1626 = vpop.f32.mrb[0].mxu0
    %1627 = vmatprep.mubr.f32.mxu0 0.0
    %1628 = vmatmul.mubr.f32.gmra.mrb[0].mxu0 %v145
    %v1629 = vpop.f32.mrb[0].mxu0
    %v1630 = vadd.f32 %v236, %v1629
    %v1631 = vpop.f32.mrb[0].mxu0
    %1632 = vmatprep.mubr.f32.mxu0 0.0
    %1633 = vmatmul.mubr.f32.gmra.mrb[0].mxu0 %v146
    %v1634 = vpop.f32.mrb[0].mxu0
    %v1635 = vadd.f32 %v236, %v1634
    %v1636 = vpop.f32.mrb[0].mxu0
    %1637 = vmatprep.mubr.f32.mxu0 0.0
    %1638 = vmatmul.mubr.f32.gmra.mrb[0].mxu0 %v147
    %v1639 = vpop.f32.mrb[0].mxu0
    %v1640 = vadd.f32 %v236, %v1639
    %v1641 = vpop.f32.mrb[0].mxu0
    %1642 = vmatprep.mubr.f32.mxu0 0.0
    %1643 = vmatmul.mubr.f32.gmra.mrb[0].mxu0 %v148
    %v1644 = vpop.f32.mrb[0].mxu0
    %v1645 = vadd.f32 %v236, %v1644
    %v1646 = vpop.f32.mrb[0].mxu0
    %1647 = vmatprep.mubr.f32.mxu0 0.0
    %1648 = vmatmul.mubr.f32.gmra.mrb[0].mxu0 %v149
    %v1649 = vpop.f32.mrb[0].mxu0
    %v1650 = vadd.f32 %v236, %v1649
    %v1651 = vpop.f32.mrb[0].mxu0
    %1652 = vmatprep.mubr.f32.mxu0 0.0
    %1653 = vmatmul.mubr.f32.gmra.mrb[0].mxu0 %v150
    %v1654 = vpop.f32.mrb[0].mxu0
    %v1655 = vadd.f32 %v236, %v1654
    %v1656 = vpop.f32.mrb[0].mxu0
    %1657 = vmatprep.mubr.f32.mxu0 0.0
    %1658 = vmatmul.mubr.f32.gmra.mrb[0].mxu0 %v151
    %v1659 = vpop.f32.mrb[0].mxu0
    %v1660 = vadd.f32 %v236, %v1659
    %v1661 = vpop.f32.mrb[0].mxu0
    %1662 = vmatprep.mubr.f32.mxu0 0.0
    %1663 = vmatmul.mubr.f32.gmra.mrb[0].mxu0 %v152
    %v1664 = vpop.f32.mrb[0].mxu0
    %v1665 = vadd.f32 %v236, %v1664
    %v1666 = vpop.f32.mrb[0].mxu0
    %1667 = vmatprep.mubr.f32.mxu0 0.0
    %1668 = vmatmul.mubr.f32.gmra.mrb[0].mxu0 %v153
    %v1669 = vpop.f32.mrb[0].mxu0
    %v1670 = vadd.f32 %v236, %v1669
    %v1671 = vpop.f32.mrb[0].mxu0
    %1672 = vmatprep.mubr.f32.mxu0 0.0
    %1673 = vmatmul.mubr.f32.gmra.mrb[0].mxu0 %v154
    %v1674 = vpop.f32.mrb[0].mxu0
    %v1675 = vadd.f32 %v236, %v1674
    %v1676 = vpop.f32.mrb[0].mxu0
    %1677 = vmatprep.mubr.f32.mxu0 0.0
    %1678 = vmatmul.mubr.f32.gmra.mrb[0].mxu0 %v155
    %v1679 = vpop.f32.mrb[0].mxu0
    %v1680 = vadd.f32 %v236, %v1679
    %v1681 = vpop.f32.mrb[0].mxu0
    %1682 = vmatprep.mubr.f32.mxu0 0.0
    %1683 = vmatmul.mubr.f32.gmra.mrb[0].mxu0 %v156
    %v1684 = vpop.f32.mrb[0].mxu0
    %v1685 = vadd.f32 %v236, %v1684
    %v1686 = vpop.f32.mrb[0].mxu0
    %1687 = vmatprep.mubr.f32.mxu0 0.0
    %1688 = vmatmul.mubr.f32.gmra.mrb[0].mxu0 %v157
    %v1689 = vpop.f32.mrb[0].mxu0
    %v1690 = vadd.f32 %v236, %v1689
    %v1691 = vpop.f32.mrb[0].mxu0
    %1692 = vmatprep.mubr.f32.mxu0 0.0
    %1693 = vmatmul.mubr.f32.gmra.mrb[0].mxu0 %v158
    %v1694 = vpop.f32.mrb[0].mxu0
    %v1695 = vadd.f32 %v236, %v1694
    %v1696 = vpop.f32.mrb[0].mxu0
    %1697 = vmatprep.mubr.f32.mxu0 0.0
    %1698 = vmatmul.mubr.f32.gmra.mrb[0].mxu0 %v159
    %v1699 = vpop.f32.mrb[0].mxu0
    %v1700 = vadd.f32 %v236, %v1699
    %v1701 = vpop.f32.mrb[0].mxu0
    %1702 = vmatprep.mubr.f32.mxu0 0.0
    %1703 = vmatmul.mubr.f32.gmra.mrb[0].mxu0 %v160
    %v1704 = vpop.f32.mrb[0].mxu0
    %v1705 = vadd.f32 %v236, %v1704
    %v1706 = vpop.f32.mrb[0].mxu0
    %1707 = vmatprep.mubr.f32.mxu0 0.0
    %1708 = vmatmul.mubr.f32.gmra.mrb[0].mxu0 %v161
    %v1709 = vpop.f32.mrb[0].mxu0
    %v1710 = vadd.f32 %v236, %v1709
    %v1711 = vpop.f32.mrb[0].mxu0
    %1712 = vmatprep.mubr.f32.mxu0 0.0
    %1713 = vmatmul.mubr.f32.gmra.mrb[0].mxu0 %v162
    %v1714 = vpop.f32.mrb[0].mxu0
    %v1715 = vadd.f32 %v236, %v1714
    %v1716 = vpop.f32.mrb[0].mxu0
    %1717 = vmatprep.mubr.f32.mxu0 0.0
    %1718 = vmatmul.mubr.f32.gmra.mrb[0].mxu0 %v163
    %v1719 = vpop.f32.mrb[0].mxu0
    %v1720 = vadd.f32 %v236, %v1719
    %v1721 = vpop.f32.mrb[0].mxu0
    %1722 = vmatprep.mubr.f32.mxu0 0.0
    %1723 = vmatmul.mubr.f32.gmra.mrb[0].mxu0 %v164
    %v1724 = vpop.f32.mrb[0].mxu0
    %v1725 = vadd.f32 %v236, %v1724
    %v1726 = vpop.f32.mrb[0].mxu0
    %1727 = vmatprep.mubr.f32.mxu0 0.0
    %1728 = vmatmul.mubr.f32.gmra.mrb[0].mxu0 %v165
    %v1729 = vpop.f32.mrb[0].mxu0
    %v1730 = vadd.f32 %v236, %v1729
    %v1731 = vpop.f32.mrb[0].mxu0
    %1732 = vmatprep.mubr.f32.mxu0 0.0
    %1733 = vmatmul.mubr.f32.gmra.mrb[0].mxu0 %v166
    %v1734 = vpop.f32.mrb[0].mxu0
    %v1735 = vadd.f32 %v236, %v1734
    %v1736 = vpop.f32.mrb[0].mxu0
    %1737 = vmatprep.mubr.f32.mxu0 0.0
    %1738 = vmatmul.mubr.f32.gmra.mrb[0].mxu0 %v167
    %v1739 = vpop.f32.mrb[0].mxu0
    %v1740 = vadd.f32 %v236, %v1739
    %v1741 = vpop.f32.mrb[0].mxu0
    %1742 = vmatprep.mubr.f32.mxu0 0.0
    %1743 = vmatmul.mubr.f32.gmra.mrb[0].mxu0 %v168
    %v1744 = vpop.f32.mrb[0].mxu0
    %v1745 = vadd.f32 %v236, %v1744
    %v1746 = vpop.f32.mrb[0].mxu0
    %1747 = vmatprep.mubr.f32.mxu0 0.0
    %1748 = vmatmul.mubr.f32.gmra.mrb[0].mxu0 %v169
    %v1749 = vpop.f32.mrb[0].mxu0
    %v1750 = vadd.f32 %v236, %v1749
    %v1751 = vpop.f32.mrb[0].mxu0
    %1752 = vmatprep.mubr.f32.mxu0 0.0
    %1753 = vmatmul.mubr.f32.gmra.mrb[0].mxu0 %v170
    %v1754 = vpop.f32.mrb[0].mxu0
    %v1755 = vadd.f32 %v236, %v1754
    %v1756 = vpop.f32.mrb[0].mxu0
    %1757 = vmatprep.mubr.f32.mxu0 0.0
    %1758 = vmatmul.mubr.f32.gmra.mrb[0].mxu0 %v171
    %v1759 = vpop.f32.mrb[0].mxu0
    %v1760 = vadd.f32 %v236, %v1759
    %v1761 = vpop.f32.mrb[0].mxu0
    %1762 = vmatprep.mubr.f32.mxu0 0.0
    %1763 = vmatmul.mubr.f32.gmra.mrb[0].mxu0 %v172
    %v1764 = vpop.f32.mrb[0].mxu0
    %v1765 = vadd.f32 %v236, %v1764
    %v1766 = vpop.f32.mrb[0].mxu0
    %1767 = vmatprep.mubr.f32.mxu0 0.0
    %1768 = vmatmul.mubr.f32.gmra.mrb[0].mxu0 %v173
    %v1769 = vpop.f32.mrb[0].mxu0
    %v1770 = vadd.f32 %v236, %v1769
    %v1771 = vpop.f32.mrb[0].mxu0
    %1772 = vmatprep.mubr.f32.mxu0 0.0
    %1773 = vmatmul.mubr.f32.gmra.mrb[0].mxu0 %v174
    %v1774 = vpop.f32.mrb[0].mxu0
    %v1775 = vadd.f32 %v236, %v1774
    %v1776 = vpop.f32.mrb[0].mxu0
    %1777 = vdwg.mxu0
    %v1778 = vpack.c.bf16 %v313, %v307
    %v1779 = vpack.c.bf16 %v325, %v319
    %v1780 = vpack.c.bf16 %v337, %v331
    %v1781 = vpack.c.bf16 %v349, %v343
    %v1782 = vpack.c.bf16 %v361, %v355
    %v1783 = vpack.c.bf16 %v373, %v367
    %v1784 = vpack.c.bf16 %v385, %v379
    %v1785 = vpack.c.bf16 %v397, %v391
    %v1786 = vpack.c.bf16 %v409, %v403
    %v1787 = vpack.c.bf16 %v421, %v415
    %v1788 = vpack.c.bf16 %v433, %v427
    %v1789 = vpack.c.bf16 %v445, %v439
    %v1790 = vpack.c.bf16 %v457, %v451
    %v1791 = vpack.c.bf16 %v469, %v463
    %v1792 = vpack.c.bf16 %v481, %v475
    %v1793 = vpack.c.bf16 %v493, %v487
    %v1794 = vpack.c.bf16 %v505, %v499
    %v1795 = vpack.c.bf16 %v517, %v511
    %v1796 = vpack.c.bf16 %v529, %v523
    %v1797 = vpack.c.bf16 %v541, %v535
    %v1798 = vpack.c.bf16 %v553, %v547
    %v1799 = vpack.c.bf16 %v565, %v559
    %v1800 = vpack.c.bf16 %v577, %v571
    %v1801 = vpack.c.bf16 %v589, %v583
    %v1802 = vpack.c.bf16 %v601, %v595
    %v1803 = vpack.c.bf16 %v613, %v607
    %v1804 = vpack.c.bf16 %v625, %v619
    %v1805 = vpack.c.bf16 %v637, %v631
    %v1806 = vpack.c.bf16 %v649, %v643
    %v1807 = vpack.c.bf16 %v661, %v655
    %v1808 = vpack.c.bf16 %v673, %v667
    %v1809 = vpack.c.bf16 %v685, %v679
    %v1810 = vpack.c.bf16 %v697, %v691
    %v1811 = vpack.c.bf16 %v709, %v703
    %v1812 = vpack.c.bf16 %v721, %v715
    %v1813 = vpack.c.bf16 %v733, %v727
    %v1814 = vpack.c.bf16 %v745, %v739
    %v1815 = vpack.c.bf16 %v757, %v751
    %v1816 = vpack.c.bf16 %v769, %v763
    %v1817 = vpack.c.bf16 %v781, %v775
    %v1818 = vpack.c.bf16 %v793, %v787
    %v1819 = vpack.c.bf16 %v805, %v799
    %v1820 = vpack.c.bf16 %v817, %v811
    %v1821 = vpack.c.bf16 %v829, %v823
    %v1822 = vpack.c.bf16 %v841, %v835
    %v1823 = vpack.c.bf16 %v853, %v847
    %v1824 = vpack.c.bf16 %v865, %v859
    %v1825 = vpack.c.bf16 %v877, %v871
    %v1826 = vpack.c.bf16 %v889, %v883
    %v1827 = vpack.c.bf16 %v901, %v895
    %v1828 = vpack.c.bf16 %v913, %v907
    %v1829 = vpack.c.bf16 %v925, %v919
    %v1830 = vpack.c.bf16 %v937, %v931
    %v1831 = vpack.c.bf16 %v949, %v943
    %v1832 = vpack.c.bf16 %v961, %v955
    %v1833 = vpack.c.bf16 %v973, %v967
    %v1834 = vpack.c.bf16 %v985, %v979
    %v1835 = vpack.c.bf16 %v997, %v991
    %v1836 = vpack.c.bf16 %v1009, %v1003
    %v1837 = vpack.c.bf16 %v1021, %v1015
    %v1838 = vpack.c.bf16 %v1033, %v1027
    %v1839 = vpack.c.bf16 %v1045, %v1039
    %v1840 = vpack.c.bf16 %v1057, %v1051
    %v1841 = vpack.c.bf16 %v1069, %v1063
    %v1906 = vunpack.c.l.b16 %v1778
    %v1907 = vunpack.c.h.b16 %v1778
    %v1908 = vunpack.c.l.b16 %v1779
    %v1909 = vunpack.c.h.b16 %v1779
    %v1910 = vunpack.c.l.b16 %v1780
    %v1911 = vunpack.c.h.b16 %v1780
    %v1912 = vunpack.c.l.b16 %v1781
    %v1913 = vunpack.c.h.b16 %v1781
    %v1914 = vunpack.c.l.b16 %v1782
    %v1915 = vunpack.c.h.b16 %v1782
    %v1916 = vunpack.c.l.b16 %v1783
    %v1917 = vunpack.c.h.b16 %v1783
    %v1918 = vunpack.c.l.b16 %v1784
    %v1919 = vunpack.c.h.b16 %v1784
    %v1920 = vunpack.c.l.b16 %v1785
    %v1921 = vunpack.c.h.b16 %v1785
    %v1922 = vunpack.c.l.b16 %v1786
    %v1923 = vunpack.c.h.b16 %v1786
    %v1924 = vunpack.c.l.b16 %v1787
    %v1925 = vunpack.c.h.b16 %v1787
    %v1926 = vunpack.c.l.b16 %v1788
    %v1927 = vunpack.c.h.b16 %v1788
    %v1928 = vunpack.c.l.b16 %v1789
    %v1929 = vunpack.c.h.b16 %v1789
    %v1930 = vunpack.c.l.b16 %v1790
    %v1931 = vunpack.c.h.b16 %v1790
    %v1932 = vunpack.c.l.b16 %v1791
    %v1933 = vunpack.c.h.b16 %v1791
    %v1934 = vunpack.c.l.b16 %v1792
    %v1935 = vunpack.c.h.b16 %v1792
    %v1936 = vunpack.c.l.b16 %v1793
    %v1937 = vunpack.c.h.b16 %v1793
    %v1938 = vunpack.c.l.b16 %v1794
    %v1939 = vunpack.c.h.b16 %v1794
    %v1940 = vunpack.c.l.b16 %v1795
    %v1941 = vunpack.c.h.b16 %v1795
    %v1942 = vunpack.c.l.b16 %v1796
    %v1943 = vunpack.c.h.b16 %v1796
    %v1944 = vunpack.c.l.b16 %v1797
    %v1945 = vunpack.c.h.b16 %v1797
    %v1946 = vunpack.c.l.b16 %v1798
    %v1947 = vunpack.c.h.b16 %v1798
    %v1948 = vunpack.c.l.b16 %v1799
    %v1949 = vunpack.c.h.b16 %v1799
    %v1950 = vunpack.c.l.b16 %v1800
    %v1951 = vunpack.c.h.b16 %v1800
    %v1952 = vunpack.c.l.b16 %v1801
    %v1953 = vunpack.c.h.b16 %v1801
    %v1954 = vunpack.c.l.b16 %v1802
    %v1955 = vunpack.c.h.b16 %v1802
    %v1956 = vunpack.c.l.b16 %v1803
    %v1957 = vunpack.c.h.b16 %v1803
    %v1958 = vunpack.c.l.b16 %v1804
    %v1959 = vunpack.c.h.b16 %v1804
    %v1960 = vunpack.c.l.b16 %v1805
    %v1961 = vunpack.c.h.b16 %v1805
    %v1962 = vunpack.c.l.b16 %v1806
    %v1963 = vunpack.c.h.b16 %v1806
    %v1964 = vunpack.c.l.b16 %v1807
    %v1965 = vunpack.c.h.b16 %v1807
    %v1966 = vunpack.c.l.b16 %v1808
    %v1967 = vunpack.c.h.b16 %v1808
    %v1968 = vunpack.c.l.b16 %v1809
    %v1969 = vunpack.c.h.b16 %v1809
    %v1970 = vunpack.c.l.b16 %v1810
    %v1971 = vunpack.c.h.b16 %v1810
    %v1972 = vunpack.c.l.b16 %v1811
    %v1973 = vunpack.c.h.b16 %v1811
    %v1974 = vunpack.c.l.b16 %v1812
    %v1975 = vunpack.c.h.b16 %v1812
    %v1976 = vunpack.c.l.b16 %v1813
    %v1977 = vunpack.c.h.b16 %v1813
    %v1978 = vunpack.c.l.b16 %v1814
    %v1979 = vunpack.c.h.b16 %v1814
    %v1980 = vunpack.c.l.b16 %v1815
    %v1981 = vunpack.c.h.b16 %v1815
    %v1982 = vunpack.c.l.b16 %v1816
    %v1983 = vunpack.c.h.b16 %v1816
    %v1984 = vunpack.c.l.b16 %v1817
    %v1985 = vunpack.c.h.b16 %v1817
    %v1986 = vunpack.c.l.b16 %v1818
    %v1987 = vunpack.c.h.b16 %v1818
    %v1988 = vunpack.c.l.b16 %v1819
    %v1989 = vunpack.c.h.b16 %v1819
    %v1990 = vunpack.c.l.b16 %v1820
    %v1991 = vunpack.c.h.b16 %v1820
    %v1992 = vunpack.c.l.b16 %v1821
    %v1993 = vunpack.c.h.b16 %v1821
    %v1994 = vunpack.c.l.b16 %v1822
    %v1995 = vunpack.c.h.b16 %v1822
    %v1996 = vunpack.c.l.b16 %v1823
    %v1997 = vunpack.c.h.b16 %v1823
    %v1998 = vunpack.c.l.b16 %v1824
    %v1999 = vunpack.c.h.b16 %v1824
    %v2000 = vunpack.c.l.b16 %v1825
    %v2001 = vunpack.c.h.b16 %v1825
    %v2002 = vunpack.c.l.b16 %v1826
    %v2003 = vunpack.c.h.b16 %v1826
    %v2004 = vunpack.c.l.b16 %v1827
    %v2005 = vunpack.c.h.b16 %v1827
    %v2006 = vunpack.c.l.b16 %v1828
    %v2007 = vunpack.c.h.b16 %v1828
    %v2008 = vunpack.c.l.b16 %v1829
    %v2009 = vunpack.c.h.b16 %v1829
    %v2010 = vunpack.c.l.b16 %v1830
    %v2011 = vunpack.c.h.b16 %v1830
    %v2012 = vunpack.c.l.b16 %v1831
    %v2013 = vunpack.c.h.b16 %v1831
    %v2014 = vunpack.c.l.b16 %v1832
    %v2015 = vunpack.c.h.b16 %v1832
    %v2016 = vunpack.c.l.b16 %v1833
    %v2017 = vunpack.c.h.b16 %v1833
    %v2018 = vunpack.c.l.b16 %v1834
    %v2019 = vunpack.c.h.b16 %v1834
    %v2020 = vunpack.c.l.b16 %v1835
    %v2021 = vunpack.c.h.b16 %v1835
    %v2022 = vunpack.c.l.b16 %v1836
    %v2023 = vunpack.c.h.b16 %v1836
    %v2024 = vunpack.c.l.b16 %v1837
    %v2025 = vunpack.c.h.b16 %v1837
    %v2026 = vunpack.c.l.b16 %v1838
    %v2027 = vunpack.c.h.b16 %v1838
    %v2028 = vunpack.c.l.b16 %v1839
    %v2029 = vunpack.c.h.b16 %v1839
    %v2030 = vunpack.c.l.b16 %v1840
    %v2031 = vunpack.c.h.b16 %v1840
    %v2032 = vunpack.c.l.b16 %v1841
    %v2033 = vunpack.c.h.b16 %v1841
    %v2034 = vpack.c.b16 %v1906, %v1906
    %v2035 = vpack.c.b16 %v1907, %v1907
    %v2036 = vpack.c.b16 %v1908, %v1908
    %v2037 = vpack.c.b16 %v1909, %v1909
    %v2038 = vpack.c.b16 %v1910, %v1910
    %v2039 = vpack.c.b16 %v1911, %v1911
    %v2040 = vpack.c.b16 %v1912, %v1912
    %v2041 = vpack.c.b16 %v1913, %v1913
    %v2042 = vpack.c.b16 %v1914, %v1914
    %v2043 = vpack.c.b16 %v1915, %v1915
    %v2044 = vpack.c.b16 %v1916, %v1916
    %v2045 = vpack.c.b16 %v1917, %v1917
    %v2046 = vpack.c.b16 %v1918, %v1918
    %v2047 = vpack.c.b16 %v1919, %v1919
    %v2048 = vpack.c.b16 %v1920, %v1920
    %v2049 = vpack.c.b16 %v1921, %v1921
    %v2050 = vpack.c.b16 %v1922, %v1922
    %v2051 = vpack.c.b16 %v1923, %v1923
    %v2052 = vpack.c.b16 %v1924, %v1924
    %v2053 = vpack.c.b16 %v1925, %v1925
    %v2054 = vpack.c.b16 %v1926, %v1926
    %v2055 = vpack.c.b16 %v1927, %v1927
    %v2056 = vpack.c.b16 %v1928, %v1928
    %v2057 = vpack.c.b16 %v1929, %v1929
    %v2058 = vpack.c.b16 %v1930, %v1930
    %v2059 = vpack.c.b16 %v1931, %v1931
    %v2060 = vpack.c.b16 %v1932, %v1932
    %v2061 = vpack.c.b16 %v1933, %v1933
    %v2062 = vpack.c.b16 %v1934, %v1934
    %v2063 = vpack.c.b16 %v1935, %v1935
    %v2064 = vpack.c.b16 %v1936, %v1936
    %v2065 = vpack.c.b16 %v1937, %v1937
    %v2066 = vpack.c.b16 %v1938, %v1938
    %v2067 = vpack.c.b16 %v1939, %v1939
    %v2068 = vpack.c.b16 %v1940, %v1940
    %v2069 = vpack.c.b16 %v1941, %v1941
    %v2070 = vpack.c.b16 %v1942, %v1942
    %v2071 = vpack.c.b16 %v1943, %v1943
    %v2072 = vpack.c.b16 %v1944, %v1944
    %v2073 = vpack.c.b16 %v1945, %v1945
    %v2074 = vpack.c.b16 %v1946, %v1946
    %v2075 = vpack.c.b16 %v1947, %v1947
    %v2076 = vpack.c.b16 %v1948, %v1948
    %v2077 = vpack.c.b16 %v1949, %v1949
    %v2078 = vpack.c.b16 %v1950, %v1950
    %v2079 = vpack.c.b16 %v1951, %v1951
    %v2080 = vpack.c.b16 %v1952, %v1952
    %v2081 = vpack.c.b16 %v1953, %v1953
    %v2082 = vpack.c.b16 %v1954, %v1954
    %v2083 = vpack.c.b16 %v1955, %v1955
    %v2084 = vpack.c.b16 %v1956, %v1956
    %v2085 = vpack.c.b16 %v1957, %v1957
    %v2086 = vpack.c.b16 %v1958, %v1958
    %v2087 = vpack.c.b16 %v1959, %v1959
    %v2088 = vpack.c.b16 %v1960, %v1960
    %v2089 = vpack.c.b16 %v1961, %v1961
    %v2090 = vpack.c.b16 %v1962, %v1962
    %v2091 = vpack.c.b16 %v1963, %v1963
    %v2092 = vpack.c.b16 %v1964, %v1964
    %v2093 = vpack.c.b16 %v1965, %v1965
    %v2094 = vpack.c.b16 %v1966, %v1966
    %v2095 = vpack.c.b16 %v1967, %v1967
    %v2096 = vpack.c.b16 %v1968, %v1968
    %v2097 = vpack.c.b16 %v1969, %v1969
    %v2098 = vpack.c.b16 %v1970, %v1970
    %v2099 = vpack.c.b16 %v1971, %v1971
    %v2100 = vpack.c.b16 %v1972, %v1972
    %v2101 = vpack.c.b16 %v1973, %v1973
    %v2102 = vpack.c.b16 %v1974, %v1974
    %v2103 = vpack.c.b16 %v1975, %v1975
    %v2104 = vpack.c.b16 %v1976, %v1976
    %v2105 = vpack.c.b16 %v1977, %v1977
    %v2106 = vpack.c.b16 %v1978, %v1978
    %v2107 = vpack.c.b16 %v1979, %v1979
    %v2108 = vpack.c.b16 %v1980, %v1980
    %v2109 = vpack.c.b16 %v1981, %v1981
    %v2110 = vpack.c.b16 %v1982, %v1982
    %v2111 = vpack.c.b16 %v1983, %v1983
    %v2112 = vpack.c.b16 %v1984, %v1984
    %v2113 = vpack.c.b16 %v1985, %v1985
    %v2114 = vpack.c.b16 %v1986, %v1986
    %v2115 = vpack.c.b16 %v1987, %v1987
    %v2116 = vpack.c.b16 %v1988, %v1988
    %v2117 = vpack.c.b16 %v1989, %v1989
    %v2118 = vpack.c.b16 %v1990, %v1990
    %v2119 = vpack.c.b16 %v1991, %v1991
    %v2120 = vpack.c.b16 %v1992, %v1992
    %v2121 = vpack.c.b16 %v1993, %v1993
    %v2122 = vpack.c.b16 %v1994, %v1994
    %v2123 = vpack.c.b16 %v1995, %v1995
    %v2124 = vpack.c.b16 %v1996, %v1996
    %v2125 = vpack.c.b16 %v1997, %v1997
    %v2126 = vpack.c.b16 %v1998, %v1998
    %v2127 = vpack.c.b16 %v1999, %v1999
    %v2128 = vpack.c.b16 %v2000, %v2000
    %v2129 = vpack.c.b16 %v2001, %v2001
    %v2130 = vpack.c.b16 %v2002, %v2002
    %v2131 = vpack.c.b16 %v2003, %v2003
    %v2132 = vpack.c.b16 %v2004, %v2004
    %v2133 = vpack.c.b16 %v2005, %v2005
    %v2134 = vpack.c.b16 %v2006, %v2006
    %v2135 = vpack.c.b16 %v2007, %v2007
    %v2136 = vpack.c.b16 %v2008, %v2008
    %v2137 = vpack.c.b16 %v2009, %v2009
    %v2138 = vpack.c.b16 %v2010, %v2010
    %v2139 = vpack.c.b16 %v2011, %v2011
    %v2140 = vpack.c.b16 %v2012, %v2012
    %v2141 = vpack.c.b16 %v2013, %v2013
    %v2142 = vpack.c.b16 %v2014, %v2014
    %v2143 = vpack.c.b16 %v2015, %v2015
    %v2144 = vpack.c.b16 %v2016, %v2016
    %v2145 = vpack.c.b16 %v2017, %v2017
    %v2146 = vpack.c.b16 %v2018, %v2018
    %v2147 = vpack.c.b16 %v2019, %v2019
    %v2148 = vpack.c.b16 %v2020, %v2020
    %v2149 = vpack.c.b16 %v2021, %v2021
    %v2150 = vpack.c.b16 %v2022, %v2022
    %v2151 = vpack.c.b16 %v2023, %v2023
    %v2152 = vpack.c.b16 %v2024, %v2024
    %v2153 = vpack.c.b16 %v2025, %v2025
    %v2154 = vpack.c.b16 %v2026, %v2026
    %v2155 = vpack.c.b16 %v2027, %v2027
    %v2156 = vpack.c.b16 %v2028, %v2028
    %v2157 = vpack.c.b16 %v2029, %v2029
    %v2158 = vpack.c.b16 %v2030, %v2030
    %v2159 = vpack.c.b16 %v2031, %v2031
    %v2160 = vpack.c.b16 %v2032, %v2032
    %v2161 = vpack.c.b16 %v2033, %v2033
    %2290 = vst [vmem:[#allocation7] sm:$0xf] %v2034
    %2291 = vst [vmem:[#allocation7 + $0x4] sm:$0xf] %v2035
    %2292 = vst [vmem:[#allocation7 + $0x8] sm:$0xf] %v2036
    %2293 = vst [vmem:[#allocation7 + $0xc] sm:$0xf] %v2037
    %2294 = vst [vmem:[#allocation7 + $0x10] sm:$0xf] %v2038
    %2295 = vst [vmem:[#allocation7 + $0x14] sm:$0xf] %v2039
    %2296 = vst [vmem:[#allocation7 + $0x18] sm:$0xf] %v2040
    %2297 = vst [vmem:[#allocation7 + $0x1c] sm:$0xf] %v2041
    %2298 = vst [vmem:[#allocation7 + $0x20] sm:$0xf] %v2042
    %2299 = vst [vmem:[#allocation7 + $0x24] sm:$0xf] %v2043
    %2300 = vst [vmem:[#allocation7 + $0x28] sm:$0xf] %v2044
    %2301 = vst [vmem:[#allocation7 + $0x2c] sm:$0xf] %v2045
    %2302 = vst [vmem:[#allocation7 + $0x30] sm:$0xf] %v2046
    %2303 = vst [vmem:[#allocation7 + $0x34] sm:$0xf] %v2047
    %2304 = vst [vmem:[#allocation7 + $0x38] sm:$0xf] %v2048
    %2305 = vst [vmem:[#allocation7 + $0x3c] sm:$0xf] %v2049
    %2306 = vst [vmem:[#allocation7 + $0x40] sm:$0xf] %v2050
    %2307 = vst [vmem:[#allocation7 + $0x44] sm:$0xf] %v2051
    %2308 = vst [vmem:[#allocation7 + $0x48] sm:$0xf] %v2052
    %2309 = vst [vmem:[#allocation7 + $0x4c] sm:$0xf] %v2053
    %2310 = vst [vmem:[#allocation7 + $0x50] sm:$0xf] %v2054
    %2311 = vst [vmem:[#allocation7 + $0x54] sm:$0xf] %v2055
    %2312 = vst [vmem:[#allocation7 + $0x58] sm:$0xf] %v2056
    %2313 = vst [vmem:[#allocation7 + $0x5c] sm:$0xf] %v2057
    %2314 = vst [vmem:[#allocation7 + $0x60] sm:$0xf] %v2058
    %2315 = vst [vmem:[#allocation7 + $0x64] sm:$0xf] %v2059
    %2316 = vst [vmem:[#allocation7 + $0x68] sm:$0xf] %v2060
    %2317 = vst [vmem:[#allocation7 + $0x6c] sm:$0xf] %v2061
    %2318 = vst [vmem:[#allocation7 + $0x70] sm:$0xf] %v2062
    %2319 = vst [vmem:[#allocation7 + $0x74] sm:$0xf] %v2063
    %2320 = vst [vmem:[#allocation7 + $0x78] sm:$0xf] %v2064
    %2321 = vst [vmem:[#allocation7 + $0x7c] sm:$0xf] %v2065
    %2322 = vst [vmem:[#allocation7 + $0x80] sm:$0xf] %v2066
    %2323 = vst [vmem:[#allocation7 + $0x84] sm:$0xf] %v2067
    %2324 = vst [vmem:[#allocation7 + $0x88] sm:$0xf] %v2068
    %2325 = vst [vmem:[#allocation7 + $0x8c] sm:$0xf] %v2069
    %2326 = vst [vmem:[#allocation7 + $0x90] sm:$0xf] %v2070
    %2327 = vst [vmem:[#allocation7 + $0x94] sm:$0xf] %v2071
    %2328 = vst [vmem:[#allocation7 + $0x98] sm:$0xf] %v2072
    %2329 = vst [vmem:[#allocation7 + $0x9c] sm:$0xf] %v2073
    %2330 = vst [vmem:[#allocation7 + $0xa0] sm:$0xf] %v2074
    %2331 = vst [vmem:[#allocation7 + $0xa4] sm:$0xf] %v2075
    %2332 = vst [vmem:[#allocation7 + $0xa8] sm:$0xf] %v2076
    %2333 = vst [vmem:[#allocation7 + $0xac] sm:$0xf] %v2077
    %2334 = vst [vmem:[#allocation7 + $0xb0] sm:$0xf] %v2078
    %2335 = vst [vmem:[#allocation7 + $0xb4] sm:$0xf] %v2079
    %2336 = vst [vmem:[#allocation7 + $0xb8] sm:$0xf] %v2080
    %2337 = vst [vmem:[#allocation7 + $0xbc] sm:$0xf] %v2081
    %2338 = vst [vmem:[#allocation7 + $0xc0] sm:$0xf] %v2082
    %2339 = vst [vmem:[#allocation7 + $0xc4] sm:$0xf] %v2083
    %2340 = vst [vmem:[#allocation7 + $0xc8] sm:$0xf] %v2084
    %2341 = vst [vmem:[#allocation7 + $0xcc] sm:$0xf] %v2085
    %2342 = vst [vmem:[#allocation7 + $0xd0] sm:$0xf] %v2086
    %2343 = vst [vmem:[#allocation7 + $0xd4] sm:$0xf] %v2087
    %2344 = vst [vmem:[#allocation7 + $0xd8] sm:$0xf] %v2088
    %2345 = vst [vmem:[#allocation7 + $0xdc] sm:$0xf] %v2089
    %2346 = vst [vmem:[#allocation7 + $0xe0] sm:$0xf] %v2090
    %2347 = vst [vmem:[#allocation7 + $0xe4] sm:$0xf] %v2091
    %2348 = vst [vmem:[#allocation7 + $0xe8] sm:$0xf] %v2092
    %2349 = vst [vmem:[#allocation7 + $0xec] sm:$0xf] %v2093
    %2350 = vst [vmem:[#allocation7 + $0xf0] sm:$0xf] %v2094
    %2351 = vst [vmem:[#allocation7 + $0xf4] sm:$0xf] %v2095
    %2352 = vst [vmem:[#allocation7 + $0xf8] sm:$0xf] %v2096
    %2353 = vst [vmem:[#allocation7 + $0xfc] sm:$0xf] %v2097
    %2354 = vst [vmem:[#allocation7 + $0x100] sm:$0xf] %v2098
    %2355 = vst [vmem:[#allocation7 + $0x104] sm:$0xf] %v2099
    %2356 = vst [vmem:[#allocation7 + $0x108] sm:$0xf] %v2100
    %2357 = vst [vmem:[#allocation7 + $0x10c] sm:$0xf] %v2101
    %2358 = vst [vmem:[#allocation7 + $0x110] sm:$0xf] %v2102
    %2359 = vst [vmem:[#allocation7 + $0x114] sm:$0xf] %v2103
    %2360 = vst [vmem:[#allocation7 + $0x118] sm:$0xf] %v2104
    %2361 = vst [vmem:[#allocation7 + $0x11c] sm:$0xf] %v2105
    %2362 = vst [vmem:[#allocation7 + $0x120] sm:$0xf] %v2106
    %2363 = vst [vmem:[#allocation7 + $0x124] sm:$0xf] %v2107
    %2364 = vst [vmem:[#allocation7 + $0x128] sm:$0xf] %v2108
    %2365 = vst [vmem:[#allocation7 + $0x12c] sm:$0xf] %v2109
    %2366 = vst [vmem:[#allocation7 + $0x130] sm:$0xf] %v2110
    %2367 = vst [vmem:[#allocation7 + $0x134] sm:$0xf] %v2111
    %2368 = vst [vmem:[#allocation7 + $0x138] sm:$0xf] %v2112
    %2369 = vst [vmem:[#allocation7 + $0x13c] sm:$0xf] %v2113
    %2370 = vst [vmem:[#allocation7 + $0x140] sm:$0xf] %v2114
    %2371 = vst [vmem:[#allocation7 + $0x144] sm:$0xf] %v2115
    %2372 = vst [vmem:[#allocation7 + $0x148] sm:$0xf] %v2116
    %2373 = vst [vmem:[#allocation7 + $0x14c] sm:$0xf] %v2117
    %2374 = vst [vmem:[#allocation7 + $0x150] sm:$0xf] %v2118
    %2375 = vst [vmem:[#allocation7 + $0x154] sm:$0xf] %v2119
    %2376 = vst [vmem:[#allocation7 + $0x158] sm:$0xf] %v2120
    %2377 = vst [vmem:[#allocation7 + $0x15c] sm:$0xf] %v2121
    %2378 = vst [vmem:[#allocation7 + $0x160] sm:$0xf] %v2122
    %2379 = vst [vmem:[#allocation7 + $0x164] sm:$0xf] %v2123
    %2380 = vst [vmem:[#allocation7 + $0x168] sm:$0xf] %v2124
    %2381 = vst [vmem:[#allocation7 + $0x16c] sm:$0xf] %v2125
    %2382 = vst [vmem:[#allocation7 + $0x170] sm:$0xf] %v2126
    %2383 = vst [vmem:[#allocation7 + $0x174] sm:$0xf] %v2127
    %2384 = vst [vmem:[#allocation7 + $0x178] sm:$0xf] %v2128
    %2385 = vst [vmem:[#allocation7 + $0x17c] sm:$0xf] %v2129
    %2386 = vst [vmem:[#allocation7 + $0x180] sm:$0xf] %v2130
    %2387 = vst [vmem:[#allocation7 + $0x184] sm:$0xf] %v2131
    %2388 = vst [vmem:[#allocation7 + $0x188] sm:$0xf] %v2132
    %2389 = vst [vmem:[#allocation7 + $0x18c] sm:$0xf] %v2133
    %2390 = vst [vmem:[#allocation7 + $0x190] sm:$0xf] %v2134
    %2391 = vst [vmem:[#allocation7 + $0x194] sm:$0xf] %v2135
    %2392 = vst [vmem:[#allocation7 + $0x198] sm:$0xf] %v2136
    %2393 = vst [vmem:[#allocation7 + $0x19c] sm:$0xf] %v2137
    %2394 = vst [vmem:[#allocation7 + $0x1a0] sm:$0xf] %v2138
    %2395 = vst [vmem:[#allocation7 + $0x1a4] sm:$0xf] %v2139
    %2396 = vst [vmem:[#allocation7 + $0x1a8] sm:$0xf] %v2140
    %2397 = vst [vmem:[#allocation7 + $0x1ac] sm:$0xf] %v2141
    %2398 = vst [vmem:[#allocation7 + $0x1b0] sm:$0xf] %v2142
    %2399 = vst [vmem:[#allocation7 + $0x1b4] sm:$0xf] %v2143
    %2400 = vst [vmem:[#allocation7 + $0x1b8] sm:$0xf] %v2144
    %2401 = vst [vmem:[#allocation7 + $0x1bc] sm:$0xf] %v2145
    %2402 = vst [vmem:[#allocation7 + $0x1c0] sm:$0xf] %v2146
    %2403 = vst [vmem:[#allocation7 + $0x1c4] sm:$0xf] %v2147
    %2404 = vst [vmem:[#allocation7 + $0x1c8] sm:$0xf] %v2148
    %2405 = vst [vmem:[#allocation7 + $0x1cc] sm:$0xf] %v2149
    %2406 = vst [vmem:[#allocation7 + $0x1d0] sm:$0xf] %v2150
    %2407 = vst [vmem:[#allocation7 + $0x1d4] sm:$0xf] %v2151
    %2408 = vst [vmem:[#allocation7 + $0x1d8] sm:$0xf] %v2152
    %2409 = vst [vmem:[#allocation7 + $0x1dc] sm:$0xf] %v2153
    %2410 = vst [vmem:[#allocation7 + $0x1e0] sm:$0xf] %v2154
    %2411 = vst [vmem:[#allocation7 + $0x1e4] sm:$0xf] %v2155
    %2412 = vst [vmem:[#allocation7 + $0x1e8] sm:$0xf] %v2156
    %2413 = vst [vmem:[#allocation7 + $0x1ec] sm:$0xf] %v2157
    %2414 = vst [vmem:[#allocation7 + $0x1f0] sm:$0xf] %v2158
    %2415 = vst [vmem:[#allocation7 + $0x1f4] sm:$0xf] %v2159
    %2416 = vst [vmem:[#allocation7 + $0x1f8] sm:$0xf] %v2160
    %2417 = vst [vmem:[#allocation7 + $0x1fc] sm:$0xf] %v2161
    %v2418 = vpack.c.bf16 %v315, %v309
    %v2419 = vpack.c.bf16 %v327, %v321
    %v2420 = vpack.c.bf16 %v339, %v333
    %v2421 = vpack.c.bf16 %v351, %v345
    %v2422 = vpack.c.bf16 %v363, %v357
    %v2423 = vpack.c.bf16 %v375, %v369
    %v2424 = vpack.c.bf16 %v387, %v381
    %v2425 = vpack.c.bf16 %v399, %v393
    %v2426 = vpack.c.bf16 %v411, %v405
    %v2427 = vpack.c.bf16 %v423, %v417
    %v2428 = vpack.c.bf16 %v435, %v429
    %v2429 = vpack.c.bf16 %v447, %v441
    %v2430 = vpack.c.bf16 %v459, %v453
    %v2431 = vpack.c.bf16 %v471, %v465
    %v2432 = vpack.c.bf16 %v483, %v477
    %v2433 = vpack.c.bf16 %v495, %v489
    %v2434 = vpack.c.bf16 %v507, %v501
    %v2435 = vpack.c.bf16 %v519, %v513
    %v2436 = vpack.c.bf16 %v531, %v525
    %v2437 = vpack.c.bf16 %v543, %v537
    %v2438 = vpack.c.bf16 %v555, %v549
    %v2439 = vpack.c.bf16 %v567, %v561
    %v2440 = vpack.c.bf16 %v579, %v573
    %v2441 = vpack.c.bf16 %v591, %v585
    %v2442 = vpack.c.bf16 %v603, %v597
    %v2443 = vpack.c.bf16 %v615, %v609
    %v2444 = vpack.c.bf16 %v627, %v621
    %v2445 = vpack.c.bf16 %v639, %v633
    %v2446 = vpack.c.bf16 %v651, %v645
    %v2447 = vpack.c.bf16 %v663, %v657
    %v2448 = vpack.c.bf16 %v675, %v669
    %v2449 = vpack.c.bf16 %v687, %v681
    %v2450 = vpack.c.bf16 %v699, %v693
    %v2451 = vpack.c.bf16 %v711, %v705
    %v2452 = vpack.c.bf16 %v723, %v717
    %v2453 = vpack.c.bf16 %v735, %v729
    %v2454 = vpack.c.bf16 %v747, %v741
    %v2455 = vpack.c.bf16 %v759, %v753
    %v2456 = vpack.c.bf16 %v771, %v765
    %v2457 = vpack.c.bf16 %v783, %v777
    %v2458 = vpack.c.bf16 %v795, %v789
    %v2459 = vpack.c.bf16 %v807, %v801
    %v2460 = vpack.c.bf16 %v819, %v813
    %v2461 = vpack.c.bf16 %v831, %v825
    %v2462 = vpack.c.bf16 %v843, %v837
    %v2463 = vpack.c.bf16 %v855, %v849
    %v2464 = vpack.c.bf16 %v867, %v861
    %v2465 = vpack.c.bf16 %v879, %v873
    %v2466 = vpack.c.bf16 %v891, %v885
    %v2467 = vpack.c.bf16 %v903, %v897
    %v2468 = vpack.c.bf16 %v915, %v909
    %v2469 = vpack.c.bf16 %v927, %v921
    %v2470 = vpack.c.bf16 %v939, %v933
    %v2471 = vpack.c.bf16 %v951, %v945
    %v2472 = vpack.c.bf16 %v963, %v957
    %v2473 = vpack.c.bf16 %v975, %v969
    %v2474 = vpack.c.bf16 %v987, %v981
    %v2475 = vpack.c.bf16 %v999, %v993
    %v2476 = vpack.c.bf16 %v1011, %v1005
    %v2477 = vpack.c.bf16 %v1023, %v1017
    %v2478 = vpack.c.bf16 %v1035, %v1029
    %v2479 = vpack.c.bf16 %v1047, %v1041
    %v2480 = vpack.c.bf16 %v1059, %v1053
    %v2481 = vpack.c.bf16 %v1071, %v1065
    %v2546 = vunpack.c.l.b16 %v2418
    %v2547 = vunpack.c.h.b16 %v2418
    %v2548 = vunpack.c.l.b16 %v2419
    %v2549 = vunpack.c.h.b16 %v2419
    %v2550 = vunpack.c.l.b16 %v2420
    %v2551 = vunpack.c.h.b16 %v2420
    %v2552 = vunpack.c.l.b16 %v2421
    %v2553 = vunpack.c.h.b16 %v2421
    %v2554 = vunpack.c.l.b16 %v2422
    %v2555 = vunpack.c.h.b16 %v2422
    %v2556 = vunpack.c.l.b16 %v2423
    %v2557 = vunpack.c.h.b16 %v2423
    %v2558 = vunpack.c.l.b16 %v2424
    %v2559 = vunpack.c.h.b16 %v2424
    %v2560 = vunpack.c.l.b16 %v2425
    %v2561 = vunpack.c.h.b16 %v2425
    %v2562 = vunpack.c.l.b16 %v2426
    %v2563 = vunpack.c.h.b16 %v2426
    %v2564 = vunpack.c.l.b16 %v2427
    %v2565 = vunpack.c.h.b16 %v2427
    %v2566 = vunpack.c.l.b16 %v2428
    %v2567 = vunpack.c.h.b16 %v2428
    %v2568 = vunpack.c.l.b16 %v2429
    %v2569 = vunpack.c.h.b16 %v2429
    %v2570 = vunpack.c.l.b16 %v2430
    %v2571 = vunpack.c.h.b16 %v2430
    %v2572 = vunpack.c.l.b16 %v2431
    %v2573 = vunpack.c.h.b16 %v2431
    %v2574 = vunpack.c.l.b16 %v2432
    %v2575 = vunpack.c.h.b16 %v2432
    %v2576 = vunpack.c.l.b16 %v2433
    %v2577 = vunpack.c.h.b16 %v2433
    %v2578 = vunpack.c.l.b16 %v2434
    %v2579 = vunpack.c.h.b16 %v2434
    %v2580 = vunpack.c.l.b16 %v2435
    %v2581 = vunpack.c.h.b16 %v2435
    %v2582 = vunpack.c.l.b16 %v2436
    %v2583 = vunpack.c.h.b16 %v2436
    %v2584 = vunpack.c.l.b16 %v2437
    %v2585 = vunpack.c.h.b16 %v2437
    %v2586 = vunpack.c.l.b16 %v2438
    %v2587 = vunpack.c.h.b16 %v2438
    %v2588 = vunpack.c.l.b16 %v2439
    %v2589 = vunpack.c.h.b16 %v2439
    %v2590 = vunpack.c.l.b16 %v2440
    %v2591 = vunpack.c.h.b16 %v2440
    %v2592 = vunpack.c.l.b16 %v2441
    %v2593 = vunpack.c.h.b16 %v2441
    %v2594 = vunpack.c.l.b16 %v2442
    %v2595 = vunpack.c.h.b16 %v2442
    %v2596 = vunpack.c.l.b16 %v2443
    %v2597 = vunpack.c.h.b16 %v2443
    %v2598 = vunpack.c.l.b16 %v2444
    %v2599 = vunpack.c.h.b16 %v2444
    %v2600 = vunpack.c.l.b16 %v2445
    %v2601 = vunpack.c.h.b16 %v2445
    %v2602 = vunpack.c.l.b16 %v2446
    %v2603 = vunpack.c.h.b16 %v2446
    %v2604 = vunpack.c.l.b16 %v2447
    %v2605 = vunpack.c.h.b16 %v2447
    %v2606 = vunpack.c.l.b16 %v2448
    %v2607 = vunpack.c.h.b16 %v2448
    %v2608 = vunpack.c.l.b16 %v2449
    %v2609 = vunpack.c.h.b16 %v2449
    %v2610 = vunpack.c.l.b16 %v2450
    %v2611 = vunpack.c.h.b16 %v2450
    %v2612 = vunpack.c.l.b16 %v2451
    %v2613 = vunpack.c.h.b16 %v2451
    %v2614 = vunpack.c.l.b16 %v2452
    %v2615 = vunpack.c.h.b16 %v2452
    %v2616 = vunpack.c.l.b16 %v2453
    %v2617 = vunpack.c.h.b16 %v2453
    %v2618 = vunpack.c.l.b16 %v2454
    %v2619 = vunpack.c.h.b16 %v2454
    %v2620 = vunpack.c.l.b16 %v2455
    %v2621 = vunpack.c.h.b16 %v2455
    %v2622 = vunpack.c.l.b16 %v2456
    %v2623 = vunpack.c.h.b16 %v2456
    %v2624 = vunpack.c.l.b16 %v2457
    %v2625 = vunpack.c.h.b16 %v2457
    %v2626 = vunpack.c.l.b16 %v2458
    %v2627 = vunpack.c.h.b16 %v2458
    %v2628 = vunpack.c.l.b16 %v2459
    %v2629 = vunpack.c.h.b16 %v2459
    %v2630 = vunpack.c.l.b16 %v2460
    %v2631 = vunpack.c.h.b16 %v2460
    %v2632 = vunpack.c.l.b16 %v2461
    %v2633 = vunpack.c.h.b16 %v2461
    %v2634 = vunpack.c.l.b16 %v2462
    %v2635 = vunpack.c.h.b16 %v2462
    %v2636 = vunpack.c.l.b16 %v2463
    %v2637 = vunpack.c.h.b16 %v2463
    %v2638 = vunpack.c.l.b16 %v2464
    %v2639 = vunpack.c.h.b16 %v2464
    %v2640 = vunpack.c.l.b16 %v2465
    %v2641 = vunpack.c.h.b16 %v2465
    %v2642 = vunpack.c.l.b16 %v2466
    %v2643 = vunpack.c.h.b16 %v2466
    %v2644 = vunpack.c.l.b16 %v2467
    %v2645 = vunpack.c.h.b16 %v2467
    %v2646 = vunpack.c.l.b16 %v2468
    %v2647 = vunpack.c.h.b16 %v2468
    %v2648 = vunpack.c.l.b16 %v2469
    %v2649 = vunpack.c.h.b16 %v2469
    %v2650 = vunpack.c.l.b16 %v2470
    %v2651 = vunpack.c.h.b16 %v2470
    %v2652 = vunpack.c.l.b16 %v2471
    %v2653 = vunpack.c.h.b16 %v2471
    %v2654 = vunpack.c.l.b16 %v2472
    %v2655 = vunpack.c.h.b16 %v2472
    %v2656 = vunpack.c.l.b16 %v2473
    %v2657 = vunpack.c.h.b16 %v2473
    %v2658 = vunpack.c.l.b16 %v2474
    %v2659 = vunpack.c.h.b16 %v2474
    %v2660 = vunpack.c.l.b16 %v2475
    %v2661 = vunpack.c.h.b16 %v2475
    %v2662 = vunpack.c.l.b16 %v2476
    %v2663 = vunpack.c.h.b16 %v2476
    %v2664 = vunpack.c.l.b16 %v2477
    %v2665 = vunpack.c.h.b16 %v2477
    %v2666 = vunpack.c.l.b16 %v2478
    %v2667 = vunpack.c.h.b16 %v2478
    %v2668 = vunpack.c.l.b16 %v2479
    %v2669 = vunpack.c.h.b16 %v2479
    %v2670 = vunpack.c.l.b16 %v2480
    %v2671 = vunpack.c.h.b16 %v2480
    %v2672 = vunpack.c.l.b16 %v2481
    %v2673 = vunpack.c.h.b16 %v2481
    %v2674 = vpack.c.b16 %v2546, %v2546
    %v2675 = vpack.c.b16 %v2547, %v2547
    %v2676 = vpack.c.b16 %v2548, %v2548
    %v2677 = vpack.c.b16 %v2549, %v2549
    %v2678 = vpack.c.b16 %v2550, %v2550
    %v2679 = vpack.c.b16 %v2551, %v2551
    %v2680 = vpack.c.b16 %v2552, %v2552
    %v2681 = vpack.c.b16 %v2553, %v2553
    %v2682 = vpack.c.b16 %v2554, %v2554
    %v2683 = vpack.c.b16 %v2555, %v2555
    %v2684 = vpack.c.b16 %v2556, %v2556
    %v2685 = vpack.c.b16 %v2557, %v2557
    %v2686 = vpack.c.b16 %v2558, %v2558
    %v2687 = vpack.c.b16 %v2559, %v2559
    %v2688 = vpack.c.b16 %v2560, %v2560
    %v2689 = vpack.c.b16 %v2561, %v2561
    %v2690 = vpack.c.b16 %v2562, %v2562
    %v2691 = vpack.c.b16 %v2563, %v2563
    %v2692 = vpack.c.b16 %v2564, %v2564
    %v2693 = vpack.c.b16 %v2565, %v2565
    %v2694 = vpack.c.b16 %v2566, %v2566
    %v2695 = vpack.c.b16 %v2567, %v2567
    %v2696 = vpack.c.b16 %v2568, %v2568
    %v2697 = vpack.c.b16 %v2569, %v2569
    %v2698 = vpack.c.b16 %v2570, %v2570
    %v2699 = vpack.c.b16 %v2571, %v2571
    %v2700 = vpack.c.b16 %v2572, %v2572
    %v2701 = vpack.c.b16 %v2573, %v2573
    %v2702 = vpack.c.b16 %v2574, %v2574
    %v2703 = vpack.c.b16 %v2575, %v2575
    %v2704 = vpack.c.b16 %v2576, %v2576
    %v2705 = vpack.c.b16 %v2577, %v2577
    %v2706 = vpack.c.b16 %v2578, %v2578
    %v2707 = vpack.c.b16 %v2579, %v2579
    %v2708 = vpack.c.b16 %v2580, %v2580
    %v2709 = vpack.c.b16 %v2581, %v2581
    %v2710 = vpack.c.b16 %v2582, %v2582
    %v2711 = vpack.c.b16 %v2583, %v2583
    %v2712 = vpack.c.b16 %v2584, %v2584
    %v2713 = vpack.c.b16 %v2585, %v2585
    %v2714 = vpack.c.b16 %v2586, %v2586
    %v2715 = vpack.c.b16 %v2587, %v2587
    %v2716 = vpack.c.b16 %v2588, %v2588
    %v2717 = vpack.c.b16 %v2589, %v2589
    %v2718 = vpack.c.b16 %v2590, %v2590
    %v2719 = vpack.c.b16 %v2591, %v2591
    %v2720 = vpack.c.b16 %v2592, %v2592
    %v2721 = vpack.c.b16 %v2593, %v2593
    %v2722 = vpack.c.b16 %v2594, %v2594
    %v2723 = vpack.c.b16 %v2595, %v2595
    %v2724 = vpack.c.b16 %v2596, %v2596
    %v2725 = vpack.c.b16 %v2597, %v2597
    %v2726 = vpack.c.b16 %v2598, %v2598
    %v2727 = vpack.c.b16 %v2599, %v2599
    %v2728 = vpack.c.b16 %v2600, %v2600
    %v2729 = vpack.c.b16 %v2601, %v2601
    %v2730 = vpack.c.b16 %v2602, %v2602
    %v2731 = vpack.c.b16 %v2603, %v2603
    %v2732 = vpack.c.b16 %v2604, %v2604
    %v2733 = vpack.c.b16 %v2605, %v2605
    %v2734 = vpack.c.b16 %v2606, %v2606
    %v2735 = vpack.c.b16 %v2607, %v2607
    %v2736 = vpack.c.b16 %v2608, %v2608
    %v2737 = vpack.c.b16 %v2609, %v2609
    %v2738 = vpack.c.b16 %v2610, %v2610
    %v2739 = vpack.c.b16 %v2611, %v2611
    %v2740 = vpack.c.b16 %v2612, %v2612
    %v2741 = vpack.c.b16 %v2613, %v2613
    %v2742 = vpack.c.b16 %v2614, %v2614
    %v2743 = vpack.c.b16 %v2615, %v2615
    %v2744 = vpack.c.b16 %v2616, %v2616
    %v2745 = vpack.c.b16 %v2617, %v2617
    %v2746 = vpack.c.b16 %v2618, %v2618
    %v2747 = vpack.c.b16 %v2619, %v2619
    %v2748 = vpack.c.b16 %v2620, %v2620
    %v2749 = vpack.c.b16 %v2621, %v2621
    %v2750 = vpack.c.b16 %v2622, %v2622
    %v2751 = vpack.c.b16 %v2623, %v2623
    %v2752 = vpack.c.b16 %v2624, %v2624
    %v2753 = vpack.c.b16 %v2625, %v2625
    %v2754 = vpack.c.b16 %v2626, %v2626
    %v2755 = vpack.c.b16 %v2627, %v2627
    %v2756 = vpack.c.b16 %v2628, %v2628
    %v2757 = vpack.c.b16 %v2629, %v2629
    %v2758 = vpack.c.b16 %v2630, %v2630
    %v2759 = vpack.c.b16 %v2631, %v2631
    %v2760 = vpack.c.b16 %v2632, %v2632
    %v2761 = vpack.c.b16 %v2633, %v2633
    %v2762 = vpack.c.b16 %v2634, %v2634
    %v2763 = vpack.c.b16 %v2635, %v2635
    %v2764 = vpack.c.b16 %v2636, %v2636
    %v2765 = vpack.c.b16 %v2637, %v2637
    %v2766 = vpack.c.b16 %v2638, %v2638
    %v2767 = vpack.c.b16 %v2639, %v2639
    %v2768 = vpack.c.b16 %v2640, %v2640
    %v2769 = vpack.c.b16 %v2641, %v2641
    %v2770 = vpack.c.b16 %v2642, %v2642
    %v2771 = vpack.c.b16 %v2643, %v2643
    %v2772 = vpack.c.b16 %v2644, %v2644
    %v2773 = vpack.c.b16 %v2645, %v2645
    %v2774 = vpack.c.b16 %v2646, %v2646
    %v2775 = vpack.c.b16 %v2647, %v2647
    %v2776 = vpack.c.b16 %v2648, %v2648
    %v2777 = vpack.c.b16 %v2649, %v2649
    %v2778 = vpack.c.b16 %v2650, %v2650
    %v2779 = vpack.c.b16 %v2651, %v2651
    %v2780 = vpack.c.b16 %v2652, %v2652
    %v2781 = vpack.c.b16 %v2653, %v2653
    %v2782 = vpack.c.b16 %v2654, %v2654
    %v2783 = vpack.c.b16 %v2655, %v2655
    %v2784 = vpack.c.b16 %v2656, %v2656
    %v2785 = vpack.c.b16 %v2657, %v2657
    %v2786 = vpack.c.b16 %v2658, %v2658
    %v2787 = vpack.c.b16 %v2659, %v2659
    %v2788 = vpack.c.b16 %v2660, %v2660
    %v2789 = vpack.c.b16 %v2661, %v2661
    %v2790 = vpack.c.b16 %v2662, %v2662
    %v2791 = vpack.c.b16 %v2663, %v2663
    %v2792 = vpack.c.b16 %v2664, %v2664
    %v2793 = vpack.c.b16 %v2665, %v2665
    %v2794 = vpack.c.b16 %v2666, %v2666
    %v2795 = vpack.c.b16 %v2667, %v2667
    %v2796 = vpack.c.b16 %v2668, %v2668
    %v2797 = vpack.c.b16 %v2669, %v2669
    %v2798 = vpack.c.b16 %v2670, %v2670
    %v2799 = vpack.c.b16 %v2671, %v2671
    %v2800 = vpack.c.b16 %v2672, %v2672
    %v2801 = vpack.c.b16 %v2673, %v2673
    %2930 = vst [vmem:[#allocation8] sm:$0xf] %v2674
    %2931 = vst [vmem:[#allocation8 + $0x4] sm:$0xf] %v2675
    %2932 = vst [vmem:[#allocation8 + $0x8] sm:$0xf] %v2676
    %2933 = vst [vmem:[#allocation8 + $0xc] sm:$0xf] %v2677
    %2934 = vst [vmem:[#allocation8 + $0x10] sm:$0xf] %v2678
    %2935 = vst [vmem:[#allocation8 + $0x14] sm:$0xf] %v2679
    %2936 = vst [vmem:[#allocation8 + $0x18] sm:$0xf] %v2680
    %2937 = vst [vmem:[#allocation8 + $0x1c] sm:$0xf] %v2681
    %2938 = vst [vmem:[#allocation8 + $0x20] sm:$0xf] %v2682
    %2939 = vst [vmem:[#allocation8 + $0x24] sm:$0xf] %v2683
    %2940 = vst [vmem:[#allocation8 + $0x28] sm:$0xf] %v2684
    %2941 = vst [vmem:[#allocation8 + $0x2c] sm:$0xf] %v2685
    %2942 = vst [vmem:[#allocation8 + $0x30] sm:$0xf] %v2686
    %2943 = vst [vmem:[#allocation8 + $0x34] sm:$0xf] %v2687
    %2944 = vst [vmem:[#allocation8 + $0x38] sm:$0xf] %v2688
    %2945 = vst [vmem:[#allocation8 + $0x3c] sm:$0xf] %v2689
    %2946 = vst [vmem:[#allocation8 + $0x40] sm:$0xf] %v2690
    %2947 = vst [vmem:[#allocation8 + $0x44] sm:$0xf] %v2691
    %2948 = vst [vmem:[#allocation8 + $0x48] sm:$0xf] %v2692
    %2949 = vst [vmem:[#allocation8 + $0x4c] sm:$0xf] %v2693
    %2950 = vst [vmem:[#allocation8 + $0x50] sm:$0xf] %v2694
    %2951 = vst [vmem:[#allocation8 + $0x54] sm:$0xf] %v2695
    %2952 = vst [vmem:[#allocation8 + $0x58] sm:$0xf] %v2696
    %2953 = vst [vmem:[#allocation8 + $0x5c] sm:$0xf] %v2697
    %2954 = vst [vmem:[#allocation8 + $0x60] sm:$0xf] %v2698
    %2955 = vst [vmem:[#allocation8 + $0x64] sm:$0xf] %v2699
    %2956 = vst [vmem:[#allocation8 + $0x68] sm:$0xf] %v2700
    %2957 = vst [vmem:[#allocation8 + $0x6c] sm:$0xf] %v2701
    %2958 = vst [vmem:[#allocation8 + $0x70] sm:$0xf] %v2702
    %2959 = vst [vmem:[#allocation8 + $0x74] sm:$0xf] %v2703
    %2960 = vst [vmem:[#allocation8 + $0x78] sm:$0xf] %v2704
    %2961 = vst [vmem:[#allocation8 + $0x7c] sm:$0xf] %v2705
    %2962 = vst [vmem:[#allocation8 + $0x80] sm:$0xf] %v2706
    %2963 = vst [vmem:[#allocation8 + $0x84] sm:$0xf] %v2707
    %2964 = vst [vmem:[#allocation8 + $0x88] sm:$0xf] %v2708
    %2965 = vst [vmem:[#allocation8 + $0x8c] sm:$0xf] %v2709
    %2966 = vst [vmem:[#allocation8 + $0x90] sm:$0xf] %v2710
    %2967 = vst [vmem:[#allocation8 + $0x94] sm:$0xf] %v2711
    %2968 = vst [vmem:[#allocation8 + $0x98] sm:$0xf] %v2712
    %2969 = vst [vmem:[#allocation8 + $0x9c] sm:$0xf] %v2713
    %2970 = vst [vmem:[#allocation8 + $0xa0] sm:$0xf] %v2714
    %2971 = vst [vmem:[#allocation8 + $0xa4] sm:$0xf] %v2715
    %2972 = vst [vmem:[#allocation8 + $0xa8] sm:$0xf] %v2716
    %2973 = vst [vmem:[#allocation8 + $0xac] sm:$0xf] %v2717
    %2974 = vst [vmem:[#allocation8 + $0xb0] sm:$0xf] %v2718
    %2975 = vst [vmem:[#allocation8 + $0xb4] sm:$0xf] %v2719
    %2976 = vst [vmem:[#allocation8 + $0xb8] sm:$0xf] %v2720
    %2977 = vst [vmem:[#allocation8 + $0xbc] sm:$0xf] %v2721
    %2978 = vst [vmem:[#allocation8 + $0xc0] sm:$0xf] %v2722
    %2979 = vst [vmem:[#allocation8 + $0xc4] sm:$0xf] %v2723
    %2980 = vst [vmem:[#allocation8 + $0xc8] sm:$0xf] %v2724
    %2981 = vst [vmem:[#allocation8 + $0xcc] sm:$0xf] %v2725
    %2982 = vst [vmem:[#allocation8 + $0xd0] sm:$0xf] %v2726
    %2983 = vst [vmem:[#allocation8 + $0xd4] sm:$0xf] %v2727
    %2984 = vst [vmem:[#allocation8 + $0xd8] sm:$0xf] %v2728
    %2985 = vst [vmem:[#allocation8 + $0xdc] sm:$0xf] %v2729
    %2986 = vst [vmem:[#allocation8 + $0xe0] sm:$0xf] %v2730
    %2987 = vst [vmem:[#allocation8 + $0xe4] sm:$0xf] %v2731
    %2988 = vst [vmem:[#allocation8 + $0xe8] sm:$0xf] %v2732
    %2989 = vst [vmem:[#allocation8 + $0xec] sm:$0xf] %v2733
    %2990 = vst [vmem:[#allocation8 + $0xf0] sm:$0xf] %v2734
    %2991 = vst [vmem:[#allocation8 + $0xf4] sm:$0xf] %v2735
    %2992 = vst [vmem:[#allocation8 + $0xf8] sm:$0xf] %v2736
    %2993 = vst [vmem:[#allocation8 + $0xfc] sm:$0xf] %v2737
    %2994 = vst [vmem:[#allocation8 + $0x100] sm:$0xf] %v2738
    %2995 = vst [vmem:[#allocation8 + $0x104] sm:$0xf] %v2739
    %2996 = vst [vmem:[#allocation8 + $0x108] sm:$0xf] %v2740
    %2997 = vst [vmem:[#allocation8 + $0x10c] sm:$0xf] %v2741
    %2998 = vst [vmem:[#allocation8 + $0x110] sm:$0xf] %v2742
    %2999 = vst [vmem:[#allocation8 + $0x114] sm:$0xf] %v2743
    %3000 = vst [vmem:[#allocation8 + $0x118] sm:$0xf] %v2744
    %3001 = vst [vmem:[#allocation8 + $0x11c] sm:$0xf] %v2745
    %3002 = vst [vmem:[#allocation8 + $0x120] sm:$0xf] %v2746
    %3003 = vst [vmem:[#allocation8 + $0x124] sm:$0xf] %v2747
    %3004 = vst [vmem:[#allocation8 + $0x128] sm:$0xf] %v2748
    %3005 = vst [vmem:[#allocation8 + $0x12c] sm:$0xf] %v2749
    %3006 = vst [vmem:[#allocation8 + $0x130] sm:$0xf] %v2750
    %3007 = vst [vmem:[#allocation8 + $0x134] sm:$0xf] %v2751
    %3008 = vst [vmem:[#allocation8 + $0x138] sm:$0xf] %v2752
    %3009 = vst [vmem:[#allocation8 + $0x13c] sm:$0xf] %v2753
    %3010 = vst [vmem:[#allocation8 + $0x140] sm:$0xf] %v2754
    %3011 = vst [vmem:[#allocation8 + $0x144] sm:$0xf] %v2755
    %3012 = vst [vmem:[#allocation8 + $0x148] sm:$0xf] %v2756
    %3013 = vst [vmem:[#allocation8 + $0x14c] sm:$0xf] %v2757
    %3014 = vst [vmem:[#allocation8 + $0x150] sm:$0xf] %v2758
    %3015 = vst [vmem:[#allocation8 + $0x154] sm:$0xf] %v2759
    %3016 = vst [vmem:[#allocation8 + $0x158] sm:$0xf] %v2760
    %3017 = vst [vmem:[#allocation8 + $0x15c] sm:$0xf] %v2761
    %3018 = vst [vmem:[#allocation8 + $0x160] sm:$0xf] %v2762
    %3019 = vst [vmem:[#allocation8 + $0x164] sm:$0xf] %v2763
    %3020 = vst [vmem:[#allocation8 + $0x168] sm:$0xf] %v2764
    %3021 = vst [vmem:[#allocation8 + $0x16c] sm:$0xf] %v2765
    %3022 = vst [vmem:[#allocation8 + $0x170] sm:$0xf] %v2766
    %3023 = vst [vmem:[#allocation8 + $0x174] sm:$0xf] %v2767
    %3024 = vst [vmem:[#allocation8 + $0x178] sm:$0xf] %v2768
    %3025 = vst [vmem:[#allocation8 + $0x17c] sm:$0xf] %v2769
    %3026 = vst [vmem:[#allocation8 + $0x180] sm:$0xf] %v2770
    %3027 = vst [vmem:[#allocation8 + $0x184] sm:$0xf] %v2771
    %3028 = vst [vmem:[#allocation8 + $0x188] sm:$0xf] %v2772
    %3029 = vst [vmem:[#allocation8 + $0x18c] sm:$0xf] %v2773
    %3030 = vst [vmem:[#allocation8 + $0x190] sm:$0xf] %v2774
    %3031 = vst [vmem:[#allocation8 + $0x194] sm:$0xf] %v2775
    %3032 = vst [vmem:[#allocation8 + $0x198] sm:$0xf] %v2776
    %3033 = vst [vmem:[#allocation8 + $0x19c] sm:$0xf] %v2777
    %3034 = vst [vmem:[#allocation8 + $0x1a0] sm:$0xf] %v2778
    %3035 = vst [vmem:[#allocation8 + $0x1a4] sm:$0xf] %v2779
    %3036 = vst [vmem:[#allocation8 + $0x1a8] sm:$0xf] %v2780
    %3037 = vst [vmem:[#allocation8 + $0x1ac] sm:$0xf] %v2781
    %3038 = vst [vmem:[#allocation8 + $0x1b0] sm:$0xf] %v2782
    %3039 = vst [vmem:[#allocation8 + $0x1b4] sm:$0xf] %v2783
    %3040 = vst [vmem:[#allocation8 + $0x1b8] sm:$0xf] %v2784
    %3041 = vst [vmem:[#allocation8 + $0x1bc] sm:$0xf] %v2785
    %3042 = vst [vmem:[#allocation8 + $0x1c0] sm:$0xf] %v2786
    %3043 = vst [vmem:[#allocation8 + $0x1c4] sm:$0xf] %v2787
    %3044 = vst [vmem:[#allocation8 + $0x1c8] sm:$0xf] %v2788
    %3045 = vst [vmem:[#allocation8 + $0x1cc] sm:$0xf] %v2789
    %3046 = vst [vmem:[#allocation8 + $0x1d0] sm:$0xf] %v2790
    %3047 = vst [vmem:[#allocation8 + $0x1d4] sm:$0xf] %v2791
    %3048 = vst [vmem:[#allocation8 + $0x1d8] sm:$0xf] %v2792
    %3049 = vst [vmem:[#allocation8 + $0x1dc] sm:$0xf] %v2793
    %3050 = vst [vmem:[#allocation8 + $0x1e0] sm:$0xf] %v2794
    %3051 = vst [vmem:[#allocation8 + $0x1e4] sm:$0xf] %v2795
    %3052 = vst [vmem:[#allocation8 + $0x1e8] sm:$0xf] %v2796
    %3053 = vst [vmem:[#allocation8 + $0x1ec] sm:$0xf] %v2797
    %3054 = vst [vmem:[#allocation8 + $0x1f0] sm:$0xf] %v2798
    %3055 = vst [vmem:[#allocation8 + $0x1f4] sm:$0xf] %v2799
    %3056 = vst [vmem:[#allocation8 + $0x1f8] sm:$0xf] %v2800
    %3057 = vst [vmem:[#allocation8 + $0x1fc] sm:$0xf] %v2801
    %v3058 = vpack.c.bf16 %v1145, %v1140
    %v3059 = vpack.c.bf16 %v1155, %v1150
    %v3060 = vpack.c.bf16 %v1165, %v1160
    %v3061 = vpack.c.bf16 %v1175, %v1170
    %v3062 = vpack.c.bf16 %v1185, %v1180
    %v3063 = vpack.c.bf16 %v1195, %v1190
    %v3064 = vpack.c.bf16 %v1205, %v1200
    %v3065 = vpack.c.bf16 %v1215, %v1210
    %v3066 = vpack.c.bf16 %v1225, %v1220
    %v3067 = vpack.c.bf16 %v1235, %v1230
    %v3068 = vpack.c.bf16 %v1245, %v1240
    %v3069 = vpack.c.bf16 %v1255, %v1250
    %v3070 = vpack.c.bf16 %v1265, %v1260
    %v3071 = vpack.c.bf16 %v1275, %v1270
    %v3072 = vpack.c.bf16 %v1285, %v1280
    %v3073 = vpack.c.bf16 %v1295, %v1290
    %v3074 = vpack.c.bf16 %v1305, %v1300
    %v3075 = vpack.c.bf16 %v1315, %v1310
    %v3076 = vpack.c.bf16 %v1325, %v1320
    %v3077 = vpack.c.bf16 %v1335, %v1330
    %v3078 = vpack.c.bf16 %v1345, %v1340
    %v3079 = vpack.c.bf16 %v1355, %v1350
    %v3080 = vpack.c.bf16 %v1365, %v1360
    %v3081 = vpack.c.bf16 %v1375, %v1370
    %v3082 = vpack.c.bf16 %v1385, %v1380
    %v3083 = vpack.c.bf16 %v1395, %v1390
    %v3084 = vpack.c.bf16 %v1405, %v1400
    %v3085 = vpack.c.bf16 %v1415, %v1410
    %v3086 = vpack.c.bf16 %v1425, %v1420
    %v3087 = vpack.c.bf16 %v1435, %v1430
    %v3088 = vpack.c.bf16 %v1445, %v1440
    %v3089 = vpack.c.bf16 %v1455, %v1450
    %v3090 = vpack.c.bf16 %v1465, %v1460
    %v3091 = vpack.c.bf16 %v1475, %v1470
    %v3092 = vpack.c.bf16 %v1485, %v1480
    %v3093 = vpack.c.bf16 %v1495, %v1490
    %v3094 = vpack.c.bf16 %v1505, %v1500
    %v3095 = vpack.c.bf16 %v1515, %v1510
    %v3096 = vpack.c.bf16 %v1525, %v1520
    %v3097 = vpack.c.bf16 %v1535, %v1530
    %v3098 = vpack.c.bf16 %v1545, %v1540
    %v3099 = vpack.c.bf16 %v1555, %v1550
    %v3100 = vpack.c.bf16 %v1565, %v1560
    %v3101 = vpack.c.bf16 %v1575, %v1570
    %v3102 = vpack.c.bf16 %v1585, %v1580
    %v3103 = vpack.c.bf16 %v1595, %v1590
    %v3104 = vpack.c.bf16 %v1605, %v1600
    %v3105 = vpack.c.bf16 %v1615, %v1610
    %v3106 = vpack.c.bf16 %v1625, %v1620
    %v3107 = vpack.c.bf16 %v1635, %v1630
    %v3108 = vpack.c.bf16 %v1645, %v1640
    %v3109 = vpack.c.bf16 %v1655, %v1650
    %v3110 = vpack.c.bf16 %v1665, %v1660
    %v3111 = vpack.c.bf16 %v1675, %v1670
    %v3112 = vpack.c.bf16 %v1685, %v1680
    %v3113 = vpack.c.bf16 %v1695, %v1690
    %v3114 = vpack.c.bf16 %v1705, %v1700
    %v3115 = vpack.c.bf16 %v1715, %v1710
    %v3116 = vpack.c.bf16 %v1725, %v1720
    %v3117 = vpack.c.bf16 %v1735, %v1730
    %v3118 = vpack.c.bf16 %v1745, %v1740
    %v3119 = vpack.c.bf16 %v1755, %v1750
    %v3120 = vpack.c.bf16 %v1765, %v1760
    %v3121 = vpack.c.bf16 %v1775, %v1770
    %v3186 = vunpack.c.l.b16 %v3058
    %v3187 = vunpack.c.h.b16 %v3058
    %v3188 = vunpack.c.l.b16 %v3059
    %v3189 = vunpack.c.h.b16 %v3059
    %v3190 = vunpack.c.l.b16 %v3060
    %v3191 = vunpack.c.h.b16 %v3060
    %v3192 = vunpack.c.l.b16 %v3061
    %v3193 = vunpack.c.h.b16 %v3061
    %v3194 = vunpack.c.l.b16 %v3062
    %v3195 = vunpack.c.h.b16 %v3062
    %v3196 = vunpack.c.l.b16 %v3063
    %v3197 = vunpack.c.h.b16 %v3063
    %v3198 = vunpack.c.l.b16 %v3064
    %v3199 = vunpack.c.h.b16 %v3064
    %v3200 = vunpack.c.l.b16 %v3065
    %v3201 = vunpack.c.h.b16 %v3065
    %v3202 = vunpack.c.l.b16 %v3066
    %v3203 = vunpack.c.h.b16 %v3066
    %v3204 = vunpack.c.l.b16 %v3067
    %v3205 = vunpack.c.h.b16 %v3067
    %v3206 = vunpack.c.l.b16 %v3068
    %v3207 = vunpack.c.h.b16 %v3068
    %v3208 = vunpack.c.l.b16 %v3069
    %v3209 = vunpack.c.h.b16 %v3069
    %v3210 = vunpack.c.l.b16 %v3070
    %v3211 = vunpack.c.h.b16 %v3070
    %v3212 = vunpack.c.l.b16 %v3071
    %v3213 = vunpack.c.h.b16 %v3071
    %v3214 = vunpack.c.l.b16 %v3072
    %v3215 = vunpack.c.h.b16 %v3072
    %v3216 = vunpack.c.l.b16 %v3073
    %v3217 = vunpack.c.h.b16 %v3073
    %v3218 = vunpack.c.l.b16 %v3074
    %v3219 = vunpack.c.h.b16 %v3074
    %v3220 = vunpack.c.l.b16 %v3075
    %v3221 = vunpack.c.h.b16 %v3075
    %v3222 = vunpack.c.l.b16 %v3076
    %v3223 = vunpack.c.h.b16 %v3076
    %v3224 = vunpack.c.l.b16 %v3077
    %v3225 = vunpack.c.h.b16 %v3077
    %v3226 = vunpack.c.l.b16 %v3078
    %v3227 = vunpack.c.h.b16 %v3078
    %v3228 = vunpack.c.l.b16 %v3079
    %v3229 = vunpack.c.h.b16 %v3079
    %v3230 = vunpack.c.l.b16 %v3080
    %v3231 = vunpack.c.h.b16 %v3080
    %v3232 = vunpack.c.l.b16 %v3081
    %v3233 = vunpack.c.h.b16 %v3081
    %v3234 = vunpack.c.l.b16 %v3082
    %v3235 = vunpack.c.h.b16 %v3082
    %v3236 = vunpack.c.l.b16 %v3083
    %v3237 = vunpack.c.h.b16 %v3083
    %v3238 = vunpack.c.l.b16 %v3084
    %v3239 = vunpack.c.h.b16 %v3084
    %v3240 = vunpack.c.l.b16 %v3085
    %v3241 = vunpack.c.h.b16 %v3085
    %v3242 = vunpack.c.l.b16 %v3086
    %v3243 = vunpack.c.h.b16 %v3086
    %v3244 = vunpack.c.l.b16 %v3087
    %v3245 = vunpack.c.h.b16 %v3087
    %v3246 = vunpack.c.l.b16 %v3088
    %v3247 = vunpack.c.h.b16 %v3088
    %v3248 = vunpack.c.l.b16 %v3089
    %v3249 = vunpack.c.h.b16 %v3089
    %v3250 = vunpack.c.l.b16 %v3090
    %v3251 = vunpack.c.h.b16 %v3090
    %v3252 = vunpack.c.l.b16 %v3091
    %v3253 = vunpack.c.h.b16 %v3091
    %v3254 = vunpack.c.l.b16 %v3092
    %v3255 = vunpack.c.h.b16 %v3092
    %v3256 = vunpack.c.l.b16 %v3093
    %v3257 = vunpack.c.h.b16 %v3093
    %v3258 = vunpack.c.l.b16 %v3094
    %v3259 = vunpack.c.h.b16 %v3094
    %v3260 = vunpack.c.l.b16 %v3095
    %v3261 = vunpack.c.h.b16 %v3095
    %v3262 = vunpack.c.l.b16 %v3096
    %v3263 = vunpack.c.h.b16 %v3096
    %v3264 = vunpack.c.l.b16 %v3097
    %v3265 = vunpack.c.h.b16 %v3097
    %v3266 = vunpack.c.l.b16 %v3098
    %v3267 = vunpack.c.h.b16 %v3098
    %v3268 = vunpack.c.l.b16 %v3099
    %v3269 = vunpack.c.h.b16 %v3099
    %v3270 = vunpack.c.l.b16 %v3100
    %v3271 = vunpack.c.h.b16 %v3100
    %v3272 = vunpack.c.l.b16 %v3101
    %v3273 = vunpack.c.h.b16 %v3101
    %v3274 = vunpack.c.l.b16 %v3102
    %v3275 = vunpack.c.h.b16 %v3102
    %v3276 = vunpack.c.l.b16 %v3103
    %v3277 = vunpack.c.h.b16 %v3103
    %v3278 = vunpack.c.l.b16 %v3104
    %v3279 = vunpack.c.h.b16 %v3104
    %v3280 = vunpack.c.l.b16 %v3105
    %v3281 = vunpack.c.h.b16 %v3105
    %v3282 = vunpack.c.l.b16 %v3106
    %v3283 = vunpack.c.h.b16 %v3106
    %v3284 = vunpack.c.l.b16 %v3107
    %v3285 = vunpack.c.h.b16 %v3107
    %v3286 = vunpack.c.l.b16 %v3108
    %v3287 = vunpack.c.h.b16 %v3108
    %v3288 = vunpack.c.l.b16 %v3109
    %v3289 = vunpack.c.h.b16 %v3109
    %v3290 = vunpack.c.l.b16 %v3110
    %v3291 = vunpack.c.h.b16 %v3110
    %v3292 = vunpack.c.l.b16 %v3111
    %v3293 = vunpack.c.h.b16 %v3111
    %v3294 = vunpack.c.l.b16 %v3112
    %v3295 = vunpack.c.h.b16 %v3112
    %v3296 = vunpack.c.l.b16 %v3113
    %v3297 = vunpack.c.h.b16 %v3113
    %v3298 = vunpack.c.l.b16 %v3114
    %v3299 = vunpack.c.h.b16 %v3114
    %v3300 = vunpack.c.l.b16 %v3115
    %v3301 = vunpack.c.h.b16 %v3115
    %v3302 = vunpack.c.l.b16 %v3116
    %v3303 = vunpack.c.h.b16 %v3116
    %v3304 = vunpack.c.l.b16 %v3117
    %v3305 = vunpack.c.h.b16 %v3117
    %v3306 = vunpack.c.l.b16 %v3118
    %v3307 = vunpack.c.h.b16 %v3118
    %v3308 = vunpack.c.l.b16 %v3119
    %v3309 = vunpack.c.h.b16 %v3119
    %v3310 = vunpack.c.l.b16 %v3120
    %v3311 = vunpack.c.h.b16 %v3120
    %v3312 = vunpack.c.l.b16 %v3121
    %v3313 = vunpack.c.h.b16 %v3121
    %v3314 = vpack.c.b16 %v3186, %v3186
    %v3315 = vpack.c.b16 %v3187, %v3187
    %v3316 = vpack.c.b16 %v3188, %v3188
    %v3317 = vpack.c.b16 %v3189, %v3189
    %v3318 = vpack.c.b16 %v3190, %v3190
    %v3319 = vpack.c.b16 %v3191, %v3191
    %v3320 = vpack.c.b16 %v3192, %v3192
    %v3321 = vpack.c.b16 %v3193, %v3193
    %v3322 = vpack.c.b16 %v3194, %v3194
    %v3323 = vpack.c.b16 %v3195, %v3195
    %v3324 = vpack.c.b16 %v3196, %v3196
    %v3325 = vpack.c.b16 %v3197, %v3197
    %v3326 = vpack.c.b16 %v3198, %v3198
    %v3327 = vpack.c.b16 %v3199, %v3199
    %v3328 = vpack.c.b16 %v3200, %v3200
    %v3329 = vpack.c.b16 %v3201, %v3201
    %v3330 = vpack.c.b16 %v3202, %v3202
    %v3331 = vpack.c.b16 %v3203, %v3203
    %v3332 = vpack.c.b16 %v3204, %v3204
    %v3333 = vpack.c.b16 %v3205, %v3205
    %v3334 = vpack.c.b16 %v3206, %v3206
    %v3335 = vpack.c.b16 %v3207, %v3207
    %v3336 = vpack.c.b16 %v3208, %v3208
    %v3337 = vpack.c.b16 %v3209, %v3209
    %v3338 = vpack.c.b16 %v3210, %v3210
    %v3339 = vpack.c.b16 %v3211, %v3211
    %v3340 = vpack.c.b16 %v3212, %v3212
    %v3341 = vpack.c.b16 %v3213, %v3213
    %v3342 = vpack.c.b16 %v3214, %v3214
    %v3343 = vpack.c.b16 %v3215, %v3215
    %v3344 = vpack.c.b16 %v3216, %v3216
    %v3345 = vpack.c.b16 %v3217, %v3217
    %v3346 = vpack.c.b16 %v3218, %v3218
    %v3347 = vpack.c.b16 %v3219, %v3219
    %v3348 = vpack.c.b16 %v3220, %v3220
    %v3349 = vpack.c.b16 %v3221, %v3221
    %v3350 = vpack.c.b16 %v3222, %v3222
    %v3351 = vpack.c.b16 %v3223, %v3223
    %v3352 = vpack.c.b16 %v3224, %v3224
    %v3353 = vpack.c.b16 %v3225, %v3225
    %v3354 = vpack.c.b16 %v3226, %v3226
    %v3355 = vpack.c.b16 %v3227, %v3227
    %v3356 = vpack.c.b16 %v3228, %v3228
    %v3357 = vpack.c.b16 %v3229, %v3229
    %v3358 = vpack.c.b16 %v3230, %v3230
    %v3359 = vpack.c.b16 %v3231, %v3231
    %v3360 = vpack.c.b16 %v3232, %v3232
    %v3361 = vpack.c.b16 %v3233, %v3233
    %v3362 = vpack.c.b16 %v3234, %v3234
    %v3363 = vpack.c.b16 %v3235, %v3235
    %v3364 = vpack.c.b16 %v3236, %v3236
    %v3365 = vpack.c.b16 %v3237, %v3237
    %v3366 = vpack.c.b16 %v3238, %v3238
    %v3367 = vpack.c.b16 %v3239, %v3239
    %v3368 = vpack.c.b16 %v3240, %v3240
    %v3369 = vpack.c.b16 %v3241, %v3241
    %v3370 = vpack.c.b16 %v3242, %v3242
    %v3371 = vpack.c.b16 %v3243, %v3243
    %v3372 = vpack.c.b16 %v3244, %v3244
    %v3373 = vpack.c.b16 %v3245, %v3245
    %v3374 = vpack.c.b16 %v3246, %v3246
    %v3375 = vpack.c.b16 %v3247, %v3247
    %v3376 = vpack.c.b16 %v3248, %v3248
    %v3377 = vpack.c.b16 %v3249, %v3249
    %v3378 = vpack.c.b16 %v3250, %v3250
    %v3379 = vpack.c.b16 %v3251, %v3251
    %v3380 = vpack.c.b16 %v3252, %v3252
    %v3381 = vpack.c.b16 %v3253, %v3253
    %v3382 = vpack.c.b16 %v3254, %v3254
    %v3383 = vpack.c.b16 %v3255, %v3255
    %v3384 = vpack.c.b16 %v3256, %v3256
    %v3385 = vpack.c.b16 %v3257, %v3257
    %v3386 = vpack.c.b16 %v3258, %v3258
    %v3387 = vpack.c.b16 %v3259, %v3259
    %v3388 = vpack.c.b16 %v3260, %v3260
    %v3389 = vpack.c.b16 %v3261, %v3261
    %v3390 = vpack.c.b16 %v3262, %v3262
    %v3391 = vpack.c.b16 %v3263, %v3263
    %v3392 = vpack.c.b16 %v3264, %v3264
    %v3393 = vpack.c.b16 %v3265, %v3265
    %v3394 = vpack.c.b16 %v3266, %v3266
    %v3395 = vpack.c.b16 %v3267, %v3267
    %v3396 = vpack.c.b16 %v3268, %v3268
    %v3397 = vpack.c.b16 %v3269, %v3269
    %v3398 = vpack.c.b16 %v3270, %v3270
    %v3399 = vpack.c.b16 %v3271, %v3271
    %v3400 = vpack.c.b16 %v3272, %v3272
    %v3401 = vpack.c.b16 %v3273, %v3273
    %v3402 = vpack.c.b16 %v3274, %v3274
    %v3403 = vpack.c.b16 %v3275, %v3275
    %v3404 = vpack.c.b16 %v3276, %v3276
    %v3405 = vpack.c.b16 %v3277, %v3277
    %v3406 = vpack.c.b16 %v3278, %v3278
    %v3407 = vpack.c.b16 %v3279, %v3279
    %v3408 = vpack.c.b16 %v3280, %v3280
    %v3409 = vpack.c.b16 %v3281, %v3281
    %v3410 = vpack.c.b16 %v3282, %v3282
    %v3411 = vpack.c.b16 %v3283, %v3283
    %v3412 = vpack.c.b16 %v3284, %v3284
    %v3413 = vpack.c.b16 %v3285, %v3285
    %v3414 = vpack.c.b16 %v3286, %v3286
    %v3415 = vpack.c.b16 %v3287, %v3287
    %v3416 = vpack.c.b16 %v3288, %v3288
    %v3417 = vpack.c.b16 %v3289, %v3289
    %v3418 = vpack.c.b16 %v3290, %v3290
    %v3419 = vpack.c.b16 %v3291, %v3291
    %v3420 = vpack.c.b16 %v3292, %v3292
    %v3421 = vpack.c.b16 %v3293, %v3293
    %v3422 = vpack.c.b16 %v3294, %v3294
    %v3423 = vpack.c.b16 %v3295, %v3295
    %v3424 = vpack.c.b16 %v3296, %v3296
    %v3425 = vpack.c.b16 %v3297, %v3297
    %v3426 = vpack.c.b16 %v3298, %v3298
    %v3427 = vpack.c.b16 %v3299, %v3299
    %v3428 = vpack.c.b16 %v3300, %v3300
    %v3429 = vpack.c.b16 %v3301, %v3301
    %v3430 = vpack.c.b16 %v3302, %v3302
    %v3431 = vpack.c.b16 %v3303, %v3303
    %v3432 = vpack.c.b16 %v3304, %v3304
    %v3433 = vpack.c.b16 %v3305, %v3305
    %v3434 = vpack.c.b16 %v3306, %v3306
    %v3435 = vpack.c.b16 %v3307, %v3307
    %v3436 = vpack.c.b16 %v3308, %v3308
    %v3437 = vpack.c.b16 %v3309, %v3309
    %v3438 = vpack.c.b16 %v3310, %v3310
    %v3439 = vpack.c.b16 %v3311, %v3311
    %v3440 = vpack.c.b16 %v3312, %v3312
    %v3441 = vpack.c.b16 %v3313, %v3313
    %3570 = vst [vmem:[#allocation10] sm:$0xf] %v3314
    %3571 = vst [vmem:[#allocation10 + $0x4] sm:$0xf] %v3315
    %3572 = vst [vmem:[#allocation10 + $0x8] sm:$0xf] %v3316
    %3573 = vst [vmem:[#allocation10 + $0xc] sm:$0xf] %v3317
    %3574 = vst [vmem:[#allocation10 + $0x10] sm:$0xf] %v3318
    %3575 = vst [vmem:[#allocation10 + $0x14] sm:$0xf] %v3319
    %3576 = vst [vmem:[#allocation10 + $0x18] sm:$0xf] %v3320
    %3577 = vst [vmem:[#allocation10 + $0x1c] sm:$0xf] %v3321
    %3578 = vst [vmem:[#allocation10 + $0x20] sm:$0xf] %v3322
    %3579 = vst [vmem:[#allocation10 + $0x24] sm:$0xf] %v3323
    %3580 = vst [vmem:[#allocation10 + $0x28] sm:$0xf] %v3324
    %3581 = vst [vmem:[#allocation10 + $0x2c] sm:$0xf] %v3325
    %3582 = vst [vmem:[#allocation10 + $0x30] sm:$0xf] %v3326
    %3583 = vst [vmem:[#allocation10 + $0x34] sm:$0xf] %v3327
    %3584 = vst [vmem:[#allocation10 + $0x38] sm:$0xf] %v3328
    %3585 = vst [vmem:[#allocation10 + $0x3c] sm:$0xf] %v3329
    %3586 = vst [vmem:[#allocation10 + $0x40] sm:$0xf] %v3330
    %3587 = vst [vmem:[#allocation10 + $0x44] sm:$0xf] %v3331
    %3588 = vst [vmem:[#allocation10 + $0x48] sm:$0xf] %v3332
    %3589 = vst [vmem:[#allocation10 + $0x4c] sm:$0xf] %v3333
    %3590 = vst [vmem:[#allocation10 + $0x50] sm:$0xf] %v3334
    %3591 = vst [vmem:[#allocation10 + $0x54] sm:$0xf] %v3335
    %3592 = vst [vmem:[#allocation10 + $0x58] sm:$0xf] %v3336
    %3593 = vst [vmem:[#allocation10 + $0x5c] sm:$0xf] %v3337
    %3594 = vst [vmem:[#allocation10 + $0x60] sm:$0xf] %v3338
    %3595 = vst [vmem:[#allocation10 + $0x64] sm:$0xf] %v3339
    %3596 = vst [vmem:[#allocation10 + $0x68] sm:$0xf] %v3340
    %3597 = vst [vmem:[#allocation10 + $0x6c] sm:$0xf] %v3341
    %3598 = vst [vmem:[#allocation10 + $0x70] sm:$0xf] %v3342
    %3599 = vst [vmem:[#allocation10 + $0x74] sm:$0xf] %v3343
    %3600 = vst [vmem:[#allocation10 + $0x78] sm:$0xf] %v3344
    %3601 = vst [vmem:[#allocation10 + $0x7c] sm:$0xf] %v3345
    %3602 = vst [vmem:[#allocation10 + $0x80] sm:$0xf] %v3346
    %3603 = vst [vmem:[#allocation10 + $0x84] sm:$0xf] %v3347
    %3604 = vst [vmem:[#allocation10 + $0x88] sm:$0xf] %v3348
    %3605 = vst [vmem:[#allocation10 + $0x8c] sm:$0xf] %v3349
    %3606 = vst [vmem:[#allocation10 + $0x90] sm:$0xf] %v3350
    %3607 = vst [vmem:[#allocation10 + $0x94] sm:$0xf] %v3351
    %3608 = vst [vmem:[#allocation10 + $0x98] sm:$0xf] %v3352
    %3609 = vst [vmem:[#allocation10 + $0x9c] sm:$0xf] %v3353
    %3610 = vst [vmem:[#allocation10 + $0xa0] sm:$0xf] %v3354
    %3611 = vst [vmem:[#allocation10 + $0xa4] sm:$0xf] %v3355
    %3612 = vst [vmem:[#allocation10 + $0xa8] sm:$0xf] %v3356
    %3613 = vst [vmem:[#allocation10 + $0xac] sm:$0xf] %v3357
    %3614 = vst [vmem:[#allocation10 + $0xb0] sm:$0xf] %v3358
    %3615 = vst [vmem:[#allocation10 + $0xb4] sm:$0xf] %v3359
    %3616 = vst [vmem:[#allocation10 + $0xb8] sm:$0xf] %v3360
    %3617 = vst [vmem:[#allocation10 + $0xbc] sm:$0xf] %v3361
    %3618 = vst [vmem:[#allocation10 + $0xc0] sm:$0xf] %v3362
    %3619 = vst [vmem:[#allocation10 + $0xc4] sm:$0xf] %v3363
    %3620 = vst [vmem:[#allocation10 + $0xc8] sm:$0xf] %v3364
    %3621 = vst [vmem:[#allocation10 + $0xcc] sm:$0xf] %v3365
    %3622 = vst [vmem:[#allocation10 + $0xd0] sm:$0xf] %v3366
    %3623 = vst [vmem:[#allocation10 + $0xd4] sm:$0xf] %v3367
    %3624 = vst [vmem:[#allocation10 + $0xd8] sm:$0xf] %v3368
    %3625 = vst [vmem:[#allocation10 + $0xdc] sm:$0xf] %v3369
    %3626 = vst [vmem:[#allocation10 + $0xe0] sm:$0xf] %v3370
    %3627 = vst [vmem:[#allocation10 + $0xe4] sm:$0xf] %v3371
    %3628 = vst [vmem:[#allocation10 + $0xe8] sm:$0xf] %v3372
    %3629 = vst [vmem:[#allocation10 + $0xec] sm:$0xf] %v3373
    %3630 = vst [vmem:[#allocation10 + $0xf0] sm:$0xf] %v3374
    %3631 = vst [vmem:[#allocation10 + $0xf4] sm:$0xf] %v3375
    %3632 = vst [vmem:[#allocation10 + $0xf8] sm:$0xf] %v3376
    %3633 = vst [vmem:[#allocation10 + $0xfc] sm:$0xf] %v3377
    %3634 = vst [vmem:[#allocation10 + $0x100] sm:$0xf] %v3378
    %3635 = vst [vmem:[#allocation10 + $0x104] sm:$0xf] %v3379
    %3636 = vst [vmem:[#allocation10 + $0x108] sm:$0xf] %v3380
    %3637 = vst [vmem:[#allocation10 + $0x10c] sm:$0xf] %v3381
    %3638 = vst [vmem:[#allocation10 + $0x110] sm:$0xf] %v3382
    %3639 = vst [vmem:[#allocation10 + $0x114] sm:$0xf] %v3383
    %3640 = vst [vmem:[#allocation10 + $0x118] sm:$0xf] %v3384
    %3641 = vst [vmem:[#allocation10 + $0x11c] sm:$0xf] %v3385
    %3642 = vst [vmem:[#allocation10 + $0x120] sm:$0xf] %v3386
    %3643 = vst [vmem:[#allocation10 + $0x124] sm:$0xf] %v3387
    %3644 = vst [vmem:[#allocation10 + $0x128] sm:$0xf] %v3388
    %3645 = vst [vmem:[#allocation10 + $0x12c] sm:$0xf] %v3389
    %3646 = vst [vmem:[#allocation10 + $0x130] sm:$0xf] %v3390
    %3647 = vst [vmem:[#allocation10 + $0x134] sm:$0xf] %v3391
    %3648 = vst [vmem:[#allocation10 + $0x138] sm:$0xf] %v3392
    %3649 = vst [vmem:[#allocation10 + $0x13c] sm:$0xf] %v3393
    %3650 = vst [vmem:[#allocation10 + $0x140] sm:$0xf] %v3394
    %3651 = vst [vmem:[#allocation10 + $0x144] sm:$0xf] %v3395
    %3652 = vst [vmem:[#allocation10 + $0x148] sm:$0xf] %v3396
    %3653 = vst [vmem:[#allocation10 + $0x14c] sm:$0xf] %v3397
    %3654 = vst [vmem:[#allocation10 + $0x150] sm:$0xf] %v3398
    %3655 = vst [vmem:[#allocation10 + $0x154] sm:$0xf] %v3399
    %3656 = vst [vmem:[#allocation10 + $0x158] sm:$0xf] %v3400
    %3657 = vst [vmem:[#allocation10 + $0x15c] sm:$0xf] %v3401
    %3658 = vst [vmem:[#allocation10 + $0x160] sm:$0xf] %v3402
    %3659 = vst [vmem:[#allocation10 + $0x164] sm:$0xf] %v3403
    %3660 = vst [vmem:[#allocation10 + $0x168] sm:$0xf] %v3404
    %3661 = vst [vmem:[#allocation10 + $0x16c] sm:$0xf] %v3405
    %3662 = vst [vmem:[#allocation10 + $0x170] sm:$0xf] %v3406
    %3663 = vst [vmem:[#allocation10 + $0x174] sm:$0xf] %v3407
    %3664 = vst [vmem:[#allocation10 + $0x178] sm:$0xf] %v3408
    %3665 = vst [vmem:[#allocation10 + $0x17c] sm:$0xf] %v3409
    %3666 = vst [vmem:[#allocation10 + $0x180] sm:$0xf] %v3410
    %3667 = vst [vmem:[#allocation10 + $0x184] sm:$0xf] %v3411
    %3668 = vst [vmem:[#allocation10 + $0x188] sm:$0xf] %v3412
    %3669 = vst [vmem:[#allocation10 + $0x18c] sm:$0xf] %v3413
    %3670 = vst [vmem:[#allocation10 + $0x190] sm:$0xf] %v3414
    %3671 = vst [vmem:[#allocation10 + $0x194] sm:$0xf] %v3415
    %3672 = vst [vmem:[#allocation10 + $0x198] sm:$0xf] %v3416
    %3673 = vst [vmem:[#allocation10 + $0x19c] sm:$0xf] %v3417
    %3674 = vst [vmem:[#allocation10 + $0x1a0] sm:$0xf] %v3418
    %3675 = vst [vmem:[#allocation10 + $0x1a4] sm:$0xf] %v3419
    %3676 = vst [vmem:[#allocation10 + $0x1a8] sm:$0xf] %v3420
    %3677 = vst [vmem:[#allocation10 + $0x1ac] sm:$0xf] %v3421
    %3678 = vst [vmem:[#allocation10 + $0x1b0] sm:$0xf] %v3422
    %3679 = vst [vmem:[#allocation10 + $0x1b4] sm:$0xf] %v3423
    %3680 = vst [vmem:[#allocation10 + $0x1b8] sm:$0xf] %v3424
    %3681 = vst [vmem:[#allocation10 + $0x1bc] sm:$0xf] %v3425
    %3682 = vst [vmem:[#allocation10 + $0x1c0] sm:$0xf] %v3426
    %3683 = vst [vmem:[#allocation10 + $0x1c4] sm:$0xf] %v3427
    %3684 = vst [vmem:[#allocation10 + $0x1c8] sm:$0xf] %v3428
    %3685 = vst [vmem:[#allocation10 + $0x1cc] sm:$0xf] %v3429
    %3686 = vst [vmem:[#allocation10 + $0x1d0] sm:$0xf] %v3430
    %3687 = vst [vmem:[#allocation10 + $0x1d4] sm:$0xf] %v3431
    %3688 = vst [vmem:[#allocation10 + $0x1d8] sm:$0xf] %v3432
    %3689 = vst [vmem:[#allocation10 + $0x1dc] sm:$0xf] %v3433
    %3690 = vst [vmem:[#allocation10 + $0x1e0] sm:$0xf] %v3434
    %3691 = vst [vmem:[#allocation10 + $0x1e4] sm:$0xf] %v3435
    %3692 = vst [vmem:[#allocation10 + $0x1e8] sm:$0xf] %v3436
    %3693 = vst [vmem:[#allocation10 + $0x1ec] sm:$0xf] %v3437
    %3694 = vst [vmem:[#allocation10 + $0x1f0] sm:$0xf] %v3438
    %3695 = vst [vmem:[#allocation10 + $0x1f4] sm:$0xf] %v3439
    %3696 = vst [vmem:[#allocation10 + $0x1f8] sm:$0xf] %v3440
    %3697 = vst [vmem:[#allocation10 + $0x1fc] sm:$0xf] %v3441
    // Predicated region
    $region22: #{tpu_custom_call.1} parent=1 // pred_check
      _
    $region23: #{tpu_custom_call.1} parent=1 // pred_check_branch
      %3699 = sbr.rel (0) target = $region25
    $region24: #{tpu_custom_call.1} parent=1 // pred_region
      %s3701 = ssub.s32 8192, 8192
      %3702 = vsyncadd [#allocation4], %s3701
      %s3703 = sshll.u32 [#allocation7], 4
      %s3704 = int_to_ptr.vmem [resolvable:$true] %s3703
      %3709 = dma.vmem_to_hbm [thread:$0]  %s3704, 8192, %s3, [#allocation4], 64, 64, 4
    $region25: #{tpu_custom_call.1} parent=1 // pred_fallthru
      _
    // Predicated region
    $region26: #{tpu_custom_call.1} parent=1 // pred_check
      _
    $region27: #{tpu_custom_call.1} parent=1 // pred_check_branch
      %3711 = sbr.rel (0) target = $region29
    $region28: #{tpu_custom_call.1} parent=1 // pred_region
      %s3713 = ssub.s32 8192, 8192
      %3714 = vsyncadd [#allocation9], %s3713
      %s3715 = sshll.u32 [#allocation8], 4
      %s3716 = int_to_ptr.vmem [resolvable:$true] %s3715
      %3721 = dma.vmem_to_hbm [thread:$0]  %s3716, 8192, %s4, [#allocation9], 64, 64, 4
    $region29: #{tpu_custom_call.1} parent=1 // pred_fallthru
      _
    // Predicated region
    $region30: #{tpu_custom_call.1} parent=1 // pred_check
      _
    $region31: #{tpu_custom_call.1} parent=1 // pred_check_branch
      %3723 = sbr.rel (0) target = $region33
    $region32: #{tpu_custom_call.1} parent=1 // pred_region
      %s3725 = ssub.s32 8192, 8192
      %3726 = vsyncadd [#allocation9], %s3725
      %s3727 = sshll.u32 [#allocation10], 4
      %s3728 = int_to_ptr.vmem [resolvable:$true] %s3727
      %3733 = dma.vmem_to_hbm [thread:$0]  %s3728, 8192, %s5, [#allocation9], 64, 64, 4
    $region33: #{tpu_custom_call.1} parent=1 // pred_fallthru
      _
    // Predicated region
    $region34: #{tpu_custom_call.1} parent=1 // pred_check
      _
    $region35: #{tpu_custom_call.1} parent=1 // pred_check_branch
      %3735 = sbr.rel (0) target = $region37
    $region36: #{tpu_custom_call.1} parent=1 // pred_region
      %3736 = dma.done [#allocation4], 8192
    $region37: #{tpu_custom_call.1} parent=1 // pred_fallthru
      _
    // Predicated region
    $region38: #{tpu_custom_call.1} parent=1 // pred_check
      _
    $region39: #{tpu_custom_call.1} parent=1 // pred_check_branch
      %3738 = sbr.rel (0) target = $region41
    $region40: #{tpu_custom_call.1} parent=1 // pred_region
      %3739 = dma.done [#allocation9], 8192
    $region41: #{tpu_custom_call.1} parent=1 // pred_fallthru
      _
    // Predicated region
    $region42: #{tpu_custom_call.1} parent=1 // pred_check
      _
    $region43: #{tpu_custom_call.1} parent=1 // pred_check_branch
      %3741 = sbr.rel (0) target = $region45
    $region44: #{tpu_custom_call.1} parent=1 // pred_region
      %3742 = dma.done [#allocation9], 8192
    $region45: #{tpu_custom_call.1} parent=1 // pred_fallthru
      _
    %3743 = vsyncpa [#allocation3], 1
    %3744 = vsyncpa [#allocation6], 1
    %3745 = vsyncpa [#allocation4], 1
    %3746 = vsyncpa [#allocation9], 1

</llo_original>
